<compile_context>
chip_gen: v7x
topology: tpu7x:2x2x1
jax: 0.10.0
libtpu: 0.0.40
codegen_flags: <defaults>
</compile_context>

<pallas_src>
import jax
import jax.numpy as jnp
from jax import lax
from jax.experimental import pallas as pl
from jax.experimental.pallas import tpu as pltpu
import numpy as np

EPS = 1e-5
LANE = 128
SUBLANE = 8


def _round_up(x, m):
    return ((x + m - 1) // m) * m


def _resblock_kernel(xpad_ref, w1_ref, s1_ref, t1_ref, w2_ref, s2_ref, t2_ref,
                     out_ref, ypad_ref):
    # xpad_ref: (1, H+2, Wp2, Cp)  bf16 zero-padded input (one batch element)
    # w*_ref:   (3*Cp, 3*Cp)       bf16 packed conv weights, K=(dy,cin), N=(dx,cout)
    # s*/t*:    (1, Cp)            f32 folded BN scale / shift (conv bias incl.)
    # out_ref:  (1, H, W, Cp)      bf16
    # ypad_ref: (H+2, Wp2, Cp)     bf16 VMEM scratch for the padded intermediate
    _, H, W, Cp = out_ref.shape
    _, Hp2, Wp2, _ = xpad_ref.shape

    def conv3x3(load_slab, w_ref):
        # Gather-free im2col: dy taps folded into K via lane-concat of three
        # contiguous row slabs (layout no-op reshape since Wp2 % 8 == 0 and
        # Cp % 128 == 0); dx taps folded into N of the packed weight.
        patch = jnp.concatenate(
            [load_slab(dy).reshape(H * Wp2, Cp) for dy in range(3)], axis=-1)
        r = jnp.dot(patch, w_ref[...], preferred_element_type=jnp.float32)
        r = r.reshape(H, Wp2, 3 * Cp)
        # out[h, w, co] = sum_dx r[h, w + dx, dx*Cp + co]
        acc = (r[:, 0:W, 0:Cp]
               + r[:, 1:W + 1, Cp:2 * Cp]
               + r[:, 2:W + 2, 2 * Cp:3 * Cp])
        return acc.reshape(H * W, Cp)

    # ---- conv1 (3x3, pad=1) + BN1 + ReLU -----------------------------------
    acc1 = conv3x3(lambda dy: xpad_ref[0, dy:dy + H, :, :], w1_ref)
    y = jnp.maximum(acc1 * s1_ref[0] + t1_ref[0], 0.0).astype(jnp.bfloat16)

    # ---- padded intermediate: one full unmasked zero store + interior write -
    ypad_ref[...] = jnp.zeros((Hp2, Wp2, Cp), jnp.bfloat16)
    ypad_ref[1:H + 1, 1:W + 1, :] = y.reshape(H, W, Cp)

    # ---- conv2 (3x3, pad=1) + BN2 + residual add + ReLU --------------------
    acc2 = conv3x3(lambda dy: ypad_ref[dy:dy + H, :, :], w2_ref)
    z = acc2 * s2_ref[0] + t2_ref[0]
    identity = xpad_ref[0, 1:H + 1, 1:W + 1, :].reshape(H * W, Cp)
    out = jnp.maximum(z + identity.astype(jnp.float32), 0.0)
    out_ref[0] = out.reshape(H, W, Cp).astype(out_ref.dtype)


def residual_block_pallas(x_nchw, params):
    (w1, b1, g1, be1, m1, v1, w2, b2, g2, be2, m2, v2) = params
    N, C, H, W = x_nchw.shape
    assert w1.shape == (3, 3, C, C) and w2.shape == (3, 3, C, C), (
        "ResidualBlock kernel requires in_channels == out_channels "
        "(no downsample/projection branch)")

    Cp = _round_up(C, LANE)              # channel pad to lane width
    pc = Cp - C
    Hp2 = H + 2                          # 1-px conv halo
    Wp2 = _round_up(W + 2, SUBLANE)      # halo + sublane-alignment padding

    # Fold eval-mode BN + conv bias into per-channel scale/shift (f32).
    s1 = g1 / jnp.sqrt(v1 + EPS)
    t1 = be1 + (b1 - m1) * s1
    s2 = g2 / jnp.sqrt(v2 + EPS)
    t2 = be2 + (b2 - m2) * s2

    # NCHW -> NHWC; spatial zero-pad (1 left, halo+alignment right), channel
    # zero-pad to lanes; bf16 activations/weights for the MXU.
    x = jnp.transpose(x_nchw, (0, 2, 3, 1))
    x_pad = jnp.pad(
        x, ((0, 0), (1, 1), (1, Wp2 - W - 1), (0, pc))).astype(jnp.bfloat16)

    def pack_weight(w):
        # HWIO (3,3,C,C) -> (3*Cp, 3*Cp) with row = dy*Cp + cin, col = dx*Cp + cout
        wp = jnp.pad(w, ((0, 0), (0, 0), (0, pc), (0, pc)))
        return jnp.transpose(wp, (0, 2, 1, 3)).reshape(3 * Cp,
                                                       3 * Cp).astype(jnp.bfloat16)

    w1p = pack_weight(w1)
    w2p = pack_weight(w2)
    s1p = jnp.pad(s1, (0, pc)).reshape(1, Cp).astype(jnp.float32)
    t1p = jnp.pad(t1, (0, pc)).reshape(1, Cp).astype(jnp.float32)
    s2p = jnp.pad(s2, (0, pc)).reshape(1, Cp).astype(jnp.float32)
    t2p = jnp.pad(t2, (0, pc)).reshape(1, Cp).astype(jnp.float32)

    # Constant-index blocks: single-buffered (their index maps never change).
    w_spec = pl.BlockSpec((3 * Cp, 3 * Cp), lambda n: (0, 0),
                          pipeline_mode=pl.Buffered(1))
    v_spec = pl.BlockSpec((1, Cp), lambda n: (0, 0),
                          pipeline_mode=pl.Buffered(1))

    out_nhwc = pl.pallas_call(
        _resblock_kernel,
        out_shape=jax.ShapeDtypeStruct((N, H, W, Cp), jnp.bfloat16),
        grid_spec=pltpu.PrefetchScalarGridSpec(
            num_scalar_prefetch=0,
            grid=(N,),
            in_specs=[
                pl.BlockSpec((1, Hp2, Wp2, Cp), lambda n: (n, 0, 0, 0)),
                w_spec, v_spec, v_spec,
                w_spec, v_spec, v_spec,
            ],
            out_specs=pl.BlockSpec((1, H, W, Cp), lambda n: (n, 0, 0, 0)),
            scratch_shapes=[pltpu.VMEM((Hp2, Wp2, Cp), jnp.bfloat16)],
        ),
        compiler_params=pltpu.CompilerParams(
            dimension_semantics=("parallel",)),
    )(x_pad, w1p, s1p, t1p, w2p, s2p, t2p)

    # drop channel padding, restore f32, back to NCHW
    return jnp.transpose(out_nhwc[..., :C].astype(jnp.float32), (0, 3, 1, 2))


def residual_block_ref(x_nchw, params):
    """Pure-JAX f32 reference (matches PyTorch forward in eval mode)."""
    (w1, b1, g1, be1, m1, v1, w2, b2, g2, be2, m2, v2) = params
    w1_oihw = jnp.transpose(w1, (3, 2, 0, 1))  # HWIO -> OIHW
    w2_oihw = jnp.transpose(w2, (3, 2, 0, 1))

    def conv(x, w):
        return lax.conv_general_dilated(
            x, w, (1, 1), "SAME",
            dimension_numbers=("NCHW", "OIHW", "NCHW"))

    def bn(x, g, b, m, v):
        inv = 1.0 / jnp.sqrt(v + EPS)
        return (x - m[None, :, None, None]) * inv[None, :, None, None] \
            * g[None, :, None, None] + b[None, :, None, None]

    y = jax.nn.relu(bn(conv(x_nchw, w1_oihw) + b1[None, :, None, None],
                       g1, be1, m1, v1))
    z = bn(conv(y, w2_oihw) + b2[None, :, None, None], g2, be2, m2, v2)
    return jax.nn.relu(z + x_nchw)


if __name__ == "__main__":
    N, C, H, W = 2, 4, 16, 16   # in_channels == out_channels (residual add)
    key = jax.random.PRNGKey(0)
    keys = jax.random.split(key, 13)

    x = jax.random.normal(keys[0], (N, C, H, W), jnp.float32)

    # conv weights in HWIO layout (3, 3, Cin, Cout)
    w1 = jax.random.normal(keys[1], (3, 3, C, C), jnp.float32) * 0.2
    b1 = jax.random.normal(keys[2], (C,), jnp.float32) * 0.1
    w2 = jax.random.normal(keys[3], (3, 3, C, C), jnp.float32) * 0.2
    b2 = jax.random.normal(keys[4], (C,), jnp.float32) * 0.1
    # BN params + running stats (eval mode)
    g1 = 1.0 + 0.1 * jax.random.normal(keys[5], (C,), jnp.float32)
    be1 = 0.1 * jax.random.normal(keys[6], (C,), jnp.float32)
    m1 = 0.1 * jax.random.normal(keys[7], (C,), jnp.float32)
    v1 = 0.5 + jnp.abs(jax.random.normal(keys[8], (C,), jnp.float32))
    g2 = 1.0 + 0.1 * jax.random.normal(keys[9], (C,), jnp.float32)
    be2 = 0.1 * jax.random.normal(keys[10], (C,), jnp.float32)
    m2 = 0.1 * jax.random.normal(keys[11], (C,), jnp.float32)
    v2 = 0.5 + jnp.abs(jax.random.normal(keys[12], (C,), jnp.float32) + 0.3)

    params = (w1, b1, g1, be1, m1, v1, w2, b2, g2, be2, m2, v2)

    out = residual_block_pallas(x, params)
    out = jax.block_until_ready(out)

    ref = jax.block_until_ready(residual_block_ref(x, params))
    # bf16 MXU operands + bf16 output (f32 accumulation) -> loosened tolerance.
    np.testing.assert_allclose(np.asarray(out), np.asarray(ref),
                               rtol=5e-2, atol=8e-2)

    print("KERNEL_OK")
</pallas_src>

<mosaic_0001>
module attributes {stable_mosaic.version = 11 : i64} {
  func.func @_resblock_kernel(%arg0: i32, %arg1: memref<1x18x24x128xbf16, #tpu.memory_space<vmem>>, %arg2: memref<384x384xbf16, #tpu.memory_space<vmem>>, %arg3: memref<1x128xf32, #tpu.memory_space<vmem>>, %arg4: memref<1x128xf32, #tpu.memory_space<vmem>>, %arg5: memref<384x384xbf16, #tpu.memory_space<vmem>>, %arg6: memref<1x128xf32, #tpu.memory_space<vmem>>, %arg7: memref<1x128xf32, #tpu.memory_space<vmem>>, %arg8: memref<1x16x16x128xbf16, #tpu.memory_space<vmem>>, %arg9: memref<18x24x128xbf16, #tpu.memory_space<vmem>>) attributes {dimension_semantics = [#tpu.dimension_semantics<parallel>], iteration_bounds = array<i64: 2>, scalar_prefetch = 0 : i64, scratch_operands = 1 : i64, tpu.core_type = #tpu.core_type<tc>, window_params = [{transform_indices = @transform_0, window_bounds = array<i64: 1, 18, 24, 128>}, {pipeline_mode = #tpu.pipeline_mode<synchronous>, transform_indices = @transform_1, window_bounds = array<i64: 384, 384>}, {pipeline_mode = #tpu.pipeline_mode<synchronous>, transform_indices = @transform_2, window_bounds = array<i64: 1, 128>}, {pipeline_mode = #tpu.pipeline_mode<synchronous>, transform_indices = @transform_3, window_bounds = array<i64: 1, 128>}, {pipeline_mode = #tpu.pipeline_mode<synchronous>, transform_indices = @transform_4, window_bounds = array<i64: 384, 384>}, {pipeline_mode = #tpu.pipeline_mode<synchronous>, transform_indices = @transform_5, window_bounds = array<i64: 1, 128>}, {pipeline_mode = #tpu.pipeline_mode<synchronous>, transform_indices = @transform_6, window_bounds = array<i64: 1, 128>}, {transform_indices = @transform_7, window_bounds = array<i64: 1, 16, 16, 128>}]} {
    %c0 = arith.constant 0 : index
    %c0_0 = arith.constant 0 : index
    %c0_1 = arith.constant 0 : index
    %c0_2 = arith.constant 0 : index
    %0 = vector.load %arg1[%c0, %c0_0, %c0_1, %c0_2] : memref<1x18x24x128xbf16, #tpu.memory_space<vmem>>, vector<1x16x24x128xbf16>
    %1 = vector.shape_cast %0 : vector<1x16x24x128xbf16> to vector<16x24x128xbf16>
    %2 = vector.shape_cast %1 : vector<16x24x128xbf16> to vector<384x128xbf16>
    %c0_3 = arith.constant 0 : index
    %c1 = arith.constant 1 : index
    %c0_4 = arith.constant 0 : index
    %c0_5 = arith.constant 0 : index
    %3 = vector.load %arg1[%c0_3, %c1, %c0_4, %c0_5] : memref<1x18x24x128xbf16, #tpu.memory_space<vmem>>, vector<1x16x24x128xbf16>
    %4 = vector.shape_cast %3 : vector<1x16x24x128xbf16> to vector<16x24x128xbf16>
    %5 = vector.shape_cast %4 : vector<16x24x128xbf16> to vector<384x128xbf16>
    %c0_6 = arith.constant 0 : index
    %c2 = arith.constant 2 : index
    %c0_7 = arith.constant 0 : index
    %c0_8 = arith.constant 0 : index
    %6 = vector.load %arg1[%c0_6, %c2, %c0_7, %c0_8] : memref<1x18x24x128xbf16, #tpu.memory_space<vmem>>, vector<1x16x24x128xbf16>
    %7 = vector.shape_cast %6 : vector<1x16x24x128xbf16> to vector<16x24x128xbf16>
    %8 = vector.shape_cast %7 : vector<16x24x128xbf16> to vector<384x128xbf16>
    %9 = tpu.concatenate %2, %5, %8 in 1 : vector<384x128xbf16>, vector<384x128xbf16>, vector<384x128xbf16> -> vector<384x384xbf16>
    %c0_9 = arith.constant 0 : index
    %c0_10 = arith.constant 0 : index
    %10 = vector.load %arg2[%c0_9, %c0_10] : memref<384x384xbf16, #tpu.memory_space<vmem>>, vector<384x384xbf16>
    %cst = arith.constant dense<0.000000e+00> : vector<384x384xf32>
    %11 = tpu.matmul %9, %10, %cst {dimension_numbers = #tpu.dot_dimension_numbers<[1], [0], [0], [1], [0, 0, 1, 1], [], []>} : vector<384x384xbf16>, vector<384x384xbf16>, vector<384x384xf32> -> vector<384x384xf32>
    %12 = vector.shape_cast %11 : vector<384x384xf32> to vector<16x24x384xf32>
    %13 = vector.extract_strided_slice %12 {offsets = [0, 0, 0], sizes = [16, 16, 128], strides = [1, 1, 1]} : vector<16x24x384xf32> to vector<16x16x128xf32>
    %14 = vector.extract_strided_slice %12 {offsets = [0, 1, 128], sizes = [16, 16, 128], strides = [1, 1, 1]} : vector<16x24x384xf32> to vector<16x16x128xf32>
    %15 = arith.addf %13, %14 : vector<16x16x128xf32>
    %16 = vector.extract_strided_slice %12 {offsets = [0, 2, 256], sizes = [16, 16, 128], strides = [1, 1, 1]} : vector<16x24x384xf32> to vector<16x16x128xf32>
    %17 = arith.addf %15, %16 : vector<16x16x128xf32>
    %18 = vector.shape_cast %17 : vector<16x16x128xf32> to vector<256x128xf32>
    %c0_11 = arith.constant 0 : index
    %c0_12 = arith.constant 0 : index
    %19 = vector.load %arg3[%c0_11, %c0_12] : memref<1x128xf32, #tpu.memory_space<vmem>>, vector<1x128xf32>
    %20 = vector.shape_cast %19 : vector<1x128xf32> to vector<128xf32>
    %21 = vector.shape_cast %20 : vector<128xf32> to vector<1x128xf32>
    %22 = vector.broadcast %21 : vector<1x128xf32> to vector<256x128xf32>
    %23 = arith.mulf %18, %22 : vector<256x128xf32>
    %c0_13 = arith.constant 0 : index
    %c0_14 = arith.constant 0 : index
    %24 = vector.load %arg4[%c0_13, %c0_14] : memref<1x128xf32, #tpu.memory_space<vmem>>, vector<1x128xf32>
    %25 = vector.shape_cast %24 : vector<1x128xf32> to vector<128xf32>
    %26 = vector.shape_cast %25 : vector<128xf32> to vector<1x128xf32>
    %27 = vector.broadcast %26 : vector<1x128xf32> to vector<256x128xf32>
    %28 = arith.addf %23, %27 : vector<256x128xf32>
    %cst_15 = arith.constant 0.000000e+00 : f32
    %29 = vector.broadcast %cst_15 : f32 to vector<256x128xf32>
    %30 = arith.maximumf %28, %29 : vector<256x128xf32>
    %31 = arith.truncf %30 : vector<256x128xf32> to vector<256x128xbf16>
    %cst_16 = arith.constant 0.000000e+00 : bf16
    %32 = vector.broadcast %cst_16 : bf16 to vector<18x24x128xbf16>
    %c0_17 = arith.constant 0 : index
    %c0_18 = arith.constant 0 : index
    %c0_19 = arith.constant 0 : index
    %33 = vector.load %arg9[%c0_17, %c0_18, %c0_19] : memref<18x24x128xbf16, #tpu.memory_space<vmem>>, vector<18x24x128xbf16>
    tpu.vector_store %arg9[%c0_17, %c0_18, %c0_19], %32 {strides = array<i32>} : memref<18x24x128xbf16, #tpu.memory_space<vmem>>, vector<18x24x128xbf16>,
    %34 = vector.shape_cast %31 : vector<256x128xbf16> to vector<16x16x128xbf16>
    %c1_20 = arith.constant 1 : index
    %c1_21 = arith.constant 1 : index
    %c0_22 = arith.constant 0 : index
    %35 = vector.load %arg9[%c1_20, %c1_21, %c0_22] : memref<18x24x128xbf16, #tpu.memory_space<vmem>>, vector<16x16x128xbf16>
    tpu.vector_store %arg9[%c1_20, %c1_21, %c0_22], %34 {strides = array<i32>} : memref<18x24x128xbf16, #tpu.memory_space<vmem>>, vector<16x16x128xbf16>,
    %c0_23 = arith.constant 0 : index
    %c0_24 = arith.constant 0 : index
    %c0_25 = arith.constant 0 : index
    %36 = vector.load %arg9[%c0_23, %c0_24, %c0_25] : memref<18x24x128xbf16, #tpu.memory_space<vmem>>, vector<16x24x128xbf16>
    %37 = vector.shape_cast %36 : vector<16x24x128xbf16> to vector<384x128xbf16>
    %c1_26 = arith.constant 1 : index
    %c0_27 = arith.constant 0 : index
    %c0_28 = arith.constant 0 : index
    %38 = vector.load %arg9[%c1_26, %c0_27, %c0_28] : memref<18x24x128xbf16, #tpu.memory_space<vmem>>, vector<16x24x128xbf16>
    %39 = vector.shape_cast %38 : vector<16x24x128xbf16> to vector<384x128xbf16>
    %c2_29 = arith.constant 2 : index
    %c0_30 = arith.constant 0 : index
    %c0_31 = arith.constant 0 : index
    %40 = vector.load %arg9[%c2_29, %c0_30, %c0_31] : memref<18x24x128xbf16, #tpu.memory_space<vmem>>, vector<16x24x128xbf16>
    %41 = vector.shape_cast %40 : vector<16x24x128xbf16> to vector<384x128xbf16>
    %42 = tpu.concatenate %37, %39, %41 in 1 : vector<384x128xbf16>, vector<384x128xbf16>, vector<384x128xbf16> -> vector<384x384xbf16>
    %c0_32 = arith.constant 0 : index
    %c0_33 = arith.constant 0 : index
    %43 = vector.load %arg5[%c0_32, %c0_33] : memref<384x384xbf16, #tpu.memory_space<vmem>>, vector<384x384xbf16>
    %cst_34 = arith.constant dense<0.000000e+00> : vector<384x384xf32>
    %44 = tpu.matmul %42, %43, %cst_34 {dimension_numbers = #tpu.dot_dimension_numbers<[1], [0], [0], [1], [0, 0, 1, 1], [], []>} : vector<384x384xbf16>, vector<384x384xbf16>, vector<384x384xf32> -> vector<384x384xf32>
    %45 = vector.shape_cast %44 : vector<384x384xf32> to vector<16x24x384xf32>
    %46 = vector.extract_strided_slice %45 {offsets = [0, 0, 0], sizes = [16, 16, 128], strides = [1, 1, 1]} : vector<16x24x384xf32> to vector<16x16x128xf32>
    %47 = vector.extract_strided_slice %45 {offsets = [0, 1, 128], sizes = [16, 16, 128], strides = [1, 1, 1]} : vector<16x24x384xf32> to vector<16x16x128xf32>
    %48 = arith.addf %46, %47 : vector<16x16x128xf32>
    %49 = vector.extract_strided_slice %45 {offsets = [0, 2, 256], sizes = [16, 16, 128], strides = [1, 1, 1]} : vector<16x24x384xf32> to vector<16x16x128xf32>
    %50 = arith.addf %48, %49 : vector<16x16x128xf32>
    %51 = vector.shape_cast %50 : vector<16x16x128xf32> to vector<256x128xf32>
    %c0_35 = arith.constant 0 : index
    %c0_36 = arith.constant 0 : index
    %52 = vector.load %arg6[%c0_35, %c0_36] : memref<1x128xf32, #tpu.memory_space<vmem>>, vector<1x128xf32>
    %53 = vector.shape_cast %52 : vector<1x128xf32> to vector<128xf32>
    %54 = vector.shape_cast %53 : vector<128xf32> to vector<1x128xf32>
    %55 = vector.broadcast %54 : vector<1x128xf32> to vector<256x128xf32>
    %56 = arith.mulf %51, %55 : vector<256x128xf32>
    %c0_37 = arith.constant 0 : index
    %c0_38 = arith.constant 0 : index
    %57 = vector.load %arg7[%c0_37, %c0_38] : memref<1x128xf32, #tpu.memory_space<vmem>>, vector<1x128xf32>
    %58 = vector.shape_cast %57 : vector<1x128xf32> to vector<128xf32>
    %59 = vector.shape_cast %58 : vector<128xf32> to vector<1x128xf32>
    %60 = vector.broadcast %59 : vector<1x128xf32> to vector<256x128xf32>
    %61 = arith.addf %56, %60 : vector<256x128xf32>
    %c0_39 = arith.constant 0 : index
    %c1_40 = arith.constant 1 : index
    %c1_41 = arith.constant 1 : index
    %c0_42 = arith.constant 0 : index
    %62 = vector.load %arg1[%c0_39, %c1_40, %c1_41, %c0_42] : memref<1x18x24x128xbf16, #tpu.memory_space<vmem>>, vector<1x16x16x128xbf16>
    %63 = vector.shape_cast %62 : vector<1x16x16x128xbf16> to vector<16x16x128xbf16>
    %64 = vector.shape_cast %63 : vector<16x16x128xbf16> to vector<256x128xbf16>
    %65 = arith.extf %64 : vector<256x128xbf16> to vector<256x128xf32>
    %66 = arith.addf %61, %65 : vector<256x128xf32>
    %cst_43 = arith.constant 0.000000e+00 : f32
    %67 = vector.broadcast %cst_43 : f32 to vector<256x128xf32>
    %68 = arith.maximumf %66, %67 : vector<256x128xf32>
    %69 = vector.shape_cast %68 : vector<256x128xf32> to vector<16x16x128xf32>
    %70 = arith.truncf %69 : vector<16x16x128xf32> to vector<16x16x128xbf16>
    %c0_44 = arith.constant 0 : index
    %c0_45 = arith.constant 0 : index
    %c0_46 = arith.constant 0 : index
    %c0_47 = arith.constant 0 : index
    %71 = vector.load %arg8[%c0_44, %c0_45, %c0_46, %c0_47] : memref<1x16x16x128xbf16, #tpu.memory_space<vmem>>, vector<1x16x16x128xbf16>
    %72 = vector.shape_cast %71 : vector<1x16x16x128xbf16> to vector<16x16x128xbf16>
    %73 = vector.shape_cast %70 : vector<16x16x128xbf16> to vector<1x16x16x128xbf16>
    tpu.vector_store %arg8[%c0_44, %c0_45, %c0_46, %c0_47], %73 {strides = array<i32>} : memref<1x16x16x128xbf16, #tpu.memory_space<vmem>>, vector<1x16x16x128xbf16>,
    return
  }
  func.func @transform_0(%arg0: i32) -> (i32, i32, i32, i32) {
    %c0_i32 = arith.constant 0 : i32
    %c0_i32_0 = arith.constant 0 : i32
    %c0_i32_1 = arith.constant 0 : i32
    %c0_i32_2 = arith.constant 0 : i32
    return %arg0, %c0_i32, %c0_i32_0, %c0_i32_1 : i32, i32, i32, i32
  }
  func.func @transform_1(%arg0: i32) -> (i32, i32) {
    %c0_i32 = arith.constant 0 : i32
    %c0_i32_0 = arith.constant 0 : i32
    %c0_i32_1 = arith.constant 0 : i32
    return %c0_i32, %c0_i32_0 : i32, i32
  }
  func.func @transform_2(%arg0: i32) -> (i32, i32) {
    %c0_i32 = arith.constant 0 : i32
    %c0_i32_0 = arith.constant 0 : i32
    %c0_i32_1 = arith.constant 0 : i32
    return %c0_i32, %c0_i32_0 : i32, i32
  }
  func.func @transform_3(%arg0: i32) -> (i32, i32) {
    %c0_i32 = arith.constant 0 : i32
    %c0_i32_0 = arith.constant 0 : i32
    %c0_i32_1 = arith.constant 0 : i32
    return %c0_i32, %c0_i32_0 : i32, i32
  }
  func.func @transform_4(%arg0: i32) -> (i32, i32) {
    %c0_i32 = arith.constant 0 : i32
    %c0_i32_0 = arith.constant 0 : i32
    %c0_i32_1 = arith.constant 0 : i32
    return %c0_i32, %c0_i32_0 : i32, i32
  }
  func.func @transform_5(%arg0: i32) -> (i32, i32) {
    %c0_i32 = arith.constant 0 : i32
    %c0_i32_0 = arith.constant 0 : i32
    %c0_i32_1 = arith.constant 0 : i32
    return %c0_i32, %c0_i32_0 : i32, i32
  }
  func.func @transform_6(%arg0: i32) -> (i32, i32) {
    %c0_i32 = arith.constant 0 : i32
    %c0_i32_0 = arith.constant 0 : i32
    %c0_i32_1 = arith.constant 0 : i32
    return %c0_i32, %c0_i32_0 : i32, i32
  }
  func.func @transform_7(%arg0: i32) -> (i32, i32, i32, i32) {
    %c0_i32 = arith.constant 0 : i32
    %c0_i32_0 = arith.constant 0 : i32
    %c0_i32_1 = arith.constant 0 : i32
    %c0_i32_2 = arith.constant 0 : i32
    return %arg0, %c0_i32, %c0_i32_0, %c0_i32_1 : i32, i32, i32, i32
  }
}

</mosaic_0001>

<llo_original>
// kernel: tpu_custom_call.1
$region0: #{tpu_custom_call.1}
  #allocation0 [shape = 'u32[]', space=smem, size = 0x4, offset = 0x4, fixed_abs, tag = 'smem constant byte address 0x4 - core index']
  #allocation1 [shape = 'u32[144,128]{1,0:T(1,128)}', space=vmem, size = 0x12000, scoped, tag = 'internal scratch']
  #allocation2 [shape = 'bf16[18,24,128]{2,1,0:T(8,128)(2,1)}', space=vmem, size = 0x1b000, scoped, tag = 'scratch operand']
  %s0 = inlined_call_operand.hbm [shape: bf16[2,18,24,128], index: 0, kind: input, shape index: {}]
  %s1 = inlined_call_operand.hbm [shape: bf16[384,384], index: 1, kind: input, shape index: {}]
  %s2 = inlined_call_operand.vmem [shape: f32[1,128], index: 2, kind: input, shape index: {}]
  %s3 = inlined_call_operand.vmem [shape: f32[1,128], index: 3, kind: input, shape index: {}]
  %s4 = inlined_call_operand.hbm [shape: bf16[384,384], index: 4, kind: input, shape index: {}]
  %s5 = inlined_call_operand.vmem [shape: f32[1,128], index: 5, kind: input, shape index: {}]
  %s6 = inlined_call_operand.vmem [shape: f32[1,128], index: 6, kind: input, shape index: {}]
  %s7 = inlined_call_operand.hbm [shape: bf16[2,16,16,128], index: 7, kind: output, shape index: {}]
  %s8 = sld [smem:[#allocation0]]
  $region73: #{tpu_custom_call.1} parent=0
    _
  %s10 = ssub.s32 1, %s8
  %s11 = scalar_select 0, %s10, %s8
  $region1: #{tpu_custom_call.1} parent=0
    #allocation3 [shape = 'u8[221184]{0}', space=vmem, size = 0x36000, scoped, tag = 'input window, operand 0']
    #allocation4 [shape = 's32[2]{0}', space=sflag, size = 0x8, scoped, tag = 'scoped memory for tpu_custom_call.1']
    #allocation5 [shape = 's32[2]{0}', space=sflag, size = 0x8, scoped, tag = 'scoped memory for tpu_custom_call.1']
    #allocation6 [shape = 'u8[294912]{0}', space=vmem, size = 0x48000, scoped, tag = 'input window, operand 1, single buffered']
    #allocation7 [shape = 's32[1]{0}', space=sflag, size = 0x4, scoped, tag = 'scoped memory for tpu_custom_call.1']
    #allocation8 [shape = 'u8[294912]{0}', space=vmem, size = 0x48000, scoped, tag = 'input window, operand 4, single buffered']
    #allocation9 [shape = 'u8[131072]{0}', space=vmem, size = 0x20000, scoped, tag = 'output window, operand 0']
    %12 = vsyncpa [#allocation4], 0
    %s13 = scalar_lea.sflag [#allocation4], 1
    %14 = vsyncpa %s13, 0
    %15 = vsyncpa [#allocation7], 0
    %16 = vsyncpa [#allocation5], 0
    %s17 = scalar_lea.sflag [#allocation5], 1
    %18 = vsyncpa %s17, 0
    loop: start=0, step=1, limit=4
    $region2: #{tpu_custom_call.1} parent=1 // loop_pre_header
      _
    $region3: #{tpu_custom_call.1} parent=1 // loop_header
      %s20 = sphi 0, %s24
      %p21 = scmp.ge.s32.totalorder %s20, 4
      %s30 = sphi 0, %s32
      %s33 = sphi 0, %s30
      %s34 = sphi 0, %s33
      %s50 = sphi 0, %s34
      %s54 = sphi 0, %s54
      %s56 = sphi 0, %s54
      %s57 = sphi 0, %s56
      %s71 = sphi 0, %s57
      %s75 = sphi 0, %s75
      %s77 = sphi 0, %s75
      %s78 = sphi 0, %s77
      %s92 = sphi 0, %s78
      %s96 = sphi 0, %s96
      %s98 = sphi 0, %s96
      %s99 = sphi 0, %s98
      %s113 = sphi 0, %s99
      %s117 = sphi 0, %s117
      %s119 = sphi 0, %s117
      %s120 = sphi 0, %s119
      %s134 = sphi 0, %s120
      %s138 = sphi 0, %s138
      %s140 = sphi 0, %s138
      %s141 = sphi 0, %s140
      %s155 = sphi 0, %s141
      %s159 = sphi 0, %s159
      %s161 = sphi 0, %s159
      %s162 = sphi 0, %s161
      %s176 = sphi 0, %s162
      %s182 = sphi 0, %s184
      %s185 = sphi 0, %s182
      %s186 = sphi 0, %s185
      %s202 = sphi 0, %s186
    $region4: #{tpu_custom_call.1} parent=1 // loop_header_branch
      %23 = sbr.rel (%p21) target = $region8
    $region5: #{tpu_custom_call.1} parent=1 // loop_body
      %s25 = ssub.s32 %s20, 1
      %s26 = ssub.s32 %s20, 2
      %s27 = sadd.s32 %s20, 1
      %s28 = ssub.s32 %s20, %s27
      %p29 = scmp.eq.s32.totalorder %s28, 0
      %s31 = sadd.s32 %s30, 1
      %s32 = scalar_select %p29, %s30, %s31
      %p35 = pneg %p29
      %p36 = scmp.eq.s32.totalorder %s20, 1
      %p37 = por %p35, %p36
      %p38 = scmp.ne.s32.totalorder %s30, %s33
      %p39 = scmp.eq.s32.totalorder %s20, 0
      %p40 = por %p38, %p39
      %p41 = scmp.ne.s32.totalorder %s30, %s33
      %p42 = scmp.eq.s32.totalorder %s25, 1
      %p43 = por %p41, %p42
      %p44 = scmp.ne.s32.totalorder %s33, %s34
      %p45 = scmp.eq.s32.totalorder %s25, 0
      %p46 = por %p44, %p45
      %p47 = scmp.ne.s32.totalorder %s33, %s34
      %p48 = scmp.eq.s32.totalorder %s26, 1
      %p49 = por %p47, %p48
      %p51 = scmp.ne.s32.totalorder %s34, %s50
      %p52 = scmp.eq.s32.totalorder %s26, 0
      %p53 = por %p51, %p52
      %s55 = sadd.s32 %s54, 1
      %p58 = scmp.eq.s32.totalorder %s20, 1
      %p59 = scmp.ne.s32.totalorder %s54, %s56
      %p60 = scmp.eq.s32.totalorder %s20, 0
      %p61 = por %p59, %p60
      %p62 = scmp.ne.s32.totalorder %s54, %s56
      %p63 = scmp.eq.s32.totalorder %s25, 1
      %p64 = por %p62, %p63
      %p65 = scmp.ne.s32.totalorder %s56, %s57
      %p66 = scmp.eq.s32.totalorder %s25, 0
      %p67 = por %p65, %p66
      %p68 = scmp.ne.s32.totalorder %s56, %s57
      %p69 = scmp.eq.s32.totalorder %s26, 1
      %p70 = por %p68, %p69
      %p72 = scmp.ne.s32.totalorder %s57, %s71
      %p73 = scmp.eq.s32.totalorder %s26, 0
      %p74 = por %p72, %p73
      %s76 = sadd.s32 %s75, 1
      %p79 = scmp.eq.s32.totalorder %s20, 1
      %p80 = scmp.ne.s32.totalorder %s75, %s77
      %p81 = scmp.eq.s32.totalorder %s20, 0
      %p82 = por %p80, %p81
      %p83 = scmp.ne.s32.totalorder %s75, %s77
      %p84 = scmp.eq.s32.totalorder %s25, 1
      %p85 = por %p83, %p84
      %p86 = scmp.ne.s32.totalorder %s77, %s78
      %p87 = scmp.eq.s32.totalorder %s25, 0
      %p88 = por %p86, %p87
      %p89 = scmp.ne.s32.totalorder %s77, %s78
      %p90 = scmp.eq.s32.totalorder %s26, 1
      %p91 = por %p89, %p90
      %p93 = scmp.ne.s32.totalorder %s78, %s92
      %p94 = scmp.eq.s32.totalorder %s26, 0
      %p95 = por %p93, %p94
      %s97 = sadd.s32 %s96, 1
      %p100 = scmp.eq.s32.totalorder %s20, 1
      %p101 = scmp.ne.s32.totalorder %s96, %s98
      %p102 = scmp.eq.s32.totalorder %s20, 0
      %p103 = por %p101, %p102
      %p104 = scmp.ne.s32.totalorder %s96, %s98
      %p105 = scmp.eq.s32.totalorder %s25, 1
      %p106 = por %p104, %p105
      %p107 = scmp.ne.s32.totalorder %s98, %s99
      %p108 = scmp.eq.s32.totalorder %s25, 0
      %p109 = por %p107, %p108
      %p110 = scmp.ne.s32.totalorder %s98, %s99
      %p111 = scmp.eq.s32.totalorder %s26, 1
      %p112 = por %p110, %p111
      %p114 = scmp.ne.s32.totalorder %s99, %s113
      %p115 = scmp.eq.s32.totalorder %s26, 0
      %p116 = por %p114, %p115
      %s118 = sadd.s32 %s117, 1
      %p121 = scmp.eq.s32.totalorder %s20, 1
      %p122 = scmp.ne.s32.totalorder %s117, %s119
      %p123 = scmp.eq.s32.totalorder %s20, 0
      %p124 = por %p122, %p123
      %p125 = scmp.ne.s32.totalorder %s117, %s119
      %p126 = scmp.eq.s32.totalorder %s25, 1
      %p127 = por %p125, %p126
      %p128 = scmp.ne.s32.totalorder %s119, %s120
      %p129 = scmp.eq.s32.totalorder %s25, 0
      %p130 = por %p128, %p129
      %p131 = scmp.ne.s32.totalorder %s119, %s120
      %p132 = scmp.eq.s32.totalorder %s26, 1
      %p133 = por %p131, %p132
      %p135 = scmp.ne.s32.totalorder %s120, %s134
      %p136 = scmp.eq.s32.totalorder %s26, 0
      %p137 = por %p135, %p136
      %s139 = sadd.s32 %s138, 1
      %p142 = scmp.eq.s32.totalorder %s20, 1
      %p143 = scmp.ne.s32.totalorder %s138, %s140
      %p144 = scmp.eq.s32.totalorder %s20, 0
      %p145 = por %p143, %p144
      %p146 = scmp.ne.s32.totalorder %s138, %s140
      %p147 = scmp.eq.s32.totalorder %s25, 1
      %p148 = por %p146, %p147
      %p149 = scmp.ne.s32.totalorder %s140, %s141
      %p150 = scmp.eq.s32.totalorder %s25, 0
      %p151 = por %p149, %p150
      %p152 = scmp.ne.s32.totalorder %s140, %s141
      %p153 = scmp.eq.s32.totalorder %s26, 1
      %p154 = por %p152, %p153
      %p156 = scmp.ne.s32.totalorder %s141, %s155
      %p157 = scmp.eq.s32.totalorder %s26, 0
      %p158 = por %p156, %p157
      %s160 = sadd.s32 %s159, 1
      %p163 = scmp.eq.s32.totalorder %s20, 1
      %p164 = scmp.ne.s32.totalorder %s159, %s161
      %p165 = scmp.eq.s32.totalorder %s20, 0
      %p166 = por %p164, %p165
      %p167 = scmp.ne.s32.totalorder %s159, %s161
      %p168 = scmp.eq.s32.totalorder %s25, 1
      %p169 = por %p167, %p168
      %p170 = scmp.ne.s32.totalorder %s161, %s162
      %p171 = scmp.eq.s32.totalorder %s25, 0
      %p172 = por %p170, %p171
      %p173 = scmp.ne.s32.totalorder %s161, %s162
      %p174 = scmp.eq.s32.totalorder %s26, 1
      %p175 = por %p173, %p174
      %p177 = scmp.ne.s32.totalorder %s162, %s176
      %p178 = scmp.eq.s32.totalorder %s26, 0
      %p179 = por %p177, %p178
      %s180 = ssub.s32 %s20, %s27
      %p181 = scmp.eq.s32.totalorder %s180, 0
      %s183 = sadd.s32 %s182, 1
      %s184 = scalar_select %p181, %s182, %s183
      %p187 = pneg %p181
      %p188 = scmp.eq.s32.totalorder %s20, 1
      %p189 = por %p187, %p188
      %p190 = scmp.ne.s32.totalorder %s182, %s185
      %p191 = scmp.eq.s32.totalorder %s20, 0
      %p192 = por %p190, %p191
      %p193 = scmp.ne.s32.totalorder %s182, %s185
      %p194 = scmp.eq.s32.totalorder %s25, 1
      %p195 = por %p193, %p194
      %p196 = scmp.ne.s32.totalorder %s185, %s186
      %p197 = scmp.eq.s32.totalorder %s25, 0
      %p198 = por %p196, %p197
      %p199 = scmp.ne.s32.totalorder %s185, %s186
      %p200 = scmp.eq.s32.totalorder %s26, 1
      %p201 = por %p199, %p200
      %p203 = scmp.ne.s32.totalorder %s186, %s202
      %p204 = scmp.eq.s32.totalorder %s26, 0
      %p205 = por %p203, %p204
      %p206 = scmp.le.s32.totalorder 1, %s20
      %p207 = scmp.lt.s32.totalorder %s20, 3
      %p208 = pnand %p206, %p207
      %p209 = pneg %p208
      // Predicated region
      $region9: #{tpu_custom_call.1} parent=5 // pred_check
        _
      $region10: #{tpu_custom_call.1} parent=5 // pred_check_branch
        %211 = sbr.rel (%p208) target = $region12
      $region11: #{tpu_custom_call.1} parent=5 // pred_region
        %s212 = ssub.s32 %s20, 1
        // Predicated region
        $region13: #{tpu_custom_call.1} parent=11 // pred_check
          %p213 = pneg %p67
        $region14: #{tpu_custom_call.1} parent=11 // pred_check_branch
          %215 = sbr.rel (%p213) target = $region16
        $region15: #{tpu_custom_call.1} parent=11 // pred_region
          %s217 = ssub.s32 9216, 9216
          %218 = vsyncadd [#allocation7], %s217
          %s219 = sshll.u32 [#allocation6], 4
          %s220 = int_to_ptr.vmem [resolvable:$true] %s219
          %225 = dma.hbm_to_vmem [thread:$0]  %s1, 9216, %s220, [#allocation7], 192, 192, 12
        $region16: #{tpu_custom_call.1} parent=11 // pred_fallthru
          _
        // Predicated region
        $region17: #{tpu_custom_call.1} parent=11 // pred_check
          %p226 = pneg %p88
        $region18: #{tpu_custom_call.1} parent=11 // pred_check_branch
          %228 = sbr.rel (%p226) target = $region20
        $region19: #{tpu_custom_call.1} parent=11 // pred_region
          _
        $region20: #{tpu_custom_call.1} parent=11 // pred_fallthru
          _
        // Predicated region
        $region21: #{tpu_custom_call.1} parent=11 // pred_check
          %p229 = pneg %p109
        $region22: #{tpu_custom_call.1} parent=11 // pred_check_branch
          %231 = sbr.rel (%p229) target = $region24
        $region23: #{tpu_custom_call.1} parent=11 // pred_region
          _
        $region24: #{tpu_custom_call.1} parent=11 // pred_fallthru
          _
        // Predicated region
        $region25: #{tpu_custom_call.1} parent=11 // pred_check
          %p232 = pneg %p130
        $region26: #{tpu_custom_call.1} parent=11 // pred_check_branch
          %234 = sbr.rel (%p232) target = $region28
        $region27: #{tpu_custom_call.1} parent=11 // pred_region
          %s236 = ssub.s32 9216, 9216
          %237 = vsyncadd [#allocation7], %s236
          %s238 = sshll.u32 [#allocation8], 4
          %s239 = int_to_ptr.vmem [resolvable:$true] %s238
          %244 = dma.hbm_to_vmem [thread:$0]  %s4, 9216, %s239, [#allocation7], 192, 192, 12
        $region28: #{tpu_custom_call.1} parent=11 // pred_fallthru
          _
        // Predicated region
        $region29: #{tpu_custom_call.1} parent=11 // pred_check
          %p245 = pneg %p151
        $region30: #{tpu_custom_call.1} parent=11 // pred_check_branch
          %247 = sbr.rel (%p245) target = $region32
        $region31: #{tpu_custom_call.1} parent=11 // pred_region
          _
        $region32: #{tpu_custom_call.1} parent=11 // pred_fallthru
          _
        // Predicated region
        $region33: #{tpu_custom_call.1} parent=11 // pred_check
          %p248 = pneg %p172
        $region34: #{tpu_custom_call.1} parent=11 // pred_check_branch
          %250 = sbr.rel (%p248) target = $region36
        $region35: #{tpu_custom_call.1} parent=11 // pred_region
          _
        $region36: #{tpu_custom_call.1} parent=11 // pred_fallthru
          _
      $region12: #{tpu_custom_call.1} parent=5 // pred_fallthru
        _
      %p251 = scmp.lt.s32.totalorder %s20, 2
      // Predicated region
      $region37: #{tpu_custom_call.1} parent=5 // pred_check
        %p252 = pneg %p251
      $region38: #{tpu_custom_call.1} parent=5 // pred_check_branch
        %254 = sbr.rel (%p252) target = $region40
      $region39: #{tpu_custom_call.1} parent=5 // pred_region
        // Predicated region
        $region41: #{tpu_custom_call.1} parent=39 // pred_check
          %p255 = pneg %p40
        $region42: #{tpu_custom_call.1} parent=39 // pred_check_branch
          %257 = sbr.rel (%p255) target = $region44
        $region43: #{tpu_custom_call.1} parent=39 // pred_region
          %s258 = sand.u32 %s30, 1
          %s259 = scalar_lea.sflag [#allocation4], %s258
          %s260 = sand.u32 %s30, 1
          %s261 = smul.addr %s260, 216
          %s262 = scalar_lea.vmem [#allocation3], %s261
          %s264 = ssub.s32 3456, 3456
          %265 = vsyncadd %s259, %s264
          %s266 = smul.addr %s20, 54
          %s267 = smul.addr %s266, 64
          %s268 = scalar_lea.hbm %s0, %s267
          %s269 = sshll.u32 %s262, 4
          %s270 = int_to_ptr.vmem [resolvable:$true] %s269
          %275 = dma.hbm_to_vmem [thread:$0]  %s268, 3456, %s270, %s259, 64, 64, 4
        $region44: #{tpu_custom_call.1} parent=39 // pred_fallthru
          _
      $region40: #{tpu_custom_call.1} parent=5 // pred_fallthru
        _
      %p276 = scmp.le.s32.totalorder 1, %s20
      %p277 = scmp.lt.s32.totalorder %s20, 3
      %p278 = pnand %p276, %p277
      %p279 = pneg %p278
      // Predicated region
      $region45: #{tpu_custom_call.1} parent=5 // pred_check
        _
      $region46: #{tpu_custom_call.1} parent=5 // pred_check_branch
        %281 = sbr.rel (%p278) target = $region48
      $region47: #{tpu_custom_call.1} parent=5 // pred_region
        %s282 = ssub.s32 %s20, 1
        %s283 = sand.u32 %s33, 1
        %s284 = scalar_lea.sflag [#allocation4], %s283
        %s285 = sand.u32 %s33, 1
        %s286 = smul.addr %s285, 216
        %s287 = scalar_lea.vmem [#allocation3], %s286
        // Predicated region
        $region49: #{tpu_custom_call.1} parent=47 // pred_check
          %p288 = pneg %p46
        $region50: #{tpu_custom_call.1} parent=47 // pred_check_branch
          %290 = sbr.rel (%p288) target = $region52
        $region51: #{tpu_custom_call.1} parent=47 // pred_region
          %291 = dma.done %s284, 3456
        $region52: #{tpu_custom_call.1} parent=47 // pred_fallthru
          _
        // Predicated region
        $region53: #{tpu_custom_call.1} parent=47 // pred_check
          %p292 = pneg %p67
        $region54: #{tpu_custom_call.1} parent=47 // pred_check_branch
          %294 = sbr.rel (%p292) target = $region56
        $region55: #{tpu_custom_call.1} parent=47 // pred_region
          %295 = dma.done [#allocation7], 9216
        $region56: #{tpu_custom_call.1} parent=47 // pred_fallthru
          _
        // Predicated region
        $region57: #{tpu_custom_call.1} parent=47 // pred_check
          %p296 = pneg %p130
        $region58: #{tpu_custom_call.1} parent=47 // pred_check_branch
          %298 = sbr.rel (%p296) target = $region60
        $region59: #{tpu_custom_call.1} parent=47 // pred_region
          %299 = dma.done [#allocation7], 9216
        $region60: #{tpu_custom_call.1} parent=47 // pred_fallthru
          _
        %s300 = sand.u32 %s33, 1
        %s301 = scalar_lea.sflag [#allocation4], %s300
        %s302 = sand.u32 %s33, 1
        %s303 = smul.addr %s302, 216
        %s304 = scalar_lea.vmem [#allocation3], %s303
        %p305 = pneg %p46
        %p306 = pneg %p43
        %p307 = pneg %p67
        %p308 = pneg %p64
        %p309 = pneg %p88
        %p310 = pneg %p85
        %p311 = pneg %p109
        %p312 = pneg %p106
        %p313 = pneg %p130
        %p314 = pneg %p127
        %p315 = pneg %p151
        %p316 = pneg %p148
        %p317 = pneg %p172
        %p318 = pneg %p169
        %p319 = pneg %p198
        %p320 = pneg %p195
        %s321 = sand.u32 %s185, 1
        %s322 = scalar_lea.sflag [#allocation5], %s321
        %s323 = sand.u32 %s185, 1
        %s324 = smul.addr %s323, 128
        %s325 = scalar_lea.vmem [#allocation9], %s324
        %v327 = vld [vmem:[%s287] sm:$0xf]
        %v328 = vld [vmem:[%s287 + $0x4] sm:$0xf]
        %v329 = vld [vmem:[%s287 + $0x8] sm:$0xf]
        %v330 = vld [vmem:[%s287 + $0xc] sm:$0xf]
        %v331 = vld [vmem:[%s287 + $0x10] sm:$0xf]
        %v332 = vld [vmem:[%s287 + $0x14] sm:$0xf]
        %v333 = vld [vmem:[%s287 + $0x18] sm:$0xf]
        %v334 = vld [vmem:[%s287 + $0x1c] sm:$0xf]
        %v335 = vld [vmem:[%s287 + $0x20] sm:$0xf]
        %v336 = vld [vmem:[%s287 + $0x24] sm:$0xf]
        %v337 = vld [vmem:[%s287 + $0x28] sm:$0xf]
        %v338 = vld [vmem:[%s287 + $0x2c] sm:$0xf]
        %v339 = vld [vmem:[%s287 + $0x30] sm:$0xf]
        %v340 = vld [vmem:[%s287 + $0x34] sm:$0xf]
        %v341 = vld [vmem:[%s287 + $0x38] sm:$0xf]
        %v342 = vld [vmem:[%s287 + $0x3c] sm:$0xf]
        %v343 = vld [vmem:[%s287 + $0x40] sm:$0xf]
        %v344 = vld [vmem:[%s287 + $0x44] sm:$0xf]
        %v345 = vld [vmem:[%s287 + $0x48] sm:$0xf]
        %v346 = vld [vmem:[%s287 + $0x4c] sm:$0xf]
        %v347 = vld [vmem:[%s287 + $0x50] sm:$0xf]
        %v348 = vld [vmem:[%s287 + $0x54] sm:$0xf]
        %v349 = vld [vmem:[%s287 + $0x58] sm:$0xf]
        %v350 = vld [vmem:[%s287 + $0x5c] sm:$0xf]
        %v351 = vld [vmem:[%s287 + $0x60] sm:$0xf]
        %v352 = vld [vmem:[%s287 + $0x64] sm:$0xf]
        %v353 = vld [vmem:[%s287 + $0x68] sm:$0xf]
        %v354 = vld [vmem:[%s287 + $0x6c] sm:$0xf]
        %v355 = vld [vmem:[%s287 + $0x70] sm:$0xf]
        %v356 = vld [vmem:[%s287 + $0x74] sm:$0xf]
        %v357 = vld [vmem:[%s287 + $0x78] sm:$0xf]
        %v358 = vld [vmem:[%s287 + $0x7c] sm:$0xf]
        %v359 = vld [vmem:[%s287 + $0x80] sm:$0xf]
        %v360 = vld [vmem:[%s287 + $0x84] sm:$0xf]
        %v361 = vld [vmem:[%s287 + $0x88] sm:$0xf]
        %v362 = vld [vmem:[%s287 + $0x8c] sm:$0xf]
        %v363 = vld [vmem:[%s287 + $0x90] sm:$0xf]
        %v364 = vld [vmem:[%s287 + $0x94] sm:$0xf]
        %v365 = vld [vmem:[%s287 + $0x98] sm:$0xf]
        %v366 = vld [vmem:[%s287 + $0x9c] sm:$0xf]
        %v367 = vld [vmem:[%s287 + $0xa0] sm:$0xf]
        %v368 = vld [vmem:[%s287 + $0xa4] sm:$0xf]
        %v369 = vld [vmem:[%s287 + $0xa8] sm:$0xf]
        %v370 = vld [vmem:[%s287 + $0xac] sm:$0xf]
        %v371 = vld [vmem:[%s287 + $0xb0] sm:$0xf]
        %v372 = vld [vmem:[%s287 + $0xb4] sm:$0xf]
        %v373 = vld [vmem:[%s287 + $0xb8] sm:$0xf]
        %v374 = vld [vmem:[%s287 + $0xbc] sm:$0xf]
        %s375 = scalar_lea.vmem %s287, 12 [#allocation3]
        %v376 = vld [vmem:[%s375] sm:$0xf]
        %v377 = vld [vmem:[%s375 + $0x4] sm:$0xf]
        %v378 = vld [vmem:[%s375 + $0x8] sm:$0xf]
        %v379 = vld [vmem:[%s375 + $0xc] sm:$0xf]
        %v380 = vld [vmem:[%s375 + $0x10] sm:$0xf]
        %v381 = vld [vmem:[%s375 + $0x14] sm:$0xf]
        %v382 = vld [vmem:[%s375 + $0x18] sm:$0xf]
        %v383 = vld [vmem:[%s375 + $0x1c] sm:$0xf]
        %v384 = vld [vmem:[%s375 + $0x20] sm:$0xf]
        %v385 = vld [vmem:[%s375 + $0x24] sm:$0xf]
        %v386 = vld [vmem:[%s375 + $0x28] sm:$0xf]
        %v387 = vld [vmem:[%s375 + $0x2c] sm:$0xf]
        %v388 = vld [vmem:[%s375 + $0x30] sm:$0xf]
        %v389 = vld [vmem:[%s375 + $0x34] sm:$0xf]
        %v390 = vld [vmem:[%s375 + $0x38] sm:$0xf]
        %v391 = vld [vmem:[%s375 + $0x3c] sm:$0xf]
        %v392 = vld [vmem:[%s375 + $0x40] sm:$0xf]
        %v393 = vld [vmem:[%s375 + $0x44] sm:$0xf]
        %v394 = vld [vmem:[%s375 + $0x48] sm:$0xf]
        %v395 = vld [vmem:[%s375 + $0x4c] sm:$0xf]
        %v396 = vld [vmem:[%s375 + $0x50] sm:$0xf]
        %v397 = vld [vmem:[%s375 + $0x54] sm:$0xf]
        %v398 = vld [vmem:[%s375 + $0x58] sm:$0xf]
        %v399 = vld [vmem:[%s375 + $0x5c] sm:$0xf]
        %v400 = vld [vmem:[%s375 + $0x60] sm:$0xf]
        %v401 = vld [vmem:[%s375 + $0x64] sm:$0xf]
        %v402 = vld [vmem:[%s375 + $0x68] sm:$0xf]
        %v403 = vld [vmem:[%s375 + $0x6c] sm:$0xf]
        %v404 = vld [vmem:[%s375 + $0x70] sm:$0xf]
        %v405 = vld [vmem:[%s375 + $0x74] sm:$0xf]
        %v406 = vld [vmem:[%s375 + $0x78] sm:$0xf]
        %v407 = vld [vmem:[%s375 + $0x7c] sm:$0xf]
        %v408 = vld [vmem:[%s375 + $0x80] sm:$0xf]
        %v409 = vld [vmem:[%s375 + $0x84] sm:$0xf]
        %v410 = vld [vmem:[%s375 + $0x88] sm:$0xf]
        %v411 = vld [vmem:[%s375 + $0x8c] sm:$0xf]
        %v412 = vld [vmem:[%s375 + $0x90] sm:$0xf]
        %v413 = vld [vmem:[%s375 + $0x94] sm:$0xf]
        %v414 = vld [vmem:[%s375 + $0x98] sm:$0xf]
        %v415 = vld [vmem:[%s375 + $0x9c] sm:$0xf]
        %v416 = vld [vmem:[%s375 + $0xa0] sm:$0xf]
        %v417 = vld [vmem:[%s375 + $0xa4] sm:$0xf]
        %v418 = vld [vmem:[%s375 + $0xa8] sm:$0xf]
        %v419 = vld [vmem:[%s375 + $0xac] sm:$0xf]
        %v420 = vld [vmem:[%s375 + $0xb0] sm:$0xf]
        %v421 = vld [vmem:[%s375 + $0xb4] sm:$0xf]
        %v422 = vld [vmem:[%s375 + $0xb8] sm:$0xf]
        %v423 = vld [vmem:[%s375 + $0xbc] sm:$0xf]
        %s424 = scalar_lea.vmem %s287, 24 [#allocation3]
        %v425 = vld [vmem:[%s424] sm:$0xf]
        %v426 = vld [vmem:[%s424 + $0x4] sm:$0xf]
        %v427 = vld [vmem:[%s424 + $0x8] sm:$0xf]
        %v428 = vld [vmem:[%s424 + $0xc] sm:$0xf]
        %v429 = vld [vmem:[%s424 + $0x10] sm:$0xf]
        %v430 = vld [vmem:[%s424 + $0x14] sm:$0xf]
        %v431 = vld [vmem:[%s424 + $0x18] sm:$0xf]
        %v432 = vld [vmem:[%s424 + $0x1c] sm:$0xf]
        %v433 = vld [vmem:[%s424 + $0x20] sm:$0xf]
        %v434 = vld [vmem:[%s424 + $0x24] sm:$0xf]
        %v435 = vld [vmem:[%s424 + $0x28] sm:$0xf]
        %v436 = vld [vmem:[%s424 + $0x2c] sm:$0xf]
        %v437 = vld [vmem:[%s424 + $0x30] sm:$0xf]
        %v438 = vld [vmem:[%s424 + $0x34] sm:$0xf]
        %v439 = vld [vmem:[%s424 + $0x38] sm:$0xf]
        %v440 = vld [vmem:[%s424 + $0x3c] sm:$0xf]
        %v441 = vld [vmem:[%s424 + $0x40] sm:$0xf]
        %v442 = vld [vmem:[%s424 + $0x44] sm:$0xf]
        %v443 = vld [vmem:[%s424 + $0x48] sm:$0xf]
        %v444 = vld [vmem:[%s424 + $0x4c] sm:$0xf]
        %v445 = vld [vmem:[%s424 + $0x50] sm:$0xf]
        %v446 = vld [vmem:[%s424 + $0x54] sm:$0xf]
        %v447 = vld [vmem:[%s424 + $0x58] sm:$0xf]
        %v448 = vld [vmem:[%s424 + $0x5c] sm:$0xf]
        %v449 = vld [vmem:[%s424 + $0x60] sm:$0xf]
        %v450 = vld [vmem:[%s424 + $0x64] sm:$0xf]
        %v451 = vld [vmem:[%s424 + $0x68] sm:$0xf]
        %v452 = vld [vmem:[%s424 + $0x6c] sm:$0xf]
        %v453 = vld [vmem:[%s424 + $0x70] sm:$0xf]
        %v454 = vld [vmem:[%s424 + $0x74] sm:$0xf]
        %v455 = vld [vmem:[%s424 + $0x78] sm:$0xf]
        %v456 = vld [vmem:[%s424 + $0x7c] sm:$0xf]
        %v457 = vld [vmem:[%s424 + $0x80] sm:$0xf]
        %v458 = vld [vmem:[%s424 + $0x84] sm:$0xf]
        %v459 = vld [vmem:[%s424 + $0x88] sm:$0xf]
        %v460 = vld [vmem:[%s424 + $0x8c] sm:$0xf]
        %v461 = vld [vmem:[%s424 + $0x90] sm:$0xf]
        %v462 = vld [vmem:[%s424 + $0x94] sm:$0xf]
        %v463 = vld [vmem:[%s424 + $0x98] sm:$0xf]
        %v464 = vld [vmem:[%s424 + $0x9c] sm:$0xf]
        %v465 = vld [vmem:[%s424 + $0xa0] sm:$0xf]
        %v466 = vld [vmem:[%s424 + $0xa4] sm:$0xf]
        %v467 = vld [vmem:[%s424 + $0xa8] sm:$0xf]
        %v468 = vld [vmem:[%s424 + $0xac] sm:$0xf]
        %v469 = vld [vmem:[%s424 + $0xb0] sm:$0xf]
        %v470 = vld [vmem:[%s424 + $0xb4] sm:$0xf]
        %v471 = vld [vmem:[%s424 + $0xb8] sm:$0xf]
        %v472 = vld [vmem:[%s424 + $0xbc] sm:$0xf]
        %v521 = vunpack.c.l.b16 %v327
        %v522 = vunpack.c.l.b16 %v328
        %v523 = vunpack.c.l.b16 %v329
        %v524 = vunpack.c.l.b16 %v330
        %v525 = vunpack.c.l.b16 %v331
        %v526 = vunpack.c.l.b16 %v332
        %v527 = vunpack.c.l.b16 %v333
        %v528 = vunpack.c.l.b16 %v334
        %v529 = vunpack.c.l.b16 %v335
        %v530 = vunpack.c.l.b16 %v336
        %v531 = vunpack.c.l.b16 %v337
        %v532 = vunpack.c.l.b16 %v338
        %v533 = vunpack.c.l.b16 %v339
        %v534 = vunpack.c.l.b16 %v340
        %v535 = vunpack.c.l.b16 %v341
        %v536 = vunpack.c.l.b16 %v342
        %v537 = vunpack.c.l.b16 %v343
        %v538 = vunpack.c.l.b16 %v344
        %v539 = vunpack.c.l.b16 %v345
        %v540 = vunpack.c.l.b16 %v346
        %v541 = vunpack.c.l.b16 %v347
        %v542 = vunpack.c.l.b16 %v348
        %v543 = vunpack.c.l.b16 %v349
        %v544 = vunpack.c.l.b16 %v350
        %v545 = vunpack.c.l.b16 %v351
        %v546 = vunpack.c.l.b16 %v352
        %v547 = vunpack.c.l.b16 %v353
        %v548 = vunpack.c.l.b16 %v354
        %v549 = vunpack.c.l.b16 %v355
        %v550 = vunpack.c.l.b16 %v356
        %v551 = vunpack.c.l.b16 %v357
        %v552 = vunpack.c.l.b16 %v358
        %v553 = vunpack.c.l.b16 %v359
        %v554 = vunpack.c.l.b16 %v360
        %v555 = vunpack.c.l.b16 %v361
        %v556 = vunpack.c.l.b16 %v362
        %v557 = vunpack.c.l.b16 %v363
        %v558 = vunpack.c.l.b16 %v364
        %v559 = vunpack.c.l.b16 %v365
        %v560 = vunpack.c.l.b16 %v366
        %v561 = vunpack.c.l.b16 %v367
        %v562 = vunpack.c.l.b16 %v368
        %v563 = vunpack.c.l.b16 %v369
        %v564 = vunpack.c.l.b16 %v370
        %v565 = vunpack.c.l.b16 %v371
        %v566 = vunpack.c.l.b16 %v372
        %v567 = vunpack.c.l.b16 %v373
        %v568 = vunpack.c.l.b16 %v374
        %v569 = vpack.c.b16 %v522, %v521
        %v570 = vpack.c.b16 %v524, %v523
        %v571 = vpack.c.b16 %v526, %v525
        %v572 = vpack.c.b16 %v528, %v527
        %v573 = vpack.c.b16 %v530, %v529
        %v574 = vpack.c.b16 %v532, %v531
        %v575 = vpack.c.b16 %v534, %v533
        %v576 = vpack.c.b16 %v536, %v535
        %v577 = vpack.c.b16 %v538, %v537
        %v578 = vpack.c.b16 %v540, %v539
        %v579 = vpack.c.b16 %v542, %v541
        %v580 = vpack.c.b16 %v544, %v543
        %v581 = vpack.c.b16 %v546, %v545
        %v582 = vpack.c.b16 %v548, %v547
        %v583 = vpack.c.b16 %v550, %v549
        %v584 = vpack.c.b16 %v552, %v551
        %v585 = vpack.c.b16 %v554, %v553
        %v586 = vpack.c.b16 %v556, %v555
        %v587 = vpack.c.b16 %v558, %v557
        %v588 = vpack.c.b16 %v560, %v559
        %v589 = vpack.c.b16 %v562, %v561
        %v590 = vpack.c.b16 %v564, %v563
        %v591 = vpack.c.b16 %v566, %v565
        %v592 = vpack.c.b16 %v568, %v567
        %v665 = vunpack.c.l.b16 %v376
        %v666 = vunpack.c.l.b16 %v377
        %v667 = vunpack.c.l.b16 %v378
        %v668 = vunpack.c.l.b16 %v379
        %v669 = vunpack.c.l.b16 %v380
        %v670 = vunpack.c.l.b16 %v381
        %v671 = vunpack.c.l.b16 %v382
        %v672 = vunpack.c.l.b16 %v383
        %v673 = vunpack.c.l.b16 %v384
        %v674 = vunpack.c.l.b16 %v385
        %v675 = vunpack.c.l.b16 %v386
        %v676 = vunpack.c.l.b16 %v387
        %v677 = vunpack.c.l.b16 %v388
        %v678 = vunpack.c.l.b16 %v389
        %v679 = vunpack.c.l.b16 %v390
        %v680 = vunpack.c.l.b16 %v391
        %v681 = vunpack.c.l.b16 %v392
        %v682 = vunpack.c.l.b16 %v393
        %v683 = vunpack.c.l.b16 %v394
        %v684 = vunpack.c.l.b16 %v395
        %v685 = vunpack.c.l.b16 %v396
        %v686 = vunpack.c.l.b16 %v397
        %v687 = vunpack.c.l.b16 %v398
        %v688 = vunpack.c.l.b16 %v399
        %v689 = vunpack.c.l.b16 %v400
        %v690 = vunpack.c.l.b16 %v401
        %v691 = vunpack.c.l.b16 %v402
        %v692 = vunpack.c.l.b16 %v403
        %v693 = vunpack.c.l.b16 %v404
        %v694 = vunpack.c.l.b16 %v405
        %v695 = vunpack.c.l.b16 %v406
        %v696 = vunpack.c.l.b16 %v407
        %v697 = vunpack.c.l.b16 %v408
        %v698 = vunpack.c.l.b16 %v409
        %v699 = vunpack.c.l.b16 %v410
        %v700 = vunpack.c.l.b16 %v411
        %v701 = vunpack.c.l.b16 %v412
        %v702 = vunpack.c.l.b16 %v413
        %v703 = vunpack.c.l.b16 %v414
        %v704 = vunpack.c.l.b16 %v415
        %v705 = vunpack.c.l.b16 %v416
        %v706 = vunpack.c.l.b16 %v417
        %v707 = vunpack.c.l.b16 %v418
        %v708 = vunpack.c.l.b16 %v419
        %v709 = vunpack.c.l.b16 %v420
        %v710 = vunpack.c.l.b16 %v421
        %v711 = vunpack.c.l.b16 %v422
        %v712 = vunpack.c.l.b16 %v423
        %v713 = vpack.c.b16 %v666, %v665
        %v714 = vpack.c.b16 %v668, %v667
        %v715 = vpack.c.b16 %v670, %v669
        %v716 = vpack.c.b16 %v672, %v671
        %v717 = vpack.c.b16 %v674, %v673
        %v718 = vpack.c.b16 %v676, %v675
        %v719 = vpack.c.b16 %v678, %v677
        %v720 = vpack.c.b16 %v680, %v679
        %v721 = vpack.c.b16 %v682, %v681
        %v722 = vpack.c.b16 %v684, %v683
        %v723 = vpack.c.b16 %v686, %v685
        %v724 = vpack.c.b16 %v688, %v687
        %v725 = vpack.c.b16 %v690, %v689
        %v726 = vpack.c.b16 %v692, %v691
        %v727 = vpack.c.b16 %v694, %v693
        %v728 = vpack.c.b16 %v696, %v695
        %v729 = vpack.c.b16 %v698, %v697
        %v730 = vpack.c.b16 %v700, %v699
        %v731 = vpack.c.b16 %v702, %v701
        %v732 = vpack.c.b16 %v704, %v703
        %v733 = vpack.c.b16 %v706, %v705
        %v734 = vpack.c.b16 %v708, %v707
        %v735 = vpack.c.b16 %v710, %v709
        %v736 = vpack.c.b16 %v712, %v711
        %v809 = vunpack.c.l.b16 %v425
        %v810 = vunpack.c.l.b16 %v426
        %v811 = vunpack.c.l.b16 %v427
        %v812 = vunpack.c.l.b16 %v428
        %v813 = vunpack.c.l.b16 %v429
        %v814 = vunpack.c.l.b16 %v430
        %v815 = vunpack.c.l.b16 %v431
        %v816 = vunpack.c.l.b16 %v432
        %v817 = vunpack.c.l.b16 %v433
        %v818 = vunpack.c.l.b16 %v434
        %v819 = vunpack.c.l.b16 %v435
        %v820 = vunpack.c.l.b16 %v436
        %v821 = vunpack.c.l.b16 %v437
        %v822 = vunpack.c.l.b16 %v438
        %v823 = vunpack.c.l.b16 %v439
        %v824 = vunpack.c.l.b16 %v440
        %v825 = vunpack.c.l.b16 %v441
        %v826 = vunpack.c.l.b16 %v442
        %v827 = vunpack.c.l.b16 %v443
        %v828 = vunpack.c.l.b16 %v444
        %v829 = vunpack.c.l.b16 %v445
        %v830 = vunpack.c.l.b16 %v446
        %v831 = vunpack.c.l.b16 %v447
        %v832 = vunpack.c.l.b16 %v448
        %v833 = vunpack.c.l.b16 %v449
        %v834 = vunpack.c.l.b16 %v450
        %v835 = vunpack.c.l.b16 %v451
        %v836 = vunpack.c.l.b16 %v452
        %v837 = vunpack.c.l.b16 %v453
        %v838 = vunpack.c.l.b16 %v454
        %v839 = vunpack.c.l.b16 %v455
        %v840 = vunpack.c.l.b16 %v456
        %v841 = vunpack.c.l.b16 %v457
        %v842 = vunpack.c.l.b16 %v458
        %v843 = vunpack.c.l.b16 %v459
        %v844 = vunpack.c.l.b16 %v460
        %v845 = vunpack.c.l.b16 %v461
        %v846 = vunpack.c.l.b16 %v462
        %v847 = vunpack.c.l.b16 %v463
        %v848 = vunpack.c.l.b16 %v464
        %v849 = vunpack.c.l.b16 %v465
        %v850 = vunpack.c.l.b16 %v466
        %v851 = vunpack.c.l.b16 %v467
        %v852 = vunpack.c.l.b16 %v468
        %v853 = vunpack.c.l.b16 %v469
        %v854 = vunpack.c.l.b16 %v470
        %v855 = vunpack.c.l.b16 %v471
        %v856 = vunpack.c.l.b16 %v472
        %v857 = vpack.c.b16 %v810, %v809
        %v858 = vpack.c.b16 %v812, %v811
        %v859 = vpack.c.b16 %v814, %v813
        %v860 = vpack.c.b16 %v816, %v815
        %v861 = vpack.c.b16 %v818, %v817
        %v862 = vpack.c.b16 %v820, %v819
        %v863 = vpack.c.b16 %v822, %v821
        %v864 = vpack.c.b16 %v824, %v823
        %v865 = vpack.c.b16 %v826, %v825
        %v866 = vpack.c.b16 %v828, %v827
        %v867 = vpack.c.b16 %v830, %v829
        %v868 = vpack.c.b16 %v832, %v831
        %v869 = vpack.c.b16 %v834, %v833
        %v870 = vpack.c.b16 %v836, %v835
        %v871 = vpack.c.b16 %v838, %v837
        %v872 = vpack.c.b16 %v840, %v839
        %v873 = vpack.c.b16 %v842, %v841
        %v874 = vpack.c.b16 %v844, %v843
        %v875 = vpack.c.b16 %v846, %v845
        %v876 = vpack.c.b16 %v848, %v847
        %v877 = vpack.c.b16 %v850, %v849
        %v878 = vpack.c.b16 %v852, %v851
        %v879 = vpack.c.b16 %v854, %v853
        %v880 = vpack.c.b16 %v856, %v855
        %v905 = vld [vmem:[#allocation6] sm:$0xff]
        %v906 = vld [vmem:[#allocation6 + $0x8] sm:$0xf]
        %v907 = vld [vmem:[#allocation6 + $0xc] sm:$0xff]
        %v908 = vld [vmem:[#allocation6 + $0x14] sm:$0xf]
        %v909 = vld [vmem:[#allocation6 + $0x18] sm:$0xff]
        %v910 = vld [vmem:[#allocation6 + $0x20] sm:$0xf]
        %v911 = vld [vmem:[#allocation6 + $0x24] sm:$0xff]
        %v912 = vld [vmem:[#allocation6 + $0x2c] sm:$0xf]
        %v913 = vld [vmem:[#allocation6 + $0x30] sm:$0xff]
        %v914 = vld [vmem:[#allocation6 + $0x38] sm:$0xf]
        %v915 = vld [vmem:[#allocation6 + $0x3c] sm:$0xff]
        %v916 = vld [vmem:[#allocation6 + $0x44] sm:$0xf]
        %v917 = vld [vmem:[#allocation6 + $0x48] sm:$0xff]
        %v918 = vld [vmem:[#allocation6 + $0x50] sm:$0xf]
        %v919 = vld [vmem:[#allocation6 + $0x54] sm:$0xff]
        %v920 = vld [vmem:[#allocation6 + $0x5c] sm:$0xf]
        %v921 = vld [vmem:[#allocation6 + $0x60] sm:$0xff]
        %v922 = vld [vmem:[#allocation6 + $0x68] sm:$0xf]
        %v923 = vld [vmem:[#allocation6 + $0x6c] sm:$0xff]
        %v924 = vld [vmem:[#allocation6 + $0x74] sm:$0xf]
        %v925 = vld [vmem:[#allocation6 + $0x78] sm:$0xff]
        %v926 = vld [vmem:[#allocation6 + $0x80] sm:$0xf]
        %v927 = vld [vmem:[#allocation6 + $0x84] sm:$0xff]
        %v928 = vld [vmem:[#allocation6 + $0x8c] sm:$0xf]
        %v929 = vld [vmem:[#allocation6 + $0x90] sm:$0xff]
        %v930 = vld [vmem:[#allocation6 + $0x98] sm:$0xf]
        %v931 = vld [vmem:[#allocation6 + $0x9c] sm:$0xff]
        %v932 = vld [vmem:[#allocation6 + $0xa4] sm:$0xf]
        %v933 = vld [vmem:[#allocation6 + $0xa8] sm:$0xff]
        %v934 = vld [vmem:[#allocation6 + $0xb0] sm:$0xf]
        %v935 = vld [vmem:[#allocation6 + $0xb4] sm:$0xff]
        %v936 = vld [vmem:[#allocation6 + $0xbc] sm:$0xf]
        %v937 = vld [vmem:[#allocation6 + $0xc0] sm:$0xff]
        %v938 = vld [vmem:[#allocation6 + $0xc8] sm:$0xf]
        %v939 = vld [vmem:[#allocation6 + $0xcc] sm:$0xff]
        %v940 = vld [vmem:[#allocation6 + $0xd4] sm:$0xf]
        %v941 = vld [vmem:[#allocation6 + $0xd8] sm:$0xff]
        %v942 = vld [vmem:[#allocation6 + $0xe0] sm:$0xf]
        %v943 = vld [vmem:[#allocation6 + $0xe4] sm:$0xff]
        %v944 = vld [vmem:[#allocation6 + $0xec] sm:$0xf]
        %v945 = vld [vmem:[#allocation6 + $0xf0] sm:$0xff]
        %v946 = vld [vmem:[#allocation6 + $0xf8] sm:$0xf]
        %v947 = vld [vmem:[#allocation6 + $0xfc] sm:$0xff]
        %v948 = vld [vmem:[#allocation6 + $0x104] sm:$0xf]
        %v949 = vld [vmem:[#allocation6 + $0x108] sm:$0xff]
        %v950 = vld [vmem:[#allocation6 + $0x110] sm:$0xf]
        %v951 = vld [vmem:[#allocation6 + $0x114] sm:$0xff]
        %v952 = vld [vmem:[#allocation6 + $0x11c] sm:$0xf]
        %v953 = vld [vmem:[#allocation6 + $0x120] sm:$0xff]
        %v954 = vld [vmem:[#allocation6 + $0x128] sm:$0xf]
        %v955 = vld [vmem:[#allocation6 + $0x12c] sm:$0xff]
        %v956 = vld [vmem:[#allocation6 + $0x134] sm:$0xf]
        %v957 = vld [vmem:[#allocation6 + $0x138] sm:$0xff]
        %v958 = vld [vmem:[#allocation6 + $0x140] sm:$0xf]
        %v959 = vld [vmem:[#allocation6 + $0x144] sm:$0xff]
        %v960 = vld [vmem:[#allocation6 + $0x14c] sm:$0xf]
        %v961 = vld [vmem:[#allocation6 + $0x150] sm:$0xff]
        %v962 = vld [vmem:[#allocation6 + $0x158] sm:$0xf]
        %v963 = vld [vmem:[#allocation6 + $0x15c] sm:$0xff]
        %v964 = vld [vmem:[#allocation6 + $0x164] sm:$0xf]
        %v965 = vld [vmem:[#allocation6 + $0x168] sm:$0xff]
        %v966 = vld [vmem:[#allocation6 + $0x170] sm:$0xf]
        %v967 = vld [vmem:[#allocation6 + $0x174] sm:$0xff]
        %v968 = vld [vmem:[#allocation6 + $0x17c] sm:$0xf]
        %v969 = vld [vmem:[#allocation6 + $0x180] sm:$0xff]
        %v970 = vld [vmem:[#allocation6 + $0x188] sm:$0xf]
        %v971 = vld [vmem:[#allocation6 + $0x18c] sm:$0xff]
        %v972 = vld [vmem:[#allocation6 + $0x194] sm:$0xf]
        %v973 = vld [vmem:[#allocation6 + $0x198] sm:$0xff]
        %v974 = vld [vmem:[#allocation6 + $0x1a0] sm:$0xf]
        %v975 = vld [vmem:[#allocation6 + $0x1a4] sm:$0xff]
        %v976 = vld [vmem:[#allocation6 + $0x1ac] sm:$0xf]
        %v977 = vld [vmem:[#allocation6 + $0x1b0] sm:$0xff]
        %v978 = vld [vmem:[#allocation6 + $0x1b8] sm:$0xf]
        %v979 = vld [vmem:[#allocation6 + $0x1bc] sm:$0xff]
        %v980 = vld [vmem:[#allocation6 + $0x1c4] sm:$0xf]
        %v981 = vld [vmem:[#allocation6 + $0x1c8] sm:$0xff]
        %v982 = vld [vmem:[#allocation6 + $0x1d0] sm:$0xf]
        %v983 = vld [vmem:[#allocation6 + $0x1d4] sm:$0xff]
        %v984 = vld [vmem:[#allocation6 + $0x1dc] sm:$0xf]
        %v985 = vld [vmem:[#allocation6 + $0x1e0] sm:$0xff]
        %v986 = vld [vmem:[#allocation6 + $0x1e8] sm:$0xf]
        %v987 = vld [vmem:[#allocation6 + $0x1ec] sm:$0xff]
        %v988 = vld [vmem:[#allocation6 + $0x1f4] sm:$0xf]
        %v989 = vld [vmem:[#allocation6 + $0x1f8] sm:$0xff]
        %v990 = vld [vmem:[#allocation6 + $0x200] sm:$0xf]
        %v991 = vld [vmem:[#allocation6 + $0x204] sm:$0xff]
        %v992 = vld [vmem:[#allocation6 + $0x20c] sm:$0xf]
        %v993 = vld [vmem:[#allocation6 + $0x210] sm:$0xff]
        %v994 = vld [vmem:[#allocation6 + $0x218] sm:$0xf]
        %v995 = vld [vmem:[#allocation6 + $0x21c] sm:$0xff]
        %v996 = vld [vmem:[#allocation6 + $0x224] sm:$0xf]
        %v997 = vld [vmem:[#allocation6 + $0x228] sm:$0xff]
        %v998 = vld [vmem:[#allocation6 + $0x230] sm:$0xf]
        %v999 = vld [vmem:[#allocation6 + $0x234] sm:$0xff]
        %v1000 = vld [vmem:[#allocation6 + $0x23c] sm:$0xf]
        %v1097 = vunpack.c.l.b16 %v905
        %v1098 = vunpack.c.h.b16 %v905
        %v1099 = vunpack.c.l.b16 %v906
        %v1100 = vunpack.c.l.b16 %v907
        %v1101 = vunpack.c.h.b16 %v907
        %v1102 = vunpack.c.l.b16 %v908
        %v1103 = vunpack.c.l.b16 %v909
        %v1104 = vunpack.c.h.b16 %v909
        %v1105 = vunpack.c.l.b16 %v910
        %v1106 = vunpack.c.l.b16 %v911
        %v1107 = vunpack.c.h.b16 %v911
        %v1108 = vunpack.c.l.b16 %v912
        %v1109 = vunpack.c.l.b16 %v913
        %v1110 = vunpack.c.h.b16 %v913
        %v1111 = vunpack.c.l.b16 %v914
        %v1112 = vunpack.c.l.b16 %v915
        %v1113 = vunpack.c.h.b16 %v915
        %v1114 = vunpack.c.l.b16 %v916
        %v1115 = vunpack.c.l.b16 %v917
        %v1116 = vunpack.c.h.b16 %v917
        %v1117 = vunpack.c.l.b16 %v918
        %v1118 = vunpack.c.l.b16 %v919
        %v1119 = vunpack.c.h.b16 %v919
        %v1120 = vunpack.c.l.b16 %v920
        %v1121 = vunpack.c.l.b16 %v921
        %v1122 = vunpack.c.h.b16 %v921
        %v1123 = vunpack.c.l.b16 %v922
        %v1124 = vunpack.c.l.b16 %v923
        %v1125 = vunpack.c.h.b16 %v923
        %v1126 = vunpack.c.l.b16 %v924
        %v1127 = vunpack.c.l.b16 %v925
        %v1128 = vunpack.c.h.b16 %v925
        %v1129 = vunpack.c.l.b16 %v926
        %v1130 = vunpack.c.l.b16 %v927
        %v1131 = vunpack.c.h.b16 %v927
        %v1132 = vunpack.c.l.b16 %v928
        %v1133 = vunpack.c.l.b16 %v929
        %v1134 = vunpack.c.h.b16 %v929
        %v1135 = vunpack.c.l.b16 %v930
        %v1136 = vunpack.c.l.b16 %v931
        %v1137 = vunpack.c.h.b16 %v931
        %v1138 = vunpack.c.l.b16 %v932
        %v1139 = vunpack.c.l.b16 %v933
        %v1140 = vunpack.c.h.b16 %v933
        %v1141 = vunpack.c.l.b16 %v934
        %v1142 = vunpack.c.l.b16 %v935
        %v1143 = vunpack.c.h.b16 %v935
        %v1144 = vunpack.c.l.b16 %v936
        %v1145 = vunpack.c.l.b16 %v937
        %v1146 = vunpack.c.h.b16 %v937
        %v1147 = vunpack.c.l.b16 %v938
        %v1148 = vunpack.c.l.b16 %v939
        %v1149 = vunpack.c.h.b16 %v939
        %v1150 = vunpack.c.l.b16 %v940
        %v1151 = vunpack.c.l.b16 %v941
        %v1152 = vunpack.c.h.b16 %v941
        %v1153 = vunpack.c.l.b16 %v942
        %v1154 = vunpack.c.l.b16 %v943
        %v1155 = vunpack.c.h.b16 %v943
        %v1156 = vunpack.c.l.b16 %v944
        %v1157 = vunpack.c.l.b16 %v945
        %v1158 = vunpack.c.h.b16 %v945
        %v1159 = vunpack.c.l.b16 %v946
        %v1160 = vunpack.c.l.b16 %v947
        %v1161 = vunpack.c.h.b16 %v947
        %v1162 = vunpack.c.l.b16 %v948
        %v1163 = vunpack.c.l.b16 %v949
        %v1164 = vunpack.c.h.b16 %v949
        %v1165 = vunpack.c.l.b16 %v950
        %v1166 = vunpack.c.l.b16 %v951
        %v1167 = vunpack.c.h.b16 %v951
        %v1168 = vunpack.c.l.b16 %v952
        %v1169 = vunpack.c.l.b16 %v953
        %v1170 = vunpack.c.h.b16 %v953
        %v1171 = vunpack.c.l.b16 %v954
        %v1172 = vunpack.c.l.b16 %v955
        %v1173 = vunpack.c.h.b16 %v955
        %v1174 = vunpack.c.l.b16 %v956
        %v1175 = vunpack.c.l.b16 %v957
        %v1176 = vunpack.c.h.b16 %v957
        %v1177 = vunpack.c.l.b16 %v958
        %v1178 = vunpack.c.l.b16 %v959
        %v1179 = vunpack.c.h.b16 %v959
        %v1180 = vunpack.c.l.b16 %v960
        %v1181 = vunpack.c.l.b16 %v961
        %v1182 = vunpack.c.h.b16 %v961
        %v1183 = vunpack.c.l.b16 %v962
        %v1184 = vunpack.c.l.b16 %v963
        %v1185 = vunpack.c.h.b16 %v963
        %v1186 = vunpack.c.l.b16 %v964
        %v1187 = vunpack.c.l.b16 %v965
        %v1188 = vunpack.c.h.b16 %v965
        %v1189 = vunpack.c.l.b16 %v966
        %v1190 = vunpack.c.l.b16 %v967
        %v1191 = vunpack.c.h.b16 %v967
        %v1192 = vunpack.c.l.b16 %v968
        %v1193 = vunpack.c.l.b16 %v969
        %v1194 = vunpack.c.h.b16 %v969
        %v1195 = vunpack.c.l.b16 %v970
        %v1196 = vunpack.c.l.b16 %v971
        %v1197 = vunpack.c.h.b16 %v971
        %v1198 = vunpack.c.l.b16 %v972
        %v1199 = vunpack.c.l.b16 %v973
        %v1200 = vunpack.c.h.b16 %v973
        %v1201 = vunpack.c.l.b16 %v974
        %v1202 = vunpack.c.l.b16 %v975
        %v1203 = vunpack.c.h.b16 %v975
        %v1204 = vunpack.c.l.b16 %v976
        %v1205 = vunpack.c.l.b16 %v977
        %v1206 = vunpack.c.h.b16 %v977
        %v1207 = vunpack.c.l.b16 %v978
        %v1208 = vunpack.c.l.b16 %v979
        %v1209 = vunpack.c.h.b16 %v979
        %v1210 = vunpack.c.l.b16 %v980
        %v1211 = vunpack.c.l.b16 %v981
        %v1212 = vunpack.c.h.b16 %v981
        %v1213 = vunpack.c.l.b16 %v982
        %v1214 = vunpack.c.l.b16 %v983
        %v1215 = vunpack.c.h.b16 %v983
        %v1216 = vunpack.c.l.b16 %v984
        %v1217 = vunpack.c.l.b16 %v985
        %v1218 = vunpack.c.h.b16 %v985
        %v1219 = vunpack.c.l.b16 %v986
        %v1220 = vunpack.c.l.b16 %v987
        %v1221 = vunpack.c.h.b16 %v987
        %v1222 = vunpack.c.l.b16 %v988
        %v1223 = vunpack.c.l.b16 %v989
        %v1224 = vunpack.c.h.b16 %v989
        %v1225 = vunpack.c.l.b16 %v990
        %v1226 = vunpack.c.l.b16 %v991
        %v1227 = vunpack.c.h.b16 %v991
        %v1228 = vunpack.c.l.b16 %v992
        %v1229 = vunpack.c.l.b16 %v993
        %v1230 = vunpack.c.h.b16 %v993
        %v1231 = vunpack.c.l.b16 %v994
        %v1232 = vunpack.c.l.b16 %v995
        %v1233 = vunpack.c.h.b16 %v995
        %v1234 = vunpack.c.l.b16 %v996
        %v1235 = vunpack.c.l.b16 %v997
        %v1236 = vunpack.c.h.b16 %v997
        %v1237 = vunpack.c.l.b16 %v998
        %v1238 = vunpack.c.l.b16 %v999
        %v1239 = vunpack.c.h.b16 %v999
        %v1240 = vunpack.c.l.b16 %v1000
        %v1241 = vpack.c.b16 %v1100, %v1097
        %v1242 = vpack.c.b16 %v1101, %v1098
        %v1243 = vpack.c.b16 %v1102, %v1099
        %v1244 = vpack.c.b16 %v1106, %v1103
        %v1245 = vpack.c.b16 %v1107, %v1104
        %v1246 = vpack.c.b16 %v1108, %v1105
        %v1247 = vpack.c.b16 %v1112, %v1109
        %v1248 = vpack.c.b16 %v1113, %v1110
        %v1249 = vpack.c.b16 %v1114, %v1111
        %v1250 = vpack.c.b16 %v1118, %v1115
        %v1251 = vpack.c.b16 %v1119, %v1116
        %v1252 = vpack.c.b16 %v1120, %v1117
        %v1253 = vpack.c.b16 %v1124, %v1121
        %v1254 = vpack.c.b16 %v1125, %v1122
        %v1255 = vpack.c.b16 %v1126, %v1123
        %v1256 = vpack.c.b16 %v1130, %v1127
        %v1257 = vpack.c.b16 %v1131, %v1128
        %v1258 = vpack.c.b16 %v1132, %v1129
        %v1259 = vpack.c.b16 %v1136, %v1133
        %v1260 = vpack.c.b16 %v1137, %v1134
        %v1261 = vpack.c.b16 %v1138, %v1135
        %v1262 = vpack.c.b16 %v1142, %v1139
        %v1263 = vpack.c.b16 %v1143, %v1140
        %v1264 = vpack.c.b16 %v1144, %v1141
        %v1265 = vpack.c.b16 %v1148, %v1145
        %v1266 = vpack.c.b16 %v1149, %v1146
        %v1267 = vpack.c.b16 %v1150, %v1147
        %v1268 = vpack.c.b16 %v1154, %v1151
        %v1269 = vpack.c.b16 %v1155, %v1152
        %v1270 = vpack.c.b16 %v1156, %v1153
        %v1271 = vpack.c.b16 %v1160, %v1157
        %v1272 = vpack.c.b16 %v1161, %v1158
        %v1273 = vpack.c.b16 %v1162, %v1159
        %v1274 = vpack.c.b16 %v1166, %v1163
        %v1275 = vpack.c.b16 %v1167, %v1164
        %v1276 = vpack.c.b16 %v1168, %v1165
        %v1277 = vpack.c.b16 %v1172, %v1169
        %v1278 = vpack.c.b16 %v1173, %v1170
        %v1279 = vpack.c.b16 %v1174, %v1171
        %v1280 = vpack.c.b16 %v1178, %v1175
        %v1281 = vpack.c.b16 %v1179, %v1176
        %v1282 = vpack.c.b16 %v1180, %v1177
        %v1283 = vpack.c.b16 %v1184, %v1181
        %v1284 = vpack.c.b16 %v1185, %v1182
        %v1285 = vpack.c.b16 %v1186, %v1183
        %v1286 = vpack.c.b16 %v1190, %v1187
        %v1287 = vpack.c.b16 %v1191, %v1188
        %v1288 = vpack.c.b16 %v1192, %v1189
        %v1289 = vpack.c.b16 %v1196, %v1193
        %v1290 = vpack.c.b16 %v1197, %v1194
        %v1291 = vpack.c.b16 %v1198, %v1195
        %v1292 = vpack.c.b16 %v1202, %v1199
        %v1293 = vpack.c.b16 %v1203, %v1200
        %v1294 = vpack.c.b16 %v1204, %v1201
        %v1295 = vpack.c.b16 %v1208, %v1205
        %v1296 = vpack.c.b16 %v1209, %v1206
        %v1297 = vpack.c.b16 %v1210, %v1207
        %v1298 = vpack.c.b16 %v1214, %v1211
        %v1299 = vpack.c.b16 %v1215, %v1212
        %v1300 = vpack.c.b16 %v1216, %v1213
        %v1301 = vpack.c.b16 %v1220, %v1217
        %v1302 = vpack.c.b16 %v1221, %v1218
        %v1303 = vpack.c.b16 %v1222, %v1219
        %v1304 = vpack.c.b16 %v1226, %v1223
        %v1305 = vpack.c.b16 %v1227, %v1224
        %v1306 = vpack.c.b16 %v1228, %v1225
        %v1307 = vpack.c.b16 %v1232, %v1229
        %v1308 = vpack.c.b16 %v1233, %v1230
        %v1309 = vpack.c.b16 %v1234, %v1231
        %v1310 = vpack.c.b16 %v1238, %v1235
        %v1311 = vpack.c.b16 %v1239, %v1236
        %v1312 = vpack.c.b16 %v1240, %v1237
        %1385 = vmatprep.subr.bf16.mxu0 %v1242
        %1386 = vmatpush1.bf16.msra.mxu0 %v1241
        %1387 = vmatprep.subr.bf16.mxu0 %v1245
        %1388 = vmatpush1.bf16.msra.mxu0 %v1244
        %1389 = vmatprep.subr.bf16.mxu0 %v1248
        %1390 = vmatpush1.bf16.msra.mxu0 %v1247
        %1391 = vmatprep.subr.bf16.mxu0 %v1251
        %1392 = vmatpush1.bf16.msra.mxu0 %v1250
        %1393 = vmatprep.subr.bf16.mxu0 %v1254
        %1394 = vmatpush1.bf16.msra.mxu0 %v1253
        %1395 = vmatprep.subr.bf16.mxu0 %v1257
        %1396 = vmatpush1.bf16.msra.mxu0 %v1256
        %1397 = vmatprep.subr.bf16.mxu0 %v1260
        %1398 = vmatpush1.bf16.msra.mxu0 %v1259
        %1399 = vmatprep.subr.bf16.mxu0 %v1263
        %1400 = vmatpush1.bf16.msra.mxu0 %v1262
        %1401 = vmatprep.subr.bf16.mxu0 %v1266
        %1402 = vmatpush1.bf16.msra.mxu0 %v1265
        %1403 = vmatprep.subr.bf16.mxu0 %v1269
        %1404 = vmatpush1.bf16.msra.mxu0 %v1268
        %1405 = vmatprep.subr.bf16.mxu0 %v1272
        %1406 = vmatpush1.bf16.msra.mxu0 %v1271
        %1407 = vmatprep.subr.bf16.mxu0 %v1275
        %1408 = vmatpush1.bf16.msra.mxu0 %v1274
        %1409 = vmatprep.subr.bf16.mxu0 %v1278
        %1410 = vmatpush1.bf16.msra.mxu0 %v1277
        %1411 = vmatprep.subr.bf16.mxu0 %v1281
        %1412 = vmatpush1.bf16.msra.mxu0 %v1280
        %1413 = vmatprep.subr.bf16.mxu0 %v1284
        %1414 = vmatpush1.bf16.msra.mxu0 %v1283
        %1415 = vmatprep.subr.bf16.mxu0 %v1287
        %1416 = vmatpush1.bf16.msra.mxu0 %v1286
        %1417 = vmatprep.mubr.bf16.mxu0 %v713
        %1418 = vmatmul.mubr.bf16.gmra.mrb[0].mxu0 %v569
        %v1419 = vpop.f32.mrb[0].mxu0
        %v1420 = vadd.f32 0.0, %v1419
        %v1421 = vpop.f32.mrb[0].mxu0
        %v1422 = vadd.f32 0.0, %v1421
        %v1423 = vpop.f32.mrb[0].mxu0
        %v1424 = vadd.f32 0.0, %v1423
        %v1425 = vpop.f32.mrb[0].mxu0
        %v1426 = vadd.f32 0.0, %v1425
        %1427 = vmatprep.mubr.bf16.mxu0 %v714
        %1428 = vmatmul.mubr.bf16.gmra.mrb[0].mxu0 %v570
        %v1429 = vpop.f32.mrb[0].mxu0
        %v1430 = vpop.f32.mrb[0].mxu0
        %v1431 = vadd.f32 0.0, %v1430
        %v1432 = vpop.f32.mrb[0].mxu0
        %v1433 = vadd.f32 0.0, %v1432
        %v1434 = vpop.f32.mrb[0].mxu0
        %v1435 = vadd.f32 0.0, %v1434
        %1436 = vmatprep.mubr.bf16.mxu0 %v715
        %1437 = vmatmul.mubr.bf16.gmra.mrb[0].mxu0 %v571
        %v1438 = vpop.f32.mrb[0].mxu0
        %v1439 = vadd.f32 0.0, %v1438
        %v1440 = vpop.f32.mrb[0].mxu0
        %v1441 = vadd.f32 0.0, %v1440
        %v1442 = vpop.f32.mrb[0].mxu0
        %v1443 = vpop.f32.mrb[0].mxu0
        %v1444 = vadd.f32 0.0, %v1443
        %1445 = vmatprep.mubr.bf16.mxu0 %v716
        %1446 = vmatmul.mubr.bf16.gmra.mrb[0].mxu0 %v572
        %v1447 = vpop.f32.mrb[0].mxu0
        %v1448 = vadd.f32 0.0, %v1447
        %v1449 = vpop.f32.mrb[0].mxu0
        %v1450 = vadd.f32 0.0, %v1449
        %v1451 = vpop.f32.mrb[0].mxu0
        %v1452 = vadd.f32 0.0, %v1451
        %v1453 = vpop.f32.mrb[0].mxu0
        %v1454 = vadd.f32 0.0, %v1453
        %1455 = vmatprep.mubr.bf16.mxu0 %v717
        %1456 = vmatmul.mubr.bf16.gmra.mrb[0].mxu0 %v573
        %v1457 = vpop.f32.mrb[0].mxu0
        %v1458 = vpop.f32.mrb[0].mxu0
        %v1459 = vadd.f32 0.0, %v1458
        %v1460 = vpop.f32.mrb[0].mxu0
        %v1461 = vadd.f32 0.0, %v1460
        %v1462 = vpop.f32.mrb[0].mxu0
        %v1463 = vadd.f32 0.0, %v1462
        %1464 = vmatprep.mubr.bf16.mxu0 %v718
        %1465 = vmatmul.mubr.bf16.gmra.mrb[0].mxu0 %v574
        %v1466 = vpop.f32.mrb[0].mxu0
        %v1467 = vadd.f32 0.0, %v1466
        %v1468 = vpop.f32.mrb[0].mxu0
        %v1469 = vadd.f32 0.0, %v1468
        %v1470 = vpop.f32.mrb[0].mxu0
        %v1471 = vpop.f32.mrb[0].mxu0
        %v1472 = vadd.f32 0.0, %v1471
        %1473 = vmatprep.mubr.bf16.mxu0 %v719
        %1474 = vmatmul.mubr.bf16.gmra.mrb[0].mxu0 %v575
        %v1475 = vpop.f32.mrb[0].mxu0
        %v1476 = vadd.f32 0.0, %v1475
        %v1477 = vpop.f32.mrb[0].mxu0
        %v1478 = vadd.f32 0.0, %v1477
        %v1479 = vpop.f32.mrb[0].mxu0
        %v1480 = vadd.f32 0.0, %v1479
        %v1481 = vpop.f32.mrb[0].mxu0
        %v1482 = vadd.f32 0.0, %v1481
        %1483 = vmatprep.mubr.bf16.mxu0 %v720
        %1484 = vmatmul.mubr.bf16.gmra.mrb[0].mxu0 %v576
        %v1485 = vpop.f32.mrb[0].mxu0
        %v1486 = vpop.f32.mrb[0].mxu0
        %v1487 = vadd.f32 0.0, %v1486
        %v1488 = vpop.f32.mrb[0].mxu0
        %v1489 = vadd.f32 0.0, %v1488
        %v1490 = vpop.f32.mrb[0].mxu0
        %v1491 = vadd.f32 0.0, %v1490
        %1492 = vmatprep.mubr.bf16.mxu0 %v721
        %1493 = vmatmul.mubr.bf16.gmra.mrb[0].mxu0 %v577
        %v1494 = vpop.f32.mrb[0].mxu0
        %v1495 = vadd.f32 0.0, %v1494
        %v1496 = vpop.f32.mrb[0].mxu0
        %v1497 = vadd.f32 0.0, %v1496
        %v1498 = vpop.f32.mrb[0].mxu0
        %v1499 = vpop.f32.mrb[0].mxu0
        %v1500 = vadd.f32 0.0, %v1499
        %1501 = vmatprep.mubr.bf16.mxu0 %v722
        %1502 = vmatmul.mubr.bf16.gmra.mrb[0].mxu0 %v578
        %v1503 = vpop.f32.mrb[0].mxu0
        %v1504 = vadd.f32 0.0, %v1503
        %v1505 = vpop.f32.mrb[0].mxu0
        %v1506 = vadd.f32 0.0, %v1505
        %v1507 = vpop.f32.mrb[0].mxu0
        %v1508 = vadd.f32 0.0, %v1507
        %v1509 = vpop.f32.mrb[0].mxu0
        %v1510 = vadd.f32 0.0, %v1509
        %1511 = vmatprep.mubr.bf16.mxu0 %v723
        %1512 = vmatmul.mubr.bf16.gmra.mrb[0].mxu0 %v579
        %v1513 = vpop.f32.mrb[0].mxu0
        %v1514 = vpop.f32.mrb[0].mxu0
        %v1515 = vadd.f32 0.0, %v1514
        %v1516 = vpop.f32.mrb[0].mxu0
        %v1517 = vadd.f32 0.0, %v1516
        %v1518 = vpop.f32.mrb[0].mxu0
        %v1519 = vadd.f32 0.0, %v1518
        %1520 = vmatprep.mubr.bf16.mxu0 %v724
        %1521 = vmatmul.mubr.bf16.gmra.mrb[0].mxu0 %v580
        %v1522 = vpop.f32.mrb[0].mxu0
        %v1523 = vadd.f32 0.0, %v1522
        %v1524 = vpop.f32.mrb[0].mxu0
        %v1525 = vadd.f32 0.0, %v1524
        %v1526 = vpop.f32.mrb[0].mxu0
        %v1527 = vpop.f32.mrb[0].mxu0
        %v1528 = vadd.f32 0.0, %v1527
        %1529 = vmatprep.mubr.bf16.mxu0 %v725
        %1530 = vmatmul.mubr.bf16.gmra.mrb[0].mxu0 %v581
        %v1531 = vpop.f32.mrb[0].mxu0
        %v1532 = vadd.f32 0.0, %v1531
        %v1533 = vpop.f32.mrb[0].mxu0
        %v1534 = vadd.f32 0.0, %v1533
        %v1535 = vpop.f32.mrb[0].mxu0
        %v1536 = vadd.f32 0.0, %v1535
        %v1537 = vpop.f32.mrb[0].mxu0
        %v1538 = vadd.f32 0.0, %v1537
        %1539 = vmatprep.mubr.bf16.mxu0 %v726
        %1540 = vmatmul.mubr.bf16.gmra.mrb[0].mxu0 %v582
        %v1541 = vpop.f32.mrb[0].mxu0
        %v1542 = vpop.f32.mrb[0].mxu0
        %v1543 = vadd.f32 0.0, %v1542
        %v1544 = vpop.f32.mrb[0].mxu0
        %v1545 = vadd.f32 0.0, %v1544
        %v1546 = vpop.f32.mrb[0].mxu0
        %v1547 = vadd.f32 0.0, %v1546
        %1548 = vmatprep.mubr.bf16.mxu0 %v727
        %1549 = vmatmul.mubr.bf16.gmra.mrb[0].mxu0 %v583
        %v1550 = vpop.f32.mrb[0].mxu0
        %v1551 = vadd.f32 0.0, %v1550
        %v1552 = vpop.f32.mrb[0].mxu0
        %v1553 = vadd.f32 0.0, %v1552
        %v1554 = vpop.f32.mrb[0].mxu0
        %v1555 = vpop.f32.mrb[0].mxu0
        %v1556 = vadd.f32 0.0, %v1555
        %1557 = vmatprep.mubr.bf16.mxu0 %v728
        %1558 = vmatmul.mubr.bf16.gmra.mrb[0].mxu0 %v584
        %v1559 = vpop.f32.mrb[0].mxu0
        %v1560 = vadd.f32 0.0, %v1559
        %v1561 = vpop.f32.mrb[0].mxu0
        %v1562 = vadd.f32 0.0, %v1561
        %v1563 = vpop.f32.mrb[0].mxu0
        %v1564 = vadd.f32 0.0, %v1563
        %v1565 = vpop.f32.mrb[0].mxu0
        %v1566 = vadd.f32 0.0, %v1565
        %1567 = vmatprep.mubr.bf16.mxu0 %v729
        %1568 = vmatmul.mubr.bf16.gmra.mrb[0].mxu0 %v585
        %v1569 = vpop.f32.mrb[0].mxu0
        %v1570 = vpop.f32.mrb[0].mxu0
        %v1571 = vadd.f32 0.0, %v1570
        %v1572 = vpop.f32.mrb[0].mxu0
        %v1573 = vadd.f32 0.0, %v1572
        %v1574 = vpop.f32.mrb[0].mxu0
        %v1575 = vadd.f32 0.0, %v1574
        %1576 = vmatprep.mubr.bf16.mxu0 %v730
        %1577 = vmatmul.mubr.bf16.gmra.mrb[0].mxu0 %v586
        %v1578 = vpop.f32.mrb[0].mxu0
        %v1579 = vadd.f32 0.0, %v1578
        %v1580 = vpop.f32.mrb[0].mxu0
        %v1581 = vadd.f32 0.0, %v1580
        %v1582 = vpop.f32.mrb[0].mxu0
        %v1583 = vpop.f32.mrb[0].mxu0
        %v1584 = vadd.f32 0.0, %v1583
        %1585 = vmatprep.mubr.bf16.mxu0 %v731
        %1586 = vmatmul.mubr.bf16.gmra.mrb[0].mxu0 %v587
        %v1587 = vpop.f32.mrb[0].mxu0
        %v1588 = vadd.f32 0.0, %v1587
        %v1589 = vpop.f32.mrb[0].mxu0
        %v1590 = vadd.f32 0.0, %v1589
        %v1591 = vpop.f32.mrb[0].mxu0
        %v1592 = vadd.f32 0.0, %v1591
        %v1593 = vpop.f32.mrb[0].mxu0
        %v1594 = vadd.f32 0.0, %v1593
        %1595 = vmatprep.mubr.bf16.mxu0 %v732
        %1596 = vmatmul.mubr.bf16.gmra.mrb[0].mxu0 %v588
        %v1597 = vpop.f32.mrb[0].mxu0
        %v1598 = vpop.f32.mrb[0].mxu0
        %v1599 = vadd.f32 0.0, %v1598
        %v1600 = vpop.f32.mrb[0].mxu0
        %v1601 = vadd.f32 0.0, %v1600
        %v1602 = vpop.f32.mrb[0].mxu0
        %v1603 = vadd.f32 0.0, %v1602
        %1604 = vmatprep.mubr.bf16.mxu0 %v733
        %1605 = vmatmul.mubr.bf16.gmra.mrb[0].mxu0 %v589
        %v1606 = vpop.f32.mrb[0].mxu0
        %v1607 = vadd.f32 0.0, %v1606
        %v1608 = vpop.f32.mrb[0].mxu0
        %v1609 = vadd.f32 0.0, %v1608
        %v1610 = vpop.f32.mrb[0].mxu0
        %v1611 = vpop.f32.mrb[0].mxu0
        %v1612 = vadd.f32 0.0, %v1611
        %1613 = vmatprep.mubr.bf16.mxu0 %v734
        %1614 = vmatmul.mubr.bf16.gmra.mrb[0].mxu0 %v590
        %v1615 = vpop.f32.mrb[0].mxu0
        %v1616 = vadd.f32 0.0, %v1615
        %v1617 = vpop.f32.mrb[0].mxu0
        %v1618 = vadd.f32 0.0, %v1617
        %v1619 = vpop.f32.mrb[0].mxu0
        %v1620 = vadd.f32 0.0, %v1619
        %v1621 = vpop.f32.mrb[0].mxu0
        %v1622 = vadd.f32 0.0, %v1621
        %1623 = vmatprep.mubr.bf16.mxu0 %v735
        %1624 = vmatmul.mubr.bf16.gmra.mrb[0].mxu0 %v591
        %v1625 = vpop.f32.mrb[0].mxu0
        %v1626 = vpop.f32.mrb[0].mxu0
        %v1627 = vadd.f32 0.0, %v1626
        %v1628 = vpop.f32.mrb[0].mxu0
        %v1629 = vadd.f32 0.0, %v1628
        %v1630 = vpop.f32.mrb[0].mxu0
        %v1631 = vadd.f32 0.0, %v1630
        %1632 = vmatprep.mubr.bf16.mxu0 %v736
        %1633 = vmatmul.mubr.bf16.gmra.mrb[0].mxu0 %v592
        %v1634 = vpop.f32.mrb[0].mxu0
        %v1635 = vadd.f32 0.0, %v1634
        %v1636 = vpop.f32.mrb[0].mxu0
        %v1637 = vadd.f32 0.0, %v1636
        %v1638 = vpop.f32.mrb[0].mxu0
        %v1639 = vpop.f32.mrb[0].mxu0
        %v1640 = vadd.f32 0.0, %v1639
        %1641 = vdwg.mxu0
        %1642 = vmatprep.subr.bf16.mxu0 %v1290
        %1643 = vmatpush1.bf16.msra.mxu0 %v1289
        %1644 = vmatprep.subr.bf16.mxu0 %v1293
        %1645 = vmatpush1.bf16.msra.mxu0 %v1292
        %1646 = vmatprep.subr.bf16.mxu0 %v1296
        %1647 = vmatpush1.bf16.msra.mxu0 %v1295
        %1648 = vmatprep.subr.bf16.mxu0 %v1299
        %1649 = vmatpush1.bf16.msra.mxu0 %v1298
        %1650 = vmatprep.subr.bf16.mxu0 %v1302
        %1651 = vmatpush1.bf16.msra.mxu0 %v1301
        %1652 = vmatprep.subr.bf16.mxu0 %v1305
        %1653 = vmatpush1.bf16.msra.mxu0 %v1304
        %1654 = vmatprep.subr.bf16.mxu0 %v1308
        %1655 = vmatpush1.bf16.msra.mxu0 %v1307
        %1656 = vmatprep.subr.bf16.mxu0 %v1311
        %1657 = vmatpush1.bf16.msra.mxu0 %v1310
        %1658 = vmatprep.subr.bf16.mxu0 0
        %1659 = vmatpush1.bf16.msra.mxu0 0
        %1660 = vmatprep.subr.bf16.mxu0 0
        %1661 = vmatpush1.bf16.msra.mxu0 0
        %1662 = vmatprep.subr.bf16.mxu0 0
        %1663 = vmatpush1.bf16.msra.mxu0 0
        %1664 = vmatprep.subr.bf16.mxu0 0
        %1665 = vmatpush1.bf16.msra.mxu0 0
        %1666 = vmatprep.subr.bf16.mxu0 0
        %1667 = vmatpush1.bf16.msra.mxu0 0
        %1668 = vmatprep.subr.bf16.mxu0 0
        %1669 = vmatpush1.bf16.msra.mxu0 0
        %1670 = vmatprep.subr.bf16.mxu0 0
        %1671 = vmatpush1.bf16.msra.mxu0 0
        %1672 = vmatprep.subr.bf16.mxu0 0
        %1673 = vmatpush1.bf16.msra.mxu0 0
        %1674 = vmatprep.mubr.bf16.mxu0 0
        %1675 = vmatmul.mubr.bf16.gmra.mrb[0].mxu0 %v857
        %v1676 = vpop.f32.mrb[0].mxu0
        %v1677 = vadd.f32 %v1420, %v1676
        %v1678 = vpop.f32.mrb[0].mxu0
        %v1679 = vadd.f32 %v1422, %v1678
        %v1680 = vpop.f32.mrb[0].mxu0
        %v1681 = vadd.f32 %v1424, %v1680
        %v1682 = vpop.f32.mrb[0].mxu0
        %v1683 = vadd.f32 %v1426, %v1682
        %1684 = vmatprep.mubr.bf16.mxu0 0
        %1685 = vmatmul.mubr.bf16.gmra.mrb[0].mxu0 %v858
        %v1686 = vpop.f32.mrb[0].mxu0
        %v1687 = vpop.f32.mrb[0].mxu0
        %v1688 = vadd.f32 %v1431, %v1687
        %v1689 = vpop.f32.mrb[0].mxu0
        %v1690 = vadd.f32 %v1433, %v1689
        %v1691 = vpop.f32.mrb[0].mxu0
        %v1692 = vadd.f32 %v1435, %v1691
        %1693 = vmatprep.mubr.bf16.mxu0 0
        %1694 = vmatmul.mubr.bf16.gmra.mrb[0].mxu0 %v859
        %v1695 = vpop.f32.mrb[0].mxu0
        %v1696 = vadd.f32 %v1439, %v1695
        %v1697 = vpop.f32.mrb[0].mxu0
        %v1698 = vadd.f32 %v1441, %v1697
        %v1699 = vpop.f32.mrb[0].mxu0
        %v1700 = vpop.f32.mrb[0].mxu0
        %v1701 = vadd.f32 %v1444, %v1700
        %1702 = vmatprep.mubr.bf16.mxu0 0
        %1703 = vmatmul.mubr.bf16.gmra.mrb[0].mxu0 %v860
        %v1704 = vpop.f32.mrb[0].mxu0
        %v1705 = vadd.f32 %v1448, %v1704
        %v1706 = vpop.f32.mrb[0].mxu0
        %v1707 = vadd.f32 %v1450, %v1706
        %v1708 = vpop.f32.mrb[0].mxu0
        %v1709 = vadd.f32 %v1452, %v1708
        %v1710 = vpop.f32.mrb[0].mxu0
        %v1711 = vadd.f32 %v1454, %v1710
        %1712 = vmatprep.mubr.bf16.mxu0 0
        %1713 = vmatmul.mubr.bf16.gmra.mrb[0].mxu0 %v861
        %v1714 = vpop.f32.mrb[0].mxu0
        %v1715 = vpop.f32.mrb[0].mxu0
        %v1716 = vadd.f32 %v1459, %v1715
        %v1717 = vpop.f32.mrb[0].mxu0
        %v1718 = vadd.f32 %v1461, %v1717
        %v1719 = vpop.f32.mrb[0].mxu0
        %v1720 = vadd.f32 %v1463, %v1719
        %1721 = vmatprep.mubr.bf16.mxu0 0
        %1722 = vmatmul.mubr.bf16.gmra.mrb[0].mxu0 %v862
        %v1723 = vpop.f32.mrb[0].mxu0
        %v1724 = vadd.f32 %v1467, %v1723
        %v1725 = vpop.f32.mrb[0].mxu0
        %v1726 = vadd.f32 %v1469, %v1725
        %v1727 = vpop.f32.mrb[0].mxu0
        %v1728 = vpop.f32.mrb[0].mxu0
        %v1729 = vadd.f32 %v1472, %v1728
        %1730 = vmatprep.mubr.bf16.mxu0 0
        %1731 = vmatmul.mubr.bf16.gmra.mrb[0].mxu0 %v863
        %v1732 = vpop.f32.mrb[0].mxu0
        %v1733 = vadd.f32 %v1476, %v1732
        %v1734 = vpop.f32.mrb[0].mxu0
        %v1735 = vadd.f32 %v1478, %v1734
        %v1736 = vpop.f32.mrb[0].mxu0
        %v1737 = vadd.f32 %v1480, %v1736
        %v1738 = vpop.f32.mrb[0].mxu0
        %v1739 = vadd.f32 %v1482, %v1738
        %1740 = vmatprep.mubr.bf16.mxu0 0
        %1741 = vmatmul.mubr.bf16.gmra.mrb[0].mxu0 %v864
        %v1742 = vpop.f32.mrb[0].mxu0
        %v1743 = vpop.f32.mrb[0].mxu0
        %v1744 = vadd.f32 %v1487, %v1743
        %v1745 = vpop.f32.mrb[0].mxu0
        %v1746 = vadd.f32 %v1489, %v1745
        %v1747 = vpop.f32.mrb[0].mxu0
        %v1748 = vadd.f32 %v1491, %v1747
        %1749 = vmatprep.mubr.bf16.mxu0 0
        %1750 = vmatmul.mubr.bf16.gmra.mrb[0].mxu0 %v865
        %v1751 = vpop.f32.mrb[0].mxu0
        %v1752 = vadd.f32 %v1495, %v1751
        %v1753 = vpop.f32.mrb[0].mxu0
        %v1754 = vadd.f32 %v1497, %v1753
        %v1755 = vpop.f32.mrb[0].mxu0
        %v1756 = vpop.f32.mrb[0].mxu0
        %v1757 = vadd.f32 %v1500, %v1756
        %1758 = vmatprep.mubr.bf16.mxu0 0
        %1759 = vmatmul.mubr.bf16.gmra.mrb[0].mxu0 %v866
        %v1760 = vpop.f32.mrb[0].mxu0
        %v1761 = vadd.f32 %v1504, %v1760
        %v1762 = vpop.f32.mrb[0].mxu0
        %v1763 = vadd.f32 %v1506, %v1762
        %v1764 = vpop.f32.mrb[0].mxu0
        %v1765 = vadd.f32 %v1508, %v1764
        %v1766 = vpop.f32.mrb[0].mxu0
        %v1767 = vadd.f32 %v1510, %v1766
        %1768 = vmatprep.mubr.bf16.mxu0 0
        %1769 = vmatmul.mubr.bf16.gmra.mrb[0].mxu0 %v867
        %v1770 = vpop.f32.mrb[0].mxu0
        %v1771 = vpop.f32.mrb[0].mxu0
        %v1772 = vadd.f32 %v1515, %v1771
        %v1773 = vpop.f32.mrb[0].mxu0
        %v1774 = vadd.f32 %v1517, %v1773
        %v1775 = vpop.f32.mrb[0].mxu0
        %v1776 = vadd.f32 %v1519, %v1775
        %1777 = vmatprep.mubr.bf16.mxu0 0
        %1778 = vmatmul.mubr.bf16.gmra.mrb[0].mxu0 %v868
        %v1779 = vpop.f32.mrb[0].mxu0
        %v1780 = vadd.f32 %v1523, %v1779
        %v1781 = vpop.f32.mrb[0].mxu0
        %v1782 = vadd.f32 %v1525, %v1781
        %v1783 = vpop.f32.mrb[0].mxu0
        %v1784 = vpop.f32.mrb[0].mxu0
        %v1785 = vadd.f32 %v1528, %v1784
        %1786 = vmatprep.mubr.bf16.mxu0 0
        %1787 = vmatmul.mubr.bf16.gmra.mrb[0].mxu0 %v869
        %v1788 = vpop.f32.mrb[0].mxu0
        %v1789 = vadd.f32 %v1532, %v1788
        %v1790 = vpop.f32.mrb[0].mxu0
        %v1791 = vadd.f32 %v1534, %v1790
        %v1792 = vpop.f32.mrb[0].mxu0
        %v1793 = vadd.f32 %v1536, %v1792
        %v1794 = vpop.f32.mrb[0].mxu0
        %v1795 = vadd.f32 %v1538, %v1794
        %1796 = vmatprep.mubr.bf16.mxu0 0
        %1797 = vmatmul.mubr.bf16.gmra.mrb[0].mxu0 %v870
        %v1798 = vpop.f32.mrb[0].mxu0
        %v1799 = vpop.f32.mrb[0].mxu0
        %v1800 = vadd.f32 %v1543, %v1799
        %v1801 = vpop.f32.mrb[0].mxu0
        %v1802 = vadd.f32 %v1545, %v1801
        %v1803 = vpop.f32.mrb[0].mxu0
        %v1804 = vadd.f32 %v1547, %v1803
        %1805 = vmatprep.mubr.bf16.mxu0 0
        %1806 = vmatmul.mubr.bf16.gmra.mrb[0].mxu0 %v871
        %v1807 = vpop.f32.mrb[0].mxu0
        %v1808 = vadd.f32 %v1551, %v1807
        %v1809 = vpop.f32.mrb[0].mxu0
        %v1810 = vadd.f32 %v1553, %v1809
        %v1811 = vpop.f32.mrb[0].mxu0
        %v1812 = vpop.f32.mrb[0].mxu0
        %v1813 = vadd.f32 %v1556, %v1812
        %1814 = vmatprep.mubr.bf16.mxu0 0
        %1815 = vmatmul.mubr.bf16.gmra.mrb[0].mxu0 %v872
        %v1816 = vpop.f32.mrb[0].mxu0
        %v1817 = vadd.f32 %v1560, %v1816
        %v1818 = vpop.f32.mrb[0].mxu0
        %v1819 = vadd.f32 %v1562, %v1818
        %v1820 = vpop.f32.mrb[0].mxu0
        %v1821 = vadd.f32 %v1564, %v1820
        %v1822 = vpop.f32.mrb[0].mxu0
        %v1823 = vadd.f32 %v1566, %v1822
        %1824 = vmatprep.mubr.bf16.mxu0 0
        %1825 = vmatmul.mubr.bf16.gmra.mrb[0].mxu0 %v873
        %v1826 = vpop.f32.mrb[0].mxu0
        %v1827 = vpop.f32.mrb[0].mxu0
        %v1828 = vadd.f32 %v1571, %v1827
        %v1829 = vpop.f32.mrb[0].mxu0
        %v1830 = vadd.f32 %v1573, %v1829
        %v1831 = vpop.f32.mrb[0].mxu0
        %v1832 = vadd.f32 %v1575, %v1831
        %1833 = vmatprep.mubr.bf16.mxu0 0
        %1834 = vmatmul.mubr.bf16.gmra.mrb[0].mxu0 %v874
        %v1835 = vpop.f32.mrb[0].mxu0
        %v1836 = vadd.f32 %v1579, %v1835
        %v1837 = vpop.f32.mrb[0].mxu0
        %v1838 = vadd.f32 %v1581, %v1837
        %v1839 = vpop.f32.mrb[0].mxu0
        %v1840 = vpop.f32.mrb[0].mxu0
        %v1841 = vadd.f32 %v1584, %v1840
        %1842 = vmatprep.mubr.bf16.mxu0 0
        %1843 = vmatmul.mubr.bf16.gmra.mrb[0].mxu0 %v875
        %v1844 = vpop.f32.mrb[0].mxu0
        %v1845 = vadd.f32 %v1588, %v1844
        %v1846 = vpop.f32.mrb[0].mxu0
        %v1847 = vadd.f32 %v1590, %v1846
        %v1848 = vpop.f32.mrb[0].mxu0
        %v1849 = vadd.f32 %v1592, %v1848
        %v1850 = vpop.f32.mrb[0].mxu0
        %v1851 = vadd.f32 %v1594, %v1850
        %1852 = vmatprep.mubr.bf16.mxu0 0
        %1853 = vmatmul.mubr.bf16.gmra.mrb[0].mxu0 %v876
        %v1854 = vpop.f32.mrb[0].mxu0
        %v1855 = vpop.f32.mrb[0].mxu0
        %v1856 = vadd.f32 %v1599, %v1855
        %v1857 = vpop.f32.mrb[0].mxu0
        %v1858 = vadd.f32 %v1601, %v1857
        %v1859 = vpop.f32.mrb[0].mxu0
        %v1860 = vadd.f32 %v1603, %v1859
        %1861 = vmatprep.mubr.bf16.mxu0 0
        %1862 = vmatmul.mubr.bf16.gmra.mrb[0].mxu0 %v877
        %v1863 = vpop.f32.mrb[0].mxu0
        %v1864 = vadd.f32 %v1607, %v1863
        %v1865 = vpop.f32.mrb[0].mxu0
        %v1866 = vadd.f32 %v1609, %v1865
        %v1867 = vpop.f32.mrb[0].mxu0
        %v1868 = vpop.f32.mrb[0].mxu0
        %v1869 = vadd.f32 %v1612, %v1868
        %1870 = vmatprep.mubr.bf16.mxu0 0
        %1871 = vmatmul.mubr.bf16.gmra.mrb[0].mxu0 %v878
        %v1872 = vpop.f32.mrb[0].mxu0
        %v1873 = vadd.f32 %v1616, %v1872
        %v1874 = vpop.f32.mrb[0].mxu0
        %v1875 = vadd.f32 %v1618, %v1874
        %v1876 = vpop.f32.mrb[0].mxu0
        %v1877 = vadd.f32 %v1620, %v1876
        %v1878 = vpop.f32.mrb[0].mxu0
        %v1879 = vadd.f32 %v1622, %v1878
        %1880 = vmatprep.mubr.bf16.mxu0 0
        %1881 = vmatmul.mubr.bf16.gmra.mrb[0].mxu0 %v879
        %v1882 = vpop.f32.mrb[0].mxu0
        %v1883 = vpop.f32.mrb[0].mxu0
        %v1884 = vadd.f32 %v1627, %v1883
        %v1885 = vpop.f32.mrb[0].mxu0
        %v1886 = vadd.f32 %v1629, %v1885
        %v1887 = vpop.f32.mrb[0].mxu0
        %v1888 = vadd.f32 %v1631, %v1887
        %1889 = vmatprep.mubr.bf16.mxu0 0
        %1890 = vmatmul.mubr.bf16.gmra.mrb[0].mxu0 %v880
        %v1891 = vpop.f32.mrb[0].mxu0
        %v1892 = vadd.f32 %v1635, %v1891
        %v1893 = vpop.f32.mrb[0].mxu0
        %v1894 = vadd.f32 %v1637, %v1893
        %v1895 = vpop.f32.mrb[0].mxu0
        %v1896 = vpop.f32.mrb[0].mxu0
        %v1897 = vadd.f32 %v1640, %v1896
        %1898 = vdwg.mxu0
        %1899 = vmatprep.subr.bf16.mxu0 0
        %1900 = vmatpush1.bf16.msra.mxu0 %v1243
        %1901 = vmatprep.subr.bf16.mxu0 0
        %1902 = vmatpush1.bf16.msra.mxu0 %v1246
        %1903 = vmatprep.subr.bf16.mxu0 0
        %1904 = vmatpush1.bf16.msra.mxu0 %v1249
        %1905 = vmatprep.subr.bf16.mxu0 0
        %1906 = vmatpush1.bf16.msra.mxu0 %v1252
        %1907 = vmatprep.subr.bf16.mxu0 0
        %1908 = vmatpush1.bf16.msra.mxu0 %v1255
        %1909 = vmatprep.subr.bf16.mxu0 0
        %1910 = vmatpush1.bf16.msra.mxu0 %v1258
        %1911 = vmatprep.subr.bf16.mxu0 0
        %1912 = vmatpush1.bf16.msra.mxu0 %v1261
        %1913 = vmatprep.subr.bf16.mxu0 0
        %1914 = vmatpush1.bf16.msra.mxu0 %v1264
        %1915 = vmatprep.subr.bf16.mxu0 0
        %1916 = vmatpush1.bf16.msra.mxu0 %v1267
        %1917 = vmatprep.subr.bf16.mxu0 0
        %1918 = vmatpush1.bf16.msra.mxu0 %v1270
        %1919 = vmatprep.subr.bf16.mxu0 0
        %1920 = vmatpush1.bf16.msra.mxu0 %v1273
        %1921 = vmatprep.subr.bf16.mxu0 0
        %1922 = vmatpush1.bf16.msra.mxu0 %v1276
        %1923 = vmatprep.subr.bf16.mxu0 0
        %1924 = vmatpush1.bf16.msra.mxu0 %v1279
        %1925 = vmatprep.subr.bf16.mxu0 0
        %1926 = vmatpush1.bf16.msra.mxu0 %v1282
        %1927 = vmatprep.subr.bf16.mxu0 0
        %1928 = vmatpush1.bf16.msra.mxu0 %v1285
        %1929 = vmatprep.subr.bf16.mxu0 0
        %1930 = vmatpush1.bf16.msra.mxu0 %v1288
        %1931 = vmatprep.mubr.bf16.mxu0 %v713
        %1932 = vmatmul.mubr.bf16.gmra.mrb[0].mxu0 %v569
        %v1933 = vpop.f32.mrb[0].mxu0
        %v1934 = vadd.f32 0.0, %v1933
        %v1935 = vpop.f32.mrb[0].mxu0
        %v1936 = vpop.f32.mrb[0].mxu0
        %v1937 = vadd.f32 0.0, %v1936
        %v1938 = vpop.f32.mrb[0].mxu0
        %1939 = vmatprep.mubr.bf16.mxu0 %v714
        %1940 = vmatmul.mubr.bf16.gmra.mrb[0].mxu0 %v570
        %v1941 = vpop.f32.mrb[0].mxu0
        %v1942 = vadd.f32 0.0, %v1941
        %v1943 = vpop.f32.mrb[0].mxu0
        %v1944 = vpop.f32.mrb[0].mxu0
        %v1945 = vadd.f32 0.0, %v1944
        %v1946 = vpop.f32.mrb[0].mxu0
        %1947 = vmatprep.mubr.bf16.mxu0 %v715
        %1948 = vmatmul.mubr.bf16.gmra.mrb[0].mxu0 %v571
        %v1949 = vpop.f32.mrb[0].mxu0
        %v1950 = vadd.f32 0.0, %v1949
        %v1951 = vpop.f32.mrb[0].mxu0
        %v1952 = vpop.f32.mrb[0].mxu0
        %v1953 = vadd.f32 0.0, %v1952
        %v1954 = vpop.f32.mrb[0].mxu0
        %1955 = vmatprep.mubr.bf16.mxu0 %v716
        %1956 = vmatmul.mubr.bf16.gmra.mrb[0].mxu0 %v572
        %v1957 = vpop.f32.mrb[0].mxu0
        %v1958 = vadd.f32 0.0, %v1957
        %v1959 = vpop.f32.mrb[0].mxu0
        %v1960 = vpop.f32.mrb[0].mxu0
        %v1961 = vadd.f32 0.0, %v1960
        %v1962 = vpop.f32.mrb[0].mxu0
        %1963 = vmatprep.mubr.bf16.mxu0 %v717
        %1964 = vmatmul.mubr.bf16.gmra.mrb[0].mxu0 %v573
        %v1965 = vpop.f32.mrb[0].mxu0
        %v1966 = vadd.f32 0.0, %v1965
        %v1967 = vpop.f32.mrb[0].mxu0
        %v1968 = vpop.f32.mrb[0].mxu0
        %v1969 = vadd.f32 0.0, %v1968
        %v1970 = vpop.f32.mrb[0].mxu0
        %1971 = vmatprep.mubr.bf16.mxu0 %v718
        %1972 = vmatmul.mubr.bf16.gmra.mrb[0].mxu0 %v574
        %v1973 = vpop.f32.mrb[0].mxu0
        %v1974 = vadd.f32 0.0, %v1973
        %v1975 = vpop.f32.mrb[0].mxu0
        %v1976 = vpop.f32.mrb[0].mxu0
        %v1977 = vadd.f32 0.0, %v1976
        %v1978 = vpop.f32.mrb[0].mxu0
        %1979 = vmatprep.mubr.bf16.mxu0 %v719
        %1980 = vmatmul.mubr.bf16.gmra.mrb[0].mxu0 %v575
        %v1981 = vpop.f32.mrb[0].mxu0
        %v1982 = vadd.f32 0.0, %v1981
        %v1983 = vpop.f32.mrb[0].mxu0
        %v1984 = vpop.f32.mrb[0].mxu0
        %v1985 = vadd.f32 0.0, %v1984
        %v1986 = vpop.f32.mrb[0].mxu0
        %1987 = vmatprep.mubr.bf16.mxu0 %v720
        %1988 = vmatmul.mubr.bf16.gmra.mrb[0].mxu0 %v576
        %v1989 = vpop.f32.mrb[0].mxu0
        %v1990 = vadd.f32 0.0, %v1989
        %v1991 = vpop.f32.mrb[0].mxu0
        %v1992 = vpop.f32.mrb[0].mxu0
        %v1993 = vadd.f32 0.0, %v1992
        %v1994 = vpop.f32.mrb[0].mxu0
        %1995 = vmatprep.mubr.bf16.mxu0 %v721
        %1996 = vmatmul.mubr.bf16.gmra.mrb[0].mxu0 %v577
        %v1997 = vpop.f32.mrb[0].mxu0
        %v1998 = vadd.f32 0.0, %v1997
        %v1999 = vpop.f32.mrb[0].mxu0
        %v2000 = vpop.f32.mrb[0].mxu0
        %v2001 = vadd.f32 0.0, %v2000
        %v2002 = vpop.f32.mrb[0].mxu0
        %2003 = vmatprep.mubr.bf16.mxu0 %v722
        %2004 = vmatmul.mubr.bf16.gmra.mrb[0].mxu0 %v578
        %v2005 = vpop.f32.mrb[0].mxu0
        %v2006 = vadd.f32 0.0, %v2005
        %v2007 = vpop.f32.mrb[0].mxu0
        %v2008 = vpop.f32.mrb[0].mxu0
        %v2009 = vadd.f32 0.0, %v2008
        %v2010 = vpop.f32.mrb[0].mxu0
        %2011 = vmatprep.mubr.bf16.mxu0 %v723
        %2012 = vmatmul.mubr.bf16.gmra.mrb[0].mxu0 %v579
        %v2013 = vpop.f32.mrb[0].mxu0
        %v2014 = vadd.f32 0.0, %v2013
        %v2015 = vpop.f32.mrb[0].mxu0
        %v2016 = vpop.f32.mrb[0].mxu0
        %v2017 = vadd.f32 0.0, %v2016
        %v2018 = vpop.f32.mrb[0].mxu0
        %2019 = vmatprep.mubr.bf16.mxu0 %v724
        %2020 = vmatmul.mubr.bf16.gmra.mrb[0].mxu0 %v580
        %v2021 = vpop.f32.mrb[0].mxu0
        %v2022 = vadd.f32 0.0, %v2021
        %v2023 = vpop.f32.mrb[0].mxu0
        %v2024 = vpop.f32.mrb[0].mxu0
        %v2025 = vadd.f32 0.0, %v2024
        %v2026 = vpop.f32.mrb[0].mxu0
        %2027 = vmatprep.mubr.bf16.mxu0 %v725
        %2028 = vmatmul.mubr.bf16.gmra.mrb[0].mxu0 %v581
        %v2029 = vpop.f32.mrb[0].mxu0
        %v2030 = vadd.f32 0.0, %v2029
        %v2031 = vpop.f32.mrb[0].mxu0
        %v2032 = vpop.f32.mrb[0].mxu0
        %v2033 = vadd.f32 0.0, %v2032
        %v2034 = vpop.f32.mrb[0].mxu0
        %2035 = vmatprep.mubr.bf16.mxu0 %v726
        %2036 = vmatmul.mubr.bf16.gmra.mrb[0].mxu0 %v582
        %v2037 = vpop.f32.mrb[0].mxu0
        %v2038 = vadd.f32 0.0, %v2037
        %v2039 = vpop.f32.mrb[0].mxu0
        %v2040 = vpop.f32.mrb[0].mxu0
        %v2041 = vadd.f32 0.0, %v2040
        %v2042 = vpop.f32.mrb[0].mxu0
        %2043 = vmatprep.mubr.bf16.mxu0 %v727
        %2044 = vmatmul.mubr.bf16.gmra.mrb[0].mxu0 %v583
        %v2045 = vpop.f32.mrb[0].mxu0
        %v2046 = vadd.f32 0.0, %v2045
        %v2047 = vpop.f32.mrb[0].mxu0
        %v2048 = vpop.f32.mrb[0].mxu0
        %v2049 = vadd.f32 0.0, %v2048
        %v2050 = vpop.f32.mrb[0].mxu0
        %2051 = vmatprep.mubr.bf16.mxu0 %v728
        %2052 = vmatmul.mubr.bf16.gmra.mrb[0].mxu0 %v584
        %v2053 = vpop.f32.mrb[0].mxu0
        %v2054 = vadd.f32 0.0, %v2053
        %v2055 = vpop.f32.mrb[0].mxu0
        %v2056 = vpop.f32.mrb[0].mxu0
        %v2057 = vadd.f32 0.0, %v2056
        %v2058 = vpop.f32.mrb[0].mxu0
        %2059 = vmatprep.mubr.bf16.mxu0 %v729
        %2060 = vmatmul.mubr.bf16.gmra.mrb[0].mxu0 %v585
        %v2061 = vpop.f32.mrb[0].mxu0
        %v2062 = vadd.f32 0.0, %v2061
        %v2063 = vpop.f32.mrb[0].mxu0
        %v2064 = vpop.f32.mrb[0].mxu0
        %v2065 = vadd.f32 0.0, %v2064
        %v2066 = vpop.f32.mrb[0].mxu0
        %2067 = vmatprep.mubr.bf16.mxu0 %v730
        %2068 = vmatmul.mubr.bf16.gmra.mrb[0].mxu0 %v586
        %v2069 = vpop.f32.mrb[0].mxu0
        %v2070 = vadd.f32 0.0, %v2069
        %v2071 = vpop.f32.mrb[0].mxu0
        %v2072 = vpop.f32.mrb[0].mxu0
        %v2073 = vadd.f32 0.0, %v2072
        %v2074 = vpop.f32.mrb[0].mxu0
        %2075 = vmatprep.mubr.bf16.mxu0 %v731
        %2076 = vmatmul.mubr.bf16.gmra.mrb[0].mxu0 %v587
        %v2077 = vpop.f32.mrb[0].mxu0
        %v2078 = vadd.f32 0.0, %v2077
        %v2079 = vpop.f32.mrb[0].mxu0
        %v2080 = vpop.f32.mrb[0].mxu0
        %v2081 = vadd.f32 0.0, %v2080
        %v2082 = vpop.f32.mrb[0].mxu0
        %2083 = vmatprep.mubr.bf16.mxu0 %v732
        %2084 = vmatmul.mubr.bf16.gmra.mrb[0].mxu0 %v588
        %v2085 = vpop.f32.mrb[0].mxu0
        %v2086 = vadd.f32 0.0, %v2085
        %v2087 = vpop.f32.mrb[0].mxu0
        %v2088 = vpop.f32.mrb[0].mxu0
        %v2089 = vadd.f32 0.0, %v2088
        %v2090 = vpop.f32.mrb[0].mxu0
        %2091 = vmatprep.mubr.bf16.mxu0 %v733
        %2092 = vmatmul.mubr.bf16.gmra.mrb[0].mxu0 %v589
        %v2093 = vpop.f32.mrb[0].mxu0
        %v2094 = vadd.f32 0.0, %v2093
        %v2095 = vpop.f32.mrb[0].mxu0
        %v2096 = vpop.f32.mrb[0].mxu0
        %v2097 = vadd.f32 0.0, %v2096
        %v2098 = vpop.f32.mrb[0].mxu0
        %2099 = vmatprep.mubr.bf16.mxu0 %v734
        %2100 = vmatmul.mubr.bf16.gmra.mrb[0].mxu0 %v590
        %v2101 = vpop.f32.mrb[0].mxu0
        %v2102 = vadd.f32 0.0, %v2101
        %v2103 = vpop.f32.mrb[0].mxu0
        %v2104 = vpop.f32.mrb[0].mxu0
        %v2105 = vadd.f32 0.0, %v2104
        %v2106 = vpop.f32.mrb[0].mxu0
        %2107 = vmatprep.mubr.bf16.mxu0 %v735
        %2108 = vmatmul.mubr.bf16.gmra.mrb[0].mxu0 %v591
        %v2109 = vpop.f32.mrb[0].mxu0
        %v2110 = vadd.f32 0.0, %v2109
        %v2111 = vpop.f32.mrb[0].mxu0
        %v2112 = vpop.f32.mrb[0].mxu0
        %v2113 = vadd.f32 0.0, %v2112
        %v2114 = vpop.f32.mrb[0].mxu0
        %2115 = vmatprep.mubr.bf16.mxu0 %v736
        %2116 = vmatmul.mubr.bf16.gmra.mrb[0].mxu0 %v592
        %v2117 = vpop.f32.mrb[0].mxu0
        %v2118 = vadd.f32 0.0, %v2117
        %v2119 = vpop.f32.mrb[0].mxu0
        %v2120 = vpop.f32.mrb[0].mxu0
        %v2121 = vadd.f32 0.0, %v2120
        %v2122 = vpop.f32.mrb[0].mxu0
        %2123 = vdwg.mxu0
        %2124 = vmatprep.subr.bf16.mxu0 0
        %2125 = vmatpush1.bf16.msra.mxu0 %v1291
        %2126 = vmatprep.subr.bf16.mxu0 0
        %2127 = vmatpush1.bf16.msra.mxu0 %v1294
        %2128 = vmatprep.subr.bf16.mxu0 0
        %2129 = vmatpush1.bf16.msra.mxu0 %v1297
        %2130 = vmatprep.subr.bf16.mxu0 0
        %2131 = vmatpush1.bf16.msra.mxu0 %v1300
        %2132 = vmatprep.subr.bf16.mxu0 0
        %2133 = vmatpush1.bf16.msra.mxu0 %v1303
        %2134 = vmatprep.subr.bf16.mxu0 0
        %2135 = vmatpush1.bf16.msra.mxu0 %v1306
        %2136 = vmatprep.subr.bf16.mxu0 0
        %2137 = vmatpush1.bf16.msra.mxu0 %v1309
        %2138 = vmatprep.subr.bf16.mxu0 0
        %2139 = vmatpush1.bf16.msra.mxu0 %v1312
        %2140 = vmatprep.subr.bf16.mxu0 0
        %2141 = vmatpush1.bf16.msra.mxu0 0
        %2142 = vmatprep.subr.bf16.mxu0 0
        %2143 = vmatpush1.bf16.msra.mxu0 0
        %2144 = vmatprep.subr.bf16.mxu0 0
        %2145 = vmatpush1.bf16.msra.mxu0 0
        %2146 = vmatprep.subr.bf16.mxu0 0
        %2147 = vmatpush1.bf16.msra.mxu0 0
        %2148 = vmatprep.subr.bf16.mxu0 0
        %2149 = vmatpush1.bf16.msra.mxu0 0
        %2150 = vmatprep.subr.bf16.mxu0 0
        %2151 = vmatpush1.bf16.msra.mxu0 0
        %2152 = vmatprep.subr.bf16.mxu0 0
        %2153 = vmatpush1.bf16.msra.mxu0 0
        %2154 = vmatprep.subr.bf16.mxu0 0
        %2155 = vmatpush1.bf16.msra.mxu0 0
        %2156 = vmatprep.mubr.bf16.mxu0 0
        %2157 = vmatmul.mubr.bf16.gmra.mrb[0].mxu0 %v857
        %v2158 = vpop.f32.mrb[0].mxu0
        %v2159 = vadd.f32 %v1934, %v2158
        %v2160 = vpop.f32.mrb[0].mxu0
        %v2161 = vpop.f32.mrb[0].mxu0
        %v2162 = vadd.f32 %v1937, %v2161
        %v2163 = vpop.f32.mrb[0].mxu0
        %2164 = vmatprep.mubr.bf16.mxu0 0
        %2165 = vmatmul.mubr.bf16.gmra.mrb[0].mxu0 %v858
        %v2166 = vpop.f32.mrb[0].mxu0
        %v2167 = vadd.f32 %v1942, %v2166
        %v2168 = vpop.f32.mrb[0].mxu0
        %v2169 = vpop.f32.mrb[0].mxu0
        %v2170 = vadd.f32 %v1945, %v2169
        %v2171 = vpop.f32.mrb[0].mxu0
        %2172 = vmatprep.mubr.bf16.mxu0 0
        %2173 = vmatmul.mubr.bf16.gmra.mrb[0].mxu0 %v859
        %v2174 = vpop.f32.mrb[0].mxu0
        %v2175 = vadd.f32 %v1950, %v2174
        %v2176 = vpop.f32.mrb[0].mxu0
        %v2177 = vpop.f32.mrb[0].mxu0
        %v2178 = vadd.f32 %v1953, %v2177
        %v2179 = vpop.f32.mrb[0].mxu0
        %2180 = vmatprep.mubr.bf16.mxu0 0
        %2181 = vmatmul.mubr.bf16.gmra.mrb[0].mxu0 %v860
        %v2182 = vpop.f32.mrb[0].mxu0
        %v2183 = vadd.f32 %v1958, %v2182
        %v2184 = vpop.f32.mrb[0].mxu0
        %v2185 = vpop.f32.mrb[0].mxu0
        %v2186 = vadd.f32 %v1961, %v2185
        %v2187 = vpop.f32.mrb[0].mxu0
        %2188 = vmatprep.mubr.bf16.mxu0 0
        %2189 = vmatmul.mubr.bf16.gmra.mrb[0].mxu0 %v861
        %v2190 = vpop.f32.mrb[0].mxu0
        %v2191 = vadd.f32 %v1966, %v2190
        %v2192 = vpop.f32.mrb[0].mxu0
        %v2193 = vpop.f32.mrb[0].mxu0
        %v2194 = vadd.f32 %v1969, %v2193
        %v2195 = vpop.f32.mrb[0].mxu0
        %2196 = vmatprep.mubr.bf16.mxu0 0
        %2197 = vmatmul.mubr.bf16.gmra.mrb[0].mxu0 %v862
        %v2198 = vpop.f32.mrb[0].mxu0
        %v2199 = vadd.f32 %v1974, %v2198
        %v2200 = vpop.f32.mrb[0].mxu0
        %v2201 = vpop.f32.mrb[0].mxu0
        %v2202 = vadd.f32 %v1977, %v2201
        %v2203 = vpop.f32.mrb[0].mxu0
        %2204 = vmatprep.mubr.bf16.mxu0 0
        %2205 = vmatmul.mubr.bf16.gmra.mrb[0].mxu0 %v863
        %v2206 = vpop.f32.mrb[0].mxu0
        %v2207 = vadd.f32 %v1982, %v2206
        %v2208 = vpop.f32.mrb[0].mxu0
        %v2209 = vpop.f32.mrb[0].mxu0
        %v2210 = vadd.f32 %v1985, %v2209
        %v2211 = vpop.f32.mrb[0].mxu0
        %2212 = vmatprep.mubr.bf16.mxu0 0
        %2213 = vmatmul.mubr.bf16.gmra.mrb[0].mxu0 %v864
        %v2214 = vpop.f32.mrb[0].mxu0
        %v2215 = vadd.f32 %v1990, %v2214
        %v2216 = vpop.f32.mrb[0].mxu0
        %v2217 = vpop.f32.mrb[0].mxu0
        %v2218 = vadd.f32 %v1993, %v2217
        %v2219 = vpop.f32.mrb[0].mxu0
        %2220 = vmatprep.mubr.bf16.mxu0 0
        %2221 = vmatmul.mubr.bf16.gmra.mrb[0].mxu0 %v865
        %v2222 = vpop.f32.mrb[0].mxu0
        %v2223 = vadd.f32 %v1998, %v2222
        %v2224 = vpop.f32.mrb[0].mxu0
        %v2225 = vpop.f32.mrb[0].mxu0
        %v2226 = vadd.f32 %v2001, %v2225
        %v2227 = vpop.f32.mrb[0].mxu0
        %2228 = vmatprep.mubr.bf16.mxu0 0
        %2229 = vmatmul.mubr.bf16.gmra.mrb[0].mxu0 %v866
        %v2230 = vpop.f32.mrb[0].mxu0
        %v2231 = vadd.f32 %v2006, %v2230
        %v2232 = vpop.f32.mrb[0].mxu0
        %v2233 = vpop.f32.mrb[0].mxu0
        %v2234 = vadd.f32 %v2009, %v2233
        %v2235 = vpop.f32.mrb[0].mxu0
        %2236 = vmatprep.mubr.bf16.mxu0 0
        %2237 = vmatmul.mubr.bf16.gmra.mrb[0].mxu0 %v867
        %v2238 = vpop.f32.mrb[0].mxu0
        %v2239 = vadd.f32 %v2014, %v2238
        %v2240 = vpop.f32.mrb[0].mxu0
        %v2241 = vpop.f32.mrb[0].mxu0
        %v2242 = vadd.f32 %v2017, %v2241
        %v2243 = vpop.f32.mrb[0].mxu0
        %2244 = vmatprep.mubr.bf16.mxu0 0
        %2245 = vmatmul.mubr.bf16.gmra.mrb[0].mxu0 %v868
        %v2246 = vpop.f32.mrb[0].mxu0
        %v2247 = vadd.f32 %v2022, %v2246
        %v2248 = vpop.f32.mrb[0].mxu0
        %v2249 = vpop.f32.mrb[0].mxu0
        %v2250 = vadd.f32 %v2025, %v2249
        %v2251 = vpop.f32.mrb[0].mxu0
        %2252 = vmatprep.mubr.bf16.mxu0 0
        %2253 = vmatmul.mubr.bf16.gmra.mrb[0].mxu0 %v869
        %v2254 = vpop.f32.mrb[0].mxu0
        %v2255 = vadd.f32 %v2030, %v2254
        %v2256 = vpop.f32.mrb[0].mxu0
        %v2257 = vpop.f32.mrb[0].mxu0
        %v2258 = vadd.f32 %v2033, %v2257
        %v2259 = vpop.f32.mrb[0].mxu0
        %2260 = vmatprep.mubr.bf16.mxu0 0
        %2261 = vmatmul.mubr.bf16.gmra.mrb[0].mxu0 %v870
        %v2262 = vpop.f32.mrb[0].mxu0
        %v2263 = vadd.f32 %v2038, %v2262
        %v2264 = vpop.f32.mrb[0].mxu0
        %v2265 = vpop.f32.mrb[0].mxu0
        %v2266 = vadd.f32 %v2041, %v2265
        %v2267 = vpop.f32.mrb[0].mxu0
        %2268 = vmatprep.mubr.bf16.mxu0 0
        %2269 = vmatmul.mubr.bf16.gmra.mrb[0].mxu0 %v871
        %v2270 = vpop.f32.mrb[0].mxu0
        %v2271 = vadd.f32 %v2046, %v2270
        %v2272 = vpop.f32.mrb[0].mxu0
        %v2273 = vpop.f32.mrb[0].mxu0
        %v2274 = vadd.f32 %v2049, %v2273
        %v2275 = vpop.f32.mrb[0].mxu0
        %2276 = vmatprep.mubr.bf16.mxu0 0
        %2277 = vmatmul.mubr.bf16.gmra.mrb[0].mxu0 %v872
        %v2278 = vpop.f32.mrb[0].mxu0
        %v2279 = vadd.f32 %v2054, %v2278
        %v2280 = vpop.f32.mrb[0].mxu0
        %v2281 = vpop.f32.mrb[0].mxu0
        %v2282 = vadd.f32 %v2057, %v2281
        %v2283 = vpop.f32.mrb[0].mxu0
        %2284 = vmatprep.mubr.bf16.mxu0 0
        %2285 = vmatmul.mubr.bf16.gmra.mrb[0].mxu0 %v873
        %v2286 = vpop.f32.mrb[0].mxu0
        %v2287 = vadd.f32 %v2062, %v2286
        %v2288 = vpop.f32.mrb[0].mxu0
        %v2289 = vpop.f32.mrb[0].mxu0
        %v2290 = vadd.f32 %v2065, %v2289
        %v2291 = vpop.f32.mrb[0].mxu0
        %2292 = vmatprep.mubr.bf16.mxu0 0
        %2293 = vmatmul.mubr.bf16.gmra.mrb[0].mxu0 %v874
        %v2294 = vpop.f32.mrb[0].mxu0
        %v2295 = vadd.f32 %v2070, %v2294
        %v2296 = vpop.f32.mrb[0].mxu0
        %v2297 = vpop.f32.mrb[0].mxu0
        %v2298 = vadd.f32 %v2073, %v2297
        %v2299 = vpop.f32.mrb[0].mxu0
        %2300 = vmatprep.mubr.bf16.mxu0 0
        %2301 = vmatmul.mubr.bf16.gmra.mrb[0].mxu0 %v875
        %v2302 = vpop.f32.mrb[0].mxu0
        %v2303 = vadd.f32 %v2078, %v2302
        %v2304 = vpop.f32.mrb[0].mxu0
        %v2305 = vpop.f32.mrb[0].mxu0
        %v2306 = vadd.f32 %v2081, %v2305
        %v2307 = vpop.f32.mrb[0].mxu0
        %2308 = vmatprep.mubr.bf16.mxu0 0
        %2309 = vmatmul.mubr.bf16.gmra.mrb[0].mxu0 %v876
        %v2310 = vpop.f32.mrb[0].mxu0
        %v2311 = vadd.f32 %v2086, %v2310
        %v2312 = vpop.f32.mrb[0].mxu0
        %v2313 = vpop.f32.mrb[0].mxu0
        %v2314 = vadd.f32 %v2089, %v2313
        %v2315 = vpop.f32.mrb[0].mxu0
        %2316 = vmatprep.mubr.bf16.mxu0 0
        %2317 = vmatmul.mubr.bf16.gmra.mrb[0].mxu0 %v877
        %v2318 = vpop.f32.mrb[0].mxu0
        %v2319 = vadd.f32 %v2094, %v2318
        %v2320 = vpop.f32.mrb[0].mxu0
        %v2321 = vpop.f32.mrb[0].mxu0
        %v2322 = vadd.f32 %v2097, %v2321
        %v2323 = vpop.f32.mrb[0].mxu0
        %2324 = vmatprep.mubr.bf16.mxu0 0
        %2325 = vmatmul.mubr.bf16.gmra.mrb[0].mxu0 %v878
        %v2326 = vpop.f32.mrb[0].mxu0
        %v2327 = vadd.f32 %v2102, %v2326
        %v2328 = vpop.f32.mrb[0].mxu0
        %v2329 = vpop.f32.mrb[0].mxu0
        %v2330 = vadd.f32 %v2105, %v2329
        %v2331 = vpop.f32.mrb[0].mxu0
        %2332 = vmatprep.mubr.bf16.mxu0 0
        %2333 = vmatmul.mubr.bf16.gmra.mrb[0].mxu0 %v879
        %v2334 = vpop.f32.mrb[0].mxu0
        %v2335 = vadd.f32 %v2110, %v2334
        %v2336 = vpop.f32.mrb[0].mxu0
        %v2337 = vpop.f32.mrb[0].mxu0
        %v2338 = vadd.f32 %v2113, %v2337
        %v2339 = vpop.f32.mrb[0].mxu0
        %2340 = vmatprep.mubr.bf16.mxu0 0
        %2341 = vmatmul.mubr.bf16.gmra.mrb[0].mxu0 %v880
        %v2342 = vpop.f32.mrb[0].mxu0
        %v2343 = vadd.f32 %v2118, %v2342
        %v2344 = vpop.f32.mrb[0].mxu0
        %v2345 = vpop.f32.mrb[0].mxu0
        %v2346 = vadd.f32 %v2121, %v2345
        %v2347 = vpop.f32.mrb[0].mxu0
        %2348 = vdwg.mxu0
        %vm2397 = vcmask 1046528
        %v2398 = vrot.slane %v1679, 1
        %v2399 = vrot.slane %v1683, 1
        %v2400 = vsel %vm2397, %v2398, %v2399
        %v2401 = vrot.slane %v1688, 1
        %v2402 = vsel %vm2397, %v2399, %v2401
        %v2403 = vrot.slane %v1692, 1
        %v2404 = vrot.slane %v1698, 1
        %v2405 = vsel %vm2397, %v2403, %v2404
        %v2406 = vrot.slane %v1701, 1
        %v2407 = vsel %vm2397, %v2404, %v2406
        %v2408 = vrot.slane %v1707, 1
        %v2409 = vrot.slane %v1711, 1
        %v2410 = vsel %vm2397, %v2408, %v2409
        %v2411 = vrot.slane %v1716, 1
        %v2412 = vsel %vm2397, %v2409, %v2411
        %v2413 = vrot.slane %v1720, 1
        %v2414 = vrot.slane %v1726, 1
        %v2415 = vsel %vm2397, %v2413, %v2414
        %v2416 = vrot.slane %v1729, 1
        %v2417 = vsel %vm2397, %v2414, %v2416
        %v2418 = vrot.slane %v1735, 1
        %v2419 = vrot.slane %v1739, 1
        %v2420 = vsel %vm2397, %v2418, %v2419
        %v2421 = vrot.slane %v1744, 1
        %v2422 = vsel %vm2397, %v2419, %v2421
        %v2423 = vrot.slane %v1748, 1
        %v2424 = vrot.slane %v1754, 1
        %v2425 = vsel %vm2397, %v2423, %v2424
        %v2426 = vrot.slane %v1757, 1
        %v2427 = vsel %vm2397, %v2424, %v2426
        %v2428 = vrot.slane %v1763, 1
        %v2429 = vrot.slane %v1767, 1
        %v2430 = vsel %vm2397, %v2428, %v2429
        %v2431 = vrot.slane %v1772, 1
        %v2432 = vsel %vm2397, %v2429, %v2431
        %v2433 = vrot.slane %v1776, 1
        %v2434 = vrot.slane %v1782, 1
        %v2435 = vsel %vm2397, %v2433, %v2434
        %v2436 = vrot.slane %v1785, 1
        %v2437 = vsel %vm2397, %v2434, %v2436
        %v2438 = vrot.slane %v1791, 1
        %v2439 = vrot.slane %v1795, 1
        %v2440 = vsel %vm2397, %v2438, %v2439
        %v2441 = vrot.slane %v1800, 1
        %v2442 = vsel %vm2397, %v2439, %v2441
        %v2443 = vrot.slane %v1804, 1
        %v2444 = vrot.slane %v1810, 1
        %v2445 = vsel %vm2397, %v2443, %v2444
        %v2446 = vrot.slane %v1813, 1
        %v2447 = vsel %vm2397, %v2444, %v2446
        %v2448 = vrot.slane %v1819, 1
        %v2449 = vrot.slane %v1823, 1
        %v2450 = vsel %vm2397, %v2448, %v2449
        %v2451 = vrot.slane %v1828, 1
        %v2452 = vsel %vm2397, %v2449, %v2451
        %v2453 = vrot.slane %v1832, 1
        %v2454 = vrot.slane %v1838, 1
        %v2455 = vsel %vm2397, %v2453, %v2454
        %v2456 = vrot.slane %v1841, 1
        %v2457 = vsel %vm2397, %v2454, %v2456
        %v2458 = vrot.slane %v1847, 1
        %v2459 = vrot.slane %v1851, 1
        %v2460 = vsel %vm2397, %v2458, %v2459
        %v2461 = vrot.slane %v1856, 1
        %v2462 = vsel %vm2397, %v2459, %v2461
        %v2463 = vrot.slane %v1860, 1
        %v2464 = vrot.slane %v1866, 1
        %v2465 = vsel %vm2397, %v2463, %v2464
        %v2466 = vrot.slane %v1869, 1
        %v2467 = vsel %vm2397, %v2464, %v2466
        %v2468 = vrot.slane %v1875, 1
        %v2469 = vrot.slane %v1879, 1
        %v2470 = vsel %vm2397, %v2468, %v2469
        %v2471 = vrot.slane %v1884, 1
        %v2472 = vsel %vm2397, %v2469, %v2471
        %v2473 = vrot.slane %v1888, 1
        %v2474 = vrot.slane %v1894, 1
        %v2475 = vsel %vm2397, %v2473, %v2474
        %v2476 = vrot.slane %v1897, 1
        %v2477 = vsel %vm2397, %v2474, %v2476
        %v2510 = vadd.f32 %v1677, %v2400
        %v2511 = vadd.f32 %v1681, %v2402
        %v2512 = vadd.f32 %v1690, %v2405
        %v2513 = vadd.f32 %v1696, %v2407
        %v2514 = vadd.f32 %v1705, %v2410
        %v2515 = vadd.f32 %v1709, %v2412
        %v2516 = vadd.f32 %v1718, %v2415
        %v2517 = vadd.f32 %v1724, %v2417
        %v2518 = vadd.f32 %v1733, %v2420
        %v2519 = vadd.f32 %v1737, %v2422
        %v2520 = vadd.f32 %v1746, %v2425
        %v2521 = vadd.f32 %v1752, %v2427
        %v2522 = vadd.f32 %v1761, %v2430
        %v2523 = vadd.f32 %v1765, %v2432
        %v2524 = vadd.f32 %v1774, %v2435
        %v2525 = vadd.f32 %v1780, %v2437
        %v2526 = vadd.f32 %v1789, %v2440
        %v2527 = vadd.f32 %v1793, %v2442
        %v2528 = vadd.f32 %v1802, %v2445
        %v2529 = vadd.f32 %v1808, %v2447
        %v2530 = vadd.f32 %v1817, %v2450
        %v2531 = vadd.f32 %v1821, %v2452
        %v2532 = vadd.f32 %v1830, %v2455
        %v2533 = vadd.f32 %v1836, %v2457
        %v2534 = vadd.f32 %v1845, %v2460
        %v2535 = vadd.f32 %v1849, %v2462
        %v2536 = vadd.f32 %v1858, %v2465
        %v2537 = vadd.f32 %v1864, %v2467
        %v2538 = vadd.f32 %v1873, %v2470
        %v2539 = vadd.f32 %v1877, %v2472
        %v2540 = vadd.f32 %v1886, %v2475
        %v2541 = vadd.f32 %v1892, %v2477
        %vm2590 = vcmask 1045504
        %v2591 = vrot.slane %v2159, 2
        %v2592 = vrot.slane %v2162, 2
        %v2593 = vsel %vm2590, %v2591, %v2592
        %v2594 = vrot.slane %v2167, 2
        %v2595 = vsel %vm2590, %v2592, %v2594
        %v2596 = vrot.slane %v2170, 2
        %v2597 = vrot.slane %v2175, 2
        %v2598 = vsel %vm2590, %v2596, %v2597
        %v2599 = vrot.slane %v2178, 2
        %v2600 = vsel %vm2590, %v2597, %v2599
        %v2601 = vrot.slane %v2183, 2
        %v2602 = vrot.slane %v2186, 2
        %v2603 = vsel %vm2590, %v2601, %v2602
        %v2604 = vrot.slane %v2191, 2
        %v2605 = vsel %vm2590, %v2602, %v2604
        %v2606 = vrot.slane %v2194, 2
        %v2607 = vrot.slane %v2199, 2
        %v2608 = vsel %vm2590, %v2606, %v2607
        %v2609 = vrot.slane %v2202, 2
        %v2610 = vsel %vm2590, %v2607, %v2609
        %v2611 = vrot.slane %v2207, 2
        %v2612 = vrot.slane %v2210, 2
        %v2613 = vsel %vm2590, %v2611, %v2612
        %v2614 = vrot.slane %v2215, 2
        %v2615 = vsel %vm2590, %v2612, %v2614
        %v2616 = vrot.slane %v2218, 2
        %v2617 = vrot.slane %v2223, 2
        %v2618 = vsel %vm2590, %v2616, %v2617
        %v2619 = vrot.slane %v2226, 2
        %v2620 = vsel %vm2590, %v2617, %v2619
        %v2621 = vrot.slane %v2231, 2
        %v2622 = vrot.slane %v2234, 2
        %v2623 = vsel %vm2590, %v2621, %v2622
        %v2624 = vrot.slane %v2239, 2
        %v2625 = vsel %vm2590, %v2622, %v2624
        %v2626 = vrot.slane %v2242, 2
        %v2627 = vrot.slane %v2247, 2
        %v2628 = vsel %vm2590, %v2626, %v2627
        %v2629 = vrot.slane %v2250, 2
        %v2630 = vsel %vm2590, %v2627, %v2629
        %v2631 = vrot.slane %v2255, 2
        %v2632 = vrot.slane %v2258, 2
        %v2633 = vsel %vm2590, %v2631, %v2632
        %v2634 = vrot.slane %v2263, 2
        %v2635 = vsel %vm2590, %v2632, %v2634
        %v2636 = vrot.slane %v2266, 2
        %v2637 = vrot.slane %v2271, 2
        %v2638 = vsel %vm2590, %v2636, %v2637
        %v2639 = vrot.slane %v2274, 2
        %v2640 = vsel %vm2590, %v2637, %v2639
        %v2641 = vrot.slane %v2279, 2
        %v2642 = vrot.slane %v2282, 2
        %v2643 = vsel %vm2590, %v2641, %v2642
        %v2644 = vrot.slane %v2287, 2
        %v2645 = vsel %vm2590, %v2642, %v2644
        %v2646 = vrot.slane %v2290, 2
        %v2647 = vrot.slane %v2295, 2
        %v2648 = vsel %vm2590, %v2646, %v2647
        %v2649 = vrot.slane %v2298, 2
        %v2650 = vsel %vm2590, %v2647, %v2649
        %v2651 = vrot.slane %v2303, 2
        %v2652 = vrot.slane %v2306, 2
        %v2653 = vsel %vm2590, %v2651, %v2652
        %v2654 = vrot.slane %v2311, 2
        %v2655 = vsel %vm2590, %v2652, %v2654
        %v2656 = vrot.slane %v2314, 2
        %v2657 = vrot.slane %v2319, 2
        %v2658 = vsel %vm2590, %v2656, %v2657
        %v2659 = vrot.slane %v2322, 2
        %v2660 = vsel %vm2590, %v2657, %v2659
        %v2661 = vrot.slane %v2327, 2
        %v2662 = vrot.slane %v2330, 2
        %v2663 = vsel %vm2590, %v2661, %v2662
        %v2664 = vrot.slane %v2335, 2
        %v2665 = vsel %vm2590, %v2662, %v2664
        %v2666 = vrot.slane %v2338, 2
        %v2667 = vrot.slane %v2343, 2
        %v2668 = vsel %vm2590, %v2666, %v2667
        %v2669 = vrot.slane %v2346, 2
        %v2670 = vsel %vm2590, %v2667, %v2669
        %v2703 = vadd.f32 %v2510, %v2593
        %v2704 = vadd.f32 %v2511, %v2595
        %v2705 = vadd.f32 %v2512, %v2598
        %v2706 = vadd.f32 %v2513, %v2600
        %v2707 = vadd.f32 %v2514, %v2603
        %v2708 = vadd.f32 %v2515, %v2605
        %v2709 = vadd.f32 %v2516, %v2608
        %v2710 = vadd.f32 %v2517, %v2610
        %v2711 = vadd.f32 %v2518, %v2613
        %v2712 = vadd.f32 %v2519, %v2615
        %v2713 = vadd.f32 %v2520, %v2618
        %v2714 = vadd.f32 %v2521, %v2620
        %v2715 = vadd.f32 %v2522, %v2623
        %v2716 = vadd.f32 %v2523, %v2625
        %v2717 = vadd.f32 %v2524, %v2628
        %v2718 = vadd.f32 %v2525, %v2630
        %v2719 = vadd.f32 %v2526, %v2633
        %v2720 = vadd.f32 %v2527, %v2635
        %v2721 = vadd.f32 %v2528, %v2638
        %v2722 = vadd.f32 %v2529, %v2640
        %v2723 = vadd.f32 %v2530, %v2643
        %v2724 = vadd.f32 %v2531, %v2645
        %v2725 = vadd.f32 %v2532, %v2648
        %v2726 = vadd.f32 %v2533, %v2650
        %v2727 = vadd.f32 %v2534, %v2653
        %v2728 = vadd.f32 %v2535, %v2655
        %v2729 = vadd.f32 %v2536, %v2658
        %v2730 = vadd.f32 %v2537, %v2660
        %v2731 = vadd.f32 %v2538, %v2663
        %v2732 = vadd.f32 %v2539, %v2665
        %v2733 = vadd.f32 %v2540, %v2668
        %v2734 = vadd.f32 %v2541, %v2670
        %v2735 = vld [vmem:[%s2] sm:$0x1]
        %v2737 = vlaneseq
        %v2738 = vshrl.u32 %v2737, 7
        %v2739 = vsub.s32 0, %v2738
        %v2740 = vrot.slane %v2735, %v2739
        %v2742 = vmul.f32 %v2703, %v2740
        %v2743 = vmul.f32 %v2704, %v2740
        %v2744 = vmul.f32 %v2705, %v2740
        %v2745 = vmul.f32 %v2706, %v2740
        %v2746 = vmul.f32 %v2707, %v2740
        %v2747 = vmul.f32 %v2708, %v2740
        %v2748 = vmul.f32 %v2709, %v2740
        %v2749 = vmul.f32 %v2710, %v2740
        %v2750 = vmul.f32 %v2711, %v2740
        %v2751 = vmul.f32 %v2712, %v2740
        %v2752 = vmul.f32 %v2713, %v2740
        %v2753 = vmul.f32 %v2714, %v2740
        %v2754 = vmul.f32 %v2715, %v2740
        %v2755 = vmul.f32 %v2716, %v2740
        %v2756 = vmul.f32 %v2717, %v2740
        %v2757 = vmul.f32 %v2718, %v2740
        %v2758 = vmul.f32 %v2719, %v2740
        %v2759 = vmul.f32 %v2720, %v2740
        %v2760 = vmul.f32 %v2721, %v2740
        %v2761 = vmul.f32 %v2722, %v2740
        %v2762 = vmul.f32 %v2723, %v2740
        %v2763 = vmul.f32 %v2724, %v2740
        %v2764 = vmul.f32 %v2725, %v2740
        %v2765 = vmul.f32 %v2726, %v2740
        %v2766 = vmul.f32 %v2727, %v2740
        %v2767 = vmul.f32 %v2728, %v2740
        %v2768 = vmul.f32 %v2729, %v2740
        %v2769 = vmul.f32 %v2730, %v2740
        %v2770 = vmul.f32 %v2731, %v2740
        %v2771 = vmul.f32 %v2732, %v2740
        %v2772 = vmul.f32 %v2733, %v2740
        %v2773 = vmul.f32 %v2734, %v2740
        %v2774 = vld [vmem:[%s3] sm:$0x1]
        %v2776 = vlaneseq
        %v2777 = vshrl.u32 %v2776, 7
        %v2778 = vsub.s32 0, %v2777
        %v2779 = vrot.slane %v2774, %v2778
        %v2781 = vadd.f32 %v2742, %v2779
        %v2782 = vadd.f32 %v2743, %v2779
        %v2783 = vadd.f32 %v2744, %v2779
        %v2784 = vadd.f32 %v2745, %v2779
        %v2785 = vadd.f32 %v2746, %v2779
        %v2786 = vadd.f32 %v2747, %v2779
        %v2787 = vadd.f32 %v2748, %v2779
        %v2788 = vadd.f32 %v2749, %v2779
        %v2789 = vadd.f32 %v2750, %v2779
        %v2790 = vadd.f32 %v2751, %v2779
        %v2791 = vadd.f32 %v2752, %v2779
        %v2792 = vadd.f32 %v2753, %v2779
        %v2793 = vadd.f32 %v2754, %v2779
        %v2794 = vadd.f32 %v2755, %v2779
        %v2795 = vadd.f32 %v2756, %v2779
        %v2796 = vadd.f32 %v2757, %v2779
        %v2797 = vadd.f32 %v2758, %v2779
        %v2798 = vadd.f32 %v2759, %v2779
        %v2799 = vadd.f32 %v2760, %v2779
        %v2800 = vadd.f32 %v2761, %v2779
        %v2801 = vadd.f32 %v2762, %v2779
        %v2802 = vadd.f32 %v2763, %v2779
        %v2803 = vadd.f32 %v2764, %v2779
        %v2804 = vadd.f32 %v2765, %v2779
        %v2805 = vadd.f32 %v2766, %v2779
        %v2806 = vadd.f32 %v2767, %v2779
        %v2807 = vadd.f32 %v2768, %v2779
        %v2808 = vadd.f32 %v2769, %v2779
        %v2809 = vadd.f32 %v2770, %v2779
        %v2810 = vadd.f32 %v2771, %v2779
        %v2811 = vadd.f32 %v2772, %v2779
        %v2812 = vadd.f32 %v2773, %v2779
        %v2813 = vmax.f32 %v2781, 0.0
        %v2814 = vmax.f32 %v2782, 0.0
        %v2815 = vmax.f32 %v2783, 0.0
        %v2816 = vmax.f32 %v2784, 0.0
        %v2817 = vmax.f32 %v2785, 0.0
        %v2818 = vmax.f32 %v2786, 0.0
        %v2819 = vmax.f32 %v2787, 0.0
        %v2820 = vmax.f32 %v2788, 0.0
        %v2821 = vmax.f32 %v2789, 0.0
        %v2822 = vmax.f32 %v2790, 0.0
        %v2823 = vmax.f32 %v2791, 0.0
        %v2824 = vmax.f32 %v2792, 0.0
        %v2825 = vmax.f32 %v2793, 0.0
        %v2826 = vmax.f32 %v2794, 0.0
        %v2827 = vmax.f32 %v2795, 0.0
        %v2828 = vmax.f32 %v2796, 0.0
        %v2829 = vmax.f32 %v2797, 0.0
        %v2830 = vmax.f32 %v2798, 0.0
        %v2831 = vmax.f32 %v2799, 0.0
        %v2832 = vmax.f32 %v2800, 0.0
        %v2833 = vmax.f32 %v2801, 0.0
        %v2834 = vmax.f32 %v2802, 0.0
        %v2835 = vmax.f32 %v2803, 0.0
        %v2836 = vmax.f32 %v2804, 0.0
        %v2837 = vmax.f32 %v2805, 0.0
        %v2838 = vmax.f32 %v2806, 0.0
        %v2839 = vmax.f32 %v2807, 0.0
        %v2840 = vmax.f32 %v2808, 0.0
        %v2841 = vmax.f32 %v2809, 0.0
        %v2842 = vmax.f32 %v2810, 0.0
        %v2843 = vmax.f32 %v2811, 0.0
        %v2844 = vmax.f32 %v2812, 0.0
        %v2845 = vpack.c.bf16 %v2814, %v2813
        %v2846 = vpack.c.bf16 %v2816, %v2815
        %v2847 = vpack.c.bf16 %v2818, %v2817
        %v2848 = vpack.c.bf16 %v2820, %v2819
        %v2849 = vpack.c.bf16 %v2822, %v2821
        %v2850 = vpack.c.bf16 %v2824, %v2823
        %v2851 = vpack.c.bf16 %v2826, %v2825
        %v2852 = vpack.c.bf16 %v2828, %v2827
        %v2853 = vpack.c.bf16 %v2830, %v2829
        %v2854 = vpack.c.bf16 %v2832, %v2831
        %v2855 = vpack.c.bf16 %v2834, %v2833
        %v2856 = vpack.c.bf16 %v2836, %v2835
        %v2857 = vpack.c.bf16 %v2838, %v2837
        %v2858 = vpack.c.bf16 %v2840, %v2839
        %v2859 = vpack.c.bf16 %v2842, %v2841
        %v2860 = vpack.c.bf16 %v2844, %v2843
        %2861 = vst [vmem:[#allocation2] sm:$0xf] 0
        %2862 = vst [vmem:[#allocation2 + $0x4] sm:$0xf] 0
        %2863 = vst [vmem:[#allocation2 + $0x8] sm:$0xf] 0
        %2864 = vst [vmem:[#allocation2 + $0xc] sm:$0xf] 0
        %2865 = vst [vmem:[#allocation2 + $0x10] sm:$0xf] 0
        %2866 = vst [vmem:[#allocation2 + $0x14] sm:$0xf] 0
        %2867 = vst [vmem:[#allocation2 + $0x18] sm:$0xf] 0
        %2868 = vst [vmem:[#allocation2 + $0x1c] sm:$0xf] 0
        %2869 = vst [vmem:[#allocation2 + $0x20] sm:$0xf] 0
        %2870 = vst [vmem:[#allocation2 + $0x24] sm:$0xf] 0
        %2871 = vst [vmem:[#allocation2 + $0x28] sm:$0xf] 0
        %2872 = vst [vmem:[#allocation2 + $0x2c] sm:$0xf] 0
        %2873 = vst [vmem:[#allocation2 + $0x30] sm:$0xf] 0
        %2874 = vst [vmem:[#allocation2 + $0x34] sm:$0xf] 0
        %2875 = vst [vmem:[#allocation2 + $0x38] sm:$0xf] 0
        %2876 = vst [vmem:[#allocation2 + $0x3c] sm:$0xf] 0
        %2877 = vst [vmem:[#allocation2 + $0x40] sm:$0xf] 0
        %2878 = vst [vmem:[#allocation2 + $0x44] sm:$0xf] 0
        %2879 = vst [vmem:[#allocation2 + $0x48] sm:$0xf] 0
        %2880 = vst [vmem:[#allocation2 + $0x4c] sm:$0xf] 0
        %2881 = vst [vmem:[#allocation2 + $0x50] sm:$0xf] 0
        %2882 = vst [vmem:[#allocation2 + $0x54] sm:$0xf] 0
        %2883 = vst [vmem:[#allocation2 + $0x58] sm:$0xf] 0
        %2884 = vst [vmem:[#allocation2 + $0x5c] sm:$0xf] 0
        %2885 = vst [vmem:[#allocation2 + $0x60] sm:$0xf] 0
        %2886 = vst [vmem:[#allocation2 + $0x64] sm:$0xf] 0
        %2887 = vst [vmem:[#allocation2 + $0x68] sm:$0xf] 0
        %2888 = vst [vmem:[#allocation2 + $0x6c] sm:$0xf] 0
        %2889 = vst [vmem:[#allocation2 + $0x70] sm:$0xf] 0
        %2890 = vst [vmem:[#allocation2 + $0x74] sm:$0xf] 0
        %2891 = vst [vmem:[#allocation2 + $0x78] sm:$0xf] 0
        %2892 = vst [vmem:[#allocation2 + $0x7c] sm:$0xf] 0
        %2893 = vst [vmem:[#allocation2 + $0x80] sm:$0xf] 0
        %2894 = vst [vmem:[#allocation2 + $0x84] sm:$0xf] 0
        %2895 = vst [vmem:[#allocation2 + $0x88] sm:$0xf] 0
        %2896 = vst [vmem:[#allocation2 + $0x8c] sm:$0xf] 0
        %2897 = vst [vmem:[#allocation2 + $0x90] sm:$0xf] 0
        %2898 = vst [vmem:[#allocation2 + $0x94] sm:$0xf] 0
        %2899 = vst [vmem:[#allocation2 + $0x98] sm:$0xf] 0
        %2900 = vst [vmem:[#allocation2 + $0x9c] sm:$0xf] 0
        %2901 = vst [vmem:[#allocation2 + $0xa0] sm:$0xf] 0
        %2902 = vst [vmem:[#allocation2 + $0xa4] sm:$0xf] 0
        %2903 = vst [vmem:[#allocation2 + $0xa8] sm:$0xf] 0
        %2904 = vst [vmem:[#allocation2 + $0xac] sm:$0xf] 0
        %2905 = vst [vmem:[#allocation2 + $0xb0] sm:$0xf] 0
        %2906 = vst [vmem:[#allocation2 + $0xb4] sm:$0xf] 0
        %2907 = vst [vmem:[#allocation2 + $0xb8] sm:$0xf] 0
        %2908 = vst [vmem:[#allocation2 + $0xbc] sm:$0xf] 0
        %2909 = vst [vmem:[#allocation2 + $0xc0] sm:$0xf] 0
        %2910 = vst [vmem:[#allocation2 + $0xc4] sm:$0xf] 0
        %2911 = vst [vmem:[#allocation2 + $0xc8] sm:$0xf] 0
        %2912 = vst [vmem:[#allocation2 + $0xcc] sm:$0xf] 0
        %2913 = vst [vmem:[#allocation2 + $0xd0] sm:$0xf] 0
        %2914 = vst [vmem:[#allocation2 + $0xd4] sm:$0xf] 0
        %v2931 = vunpack.c.l.b16 %v2845
        %v2932 = vunpack.c.h.b16 %v2845
        %v2933 = vunpack.c.l.b16 %v2846
        %v2934 = vunpack.c.h.b16 %v2846
        %v2935 = vunpack.c.l.b16 %v2847
        %v2936 = vunpack.c.h.b16 %v2847
        %v2937 = vunpack.c.l.b16 %v2848
        %v2938 = vunpack.c.h.b16 %v2848
        %v2939 = vunpack.c.l.b16 %v2849
        %v2940 = vunpack.c.h.b16 %v2849
        %v2941 = vunpack.c.l.b16 %v2850
        %v2942 = vunpack.c.h.b16 %v2850
        %v2943 = vunpack.c.l.b16 %v2851
        %v2944 = vunpack.c.h.b16 %v2851
        %v2945 = vunpack.c.l.b16 %v2852
        %v2946 = vunpack.c.h.b16 %v2852
        %v2947 = vunpack.c.l.b16 %v2853
        %v2948 = vunpack.c.h.b16 %v2853
        %v2949 = vunpack.c.l.b16 %v2854
        %v2950 = vunpack.c.h.b16 %v2854
        %v2951 = vunpack.c.l.b16 %v2855
        %v2952 = vunpack.c.h.b16 %v2855
        %v2953 = vunpack.c.l.b16 %v2856
        %v2954 = vunpack.c.h.b16 %v2856
        %v2955 = vunpack.c.l.b16 %v2857
        %v2956 = vunpack.c.h.b16 %v2857
        %v2957 = vunpack.c.l.b16 %v2858
        %v2958 = vunpack.c.h.b16 %v2858
        %v2959 = vunpack.c.l.b16 %v2859
        %v2960 = vunpack.c.h.b16 %v2859
        %v2961 = vunpack.c.l.b16 %v2860
        %v2962 = vunpack.c.h.b16 %v2860
        %v2963 = vpack.c.b16 %v2931, %v2931
        %v2964 = vpack.c.b16 %v2932, %v2932
        %v2965 = vpack.c.b16 %v2933, %v2933
        %v2966 = vpack.c.b16 %v2934, %v2934
        %v2967 = vpack.c.b16 %v2935, %v2935
        %v2968 = vpack.c.b16 %v2936, %v2936
        %v2969 = vpack.c.b16 %v2937, %v2937
        %v2970 = vpack.c.b16 %v2938, %v2938
        %v2971 = vpack.c.b16 %v2939, %v2939
        %v2972 = vpack.c.b16 %v2940, %v2940
        %v2973 = vpack.c.b16 %v2941, %v2941
        %v2974 = vpack.c.b16 %v2942, %v2942
        %v2975 = vpack.c.b16 %v2943, %v2943
        %v2976 = vpack.c.b16 %v2944, %v2944
        %v2977 = vpack.c.b16 %v2945, %v2945
        %v2978 = vpack.c.b16 %v2946, %v2946
        %v2979 = vpack.c.b16 %v2947, %v2947
        %v2980 = vpack.c.b16 %v2948, %v2948
        %v2981 = vpack.c.b16 %v2949, %v2949
        %v2982 = vpack.c.b16 %v2950, %v2950
        %v2983 = vpack.c.b16 %v2951, %v2951
        %v2984 = vpack.c.b16 %v2952, %v2952
        %v2985 = vpack.c.b16 %v2953, %v2953
        %v2986 = vpack.c.b16 %v2954, %v2954
        %v2987 = vpack.c.b16 %v2955, %v2955
        %v2988 = vpack.c.b16 %v2956, %v2956
        %v2989 = vpack.c.b16 %v2957, %v2957
        %v2990 = vpack.c.b16 %v2958, %v2958
        %v2991 = vpack.c.b16 %v2959, %v2959
        %v2992 = vpack.c.b16 %v2960, %v2960
        %v2993 = vpack.c.b16 %v2961, %v2961
        %v2994 = vpack.c.b16 %v2962, %v2962
        %vm2995 = vsmask.f32 256
        %vm2996 = vsmask.f32 4368
        %vm2997 = vmor %vm2995, %vm2996
        %v2999 = vshrl.u32 %v2963, 16
        %v3001 = vrot.slane %v2999, 7
        %v3002 = vshll.u32 %v2963, 16
        %v3004 = vor.u32 %v3001, %v3002
        %v3005 = vrot.slane %v3001, 4
        %v3007 = vshrl.u32 %v2964, 16
        %v3009 = vrot.slane %v3007, 7
        %v3010 = vshll.u32 %v2964, 16
        %v3012 = vor.u32 %v3009, %v3010
        %v3013 = vsel %vm2997, %v3005, %v3012
        %v3014 = vrot.slane %v3009, 4
        %v3016 = vshrl.u32 %v2965, 16
        %v3018 = vrot.slane %v3016, 7
        %v3019 = vshll.u32 %v2965, 16
        %v3021 = vor.u32 %v3018, %v3019
        %v3022 = vrot.slane %v3018, 4
        %v3024 = vshrl.u32 %v2966, 16
        %v3026 = vrot.slane %v3024, 7
        %v3027 = vshll.u32 %v2966, 16
        %v3029 = vor.u32 %v3026, %v3027
        %v3030 = vsel %vm2997, %v3022, %v3029
        %v3031 = vrot.slane %v3026, 4
        %v3033 = vshrl.u32 %v2967, 16
        %v3035 = vrot.slane %v3033, 7
        %v3036 = vshll.u32 %v2967, 16
        %v3038 = vor.u32 %v3035, %v3036
        %v3039 = vrot.slane %v3035, 4
        %v3041 = vshrl.u32 %v2968, 16
        %v3043 = vrot.slane %v3041, 7
        %v3044 = vshll.u32 %v2968, 16
        %v3046 = vor.u32 %v3043, %v3044
        %v3047 = vsel %vm2997, %v3039, %v3046
        %v3048 = vrot.slane %v3043, 4
        %v3050 = vshrl.u32 %v2969, 16
        %v3052 = vrot.slane %v3050, 7
        %v3053 = vshll.u32 %v2969, 16
        %v3055 = vor.u32 %v3052, %v3053
        %v3056 = vrot.slane %v3052, 4
        %v3058 = vshrl.u32 %v2970, 16
        %v3060 = vrot.slane %v3058, 7
        %v3061 = vshll.u32 %v2970, 16
        %v3063 = vor.u32 %v3060, %v3061
        %v3064 = vsel %vm2997, %v3056, %v3063
        %v3065 = vrot.slane %v3060, 4
        %v3067 = vshrl.u32 %v2971, 16
        %v3069 = vrot.slane %v3067, 7
        %v3070 = vshll.u32 %v2971, 16
        %v3072 = vor.u32 %v3069, %v3070
        %v3073 = vrot.slane %v3069, 4
        %v3075 = vshrl.u32 %v2972, 16
        %v3077 = vrot.slane %v3075, 7
        %v3078 = vshll.u32 %v2972, 16
        %v3080 = vor.u32 %v3077, %v3078
        %v3081 = vsel %vm2997, %v3073, %v3080
        %v3082 = vrot.slane %v3077, 4
        %v3084 = vshrl.u32 %v2973, 16
        %v3086 = vrot.slane %v3084, 7
        %v3087 = vshll.u32 %v2973, 16
        %v3089 = vor.u32 %v3086, %v3087
        %v3090 = vrot.slane %v3086, 4
        %v3092 = vshrl.u32 %v2974, 16
        %v3094 = vrot.slane %v3092, 7
        %v3095 = vshll.u32 %v2974, 16
        %v3097 = vor.u32 %v3094, %v3095
        %v3098 = vsel %vm2997, %v3090, %v3097
        %v3099 = vrot.slane %v3094, 4
        %v3101 = vshrl.u32 %v2975, 16
        %v3103 = vrot.slane %v3101, 7
        %v3104 = vshll.u32 %v2975, 16
        %v3106 = vor.u32 %v3103, %v3104
        %v3107 = vrot.slane %v3103, 4
        %v3109 = vshrl.u32 %v2976, 16
        %v3111 = vrot.slane %v3109, 7
        %v3112 = vshll.u32 %v2976, 16
        %v3114 = vor.u32 %v3111, %v3112
        %v3115 = vsel %vm2997, %v3107, %v3114
        %v3116 = vrot.slane %v3111, 4
        %v3118 = vshrl.u32 %v2977, 16
        %v3120 = vrot.slane %v3118, 7
        %v3121 = vshll.u32 %v2977, 16
        %v3123 = vor.u32 %v3120, %v3121
        %v3124 = vrot.slane %v3120, 4
        %v3126 = vshrl.u32 %v2978, 16
        %v3128 = vrot.slane %v3126, 7
        %v3129 = vshll.u32 %v2978, 16
        %v3131 = vor.u32 %v3128, %v3129
        %v3132 = vsel %vm2997, %v3124, %v3131
        %v3133 = vrot.slane %v3128, 4
        %v3135 = vshrl.u32 %v2979, 16
        %v3137 = vrot.slane %v3135, 7
        %v3138 = vshll.u32 %v2979, 16
        %v3140 = vor.u32 %v3137, %v3138
        %v3141 = vrot.slane %v3137, 4
        %v3143 = vshrl.u32 %v2980, 16
        %v3145 = vrot.slane %v3143, 7
        %v3146 = vshll.u32 %v2980, 16
        %v3148 = vor.u32 %v3145, %v3146
        %v3149 = vsel %vm2997, %v3141, %v3148
        %v3150 = vrot.slane %v3145, 4
        %v3152 = vshrl.u32 %v2981, 16
        %v3154 = vrot.slane %v3152, 7
        %v3155 = vshll.u32 %v2981, 16
        %v3157 = vor.u32 %v3154, %v3155
        %v3158 = vrot.slane %v3154, 4
        %v3160 = vshrl.u32 %v2982, 16
        %v3162 = vrot.slane %v3160, 7
        %v3163 = vshll.u32 %v2982, 16
        %v3165 = vor.u32 %v3162, %v3163
        %v3166 = vsel %vm2997, %v3158, %v3165
        %v3167 = vrot.slane %v3162, 4
        %v3169 = vshrl.u32 %v2983, 16
        %v3171 = vrot.slane %v3169, 7
        %v3172 = vshll.u32 %v2983, 16
        %v3174 = vor.u32 %v3171, %v3172
        %v3175 = vrot.slane %v3171, 4
        %v3177 = vshrl.u32 %v2984, 16
        %v3179 = vrot.slane %v3177, 7
        %v3180 = vshll.u32 %v2984, 16
        %v3182 = vor.u32 %v3179, %v3180
        %v3183 = vsel %vm2997, %v3175, %v3182
        %v3184 = vrot.slane %v3179, 4
        %v3186 = vshrl.u32 %v2985, 16
        %v3188 = vrot.slane %v3186, 7
        %v3189 = vshll.u32 %v2985, 16
        %v3191 = vor.u32 %v3188, %v3189
        %v3192 = vrot.slane %v3188, 4
        %v3194 = vshrl.u32 %v2986, 16
        %v3196 = vrot.slane %v3194, 7
        %v3197 = vshll.u32 %v2986, 16
        %v3199 = vor.u32 %v3196, %v3197
        %v3200 = vsel %vm2997, %v3192, %v3199
        %v3201 = vrot.slane %v3196, 4
        %v3203 = vshrl.u32 %v2987, 16
        %v3205 = vrot.slane %v3203, 7
        %v3206 = vshll.u32 %v2987, 16
        %v3208 = vor.u32 %v3205, %v3206
        %v3209 = vrot.slane %v3205, 4
        %v3211 = vshrl.u32 %v2988, 16
        %v3213 = vrot.slane %v3211, 7
        %v3214 = vshll.u32 %v2988, 16
        %v3216 = vor.u32 %v3213, %v3214
        %v3217 = vsel %vm2997, %v3209, %v3216
        %v3218 = vrot.slane %v3213, 4
        %v3220 = vshrl.u32 %v2989, 16
        %v3222 = vrot.slane %v3220, 7
        %v3223 = vshll.u32 %v2989, 16
        %v3225 = vor.u32 %v3222, %v3223
        %v3226 = vrot.slane %v3222, 4
        %v3228 = vshrl.u32 %v2990, 16
        %v3230 = vrot.slane %v3228, 7
        %v3231 = vshll.u32 %v2990, 16
        %v3233 = vor.u32 %v3230, %v3231
        %v3234 = vsel %vm2997, %v3226, %v3233
        %v3235 = vrot.slane %v3230, 4
        %v3237 = vshrl.u32 %v2991, 16
        %v3239 = vrot.slane %v3237, 7
        %v3240 = vshll.u32 %v2991, 16
        %v3242 = vor.u32 %v3239, %v3240
        %v3243 = vrot.slane %v3239, 4
        %v3245 = vshrl.u32 %v2992, 16
        %v3247 = vrot.slane %v3245, 7
        %v3248 = vshll.u32 %v2992, 16
        %v3250 = vor.u32 %v3247, %v3248
        %v3251 = vsel %vm2997, %v3243, %v3250
        %v3252 = vrot.slane %v3247, 4
        %v3254 = vshrl.u32 %v2993, 16
        %v3256 = vrot.slane %v3254, 7
        %v3257 = vshll.u32 %v2993, 16
        %v3259 = vor.u32 %v3256, %v3257
        %v3260 = vrot.slane %v3256, 4
        %v3262 = vshrl.u32 %v2994, 16
        %v3264 = vrot.slane %v3262, 7
        %v3265 = vshll.u32 %v2994, 16
        %v3267 = vor.u32 %v3264, %v3265
        %v3268 = vsel %vm2997, %v3260, %v3267
        %v3269 = vrot.slane %v3264, 4
        %s3318 = scalar_lea.vmem [#allocation2], 12
        %vm3319 = vcmask 1043456
        %vm3320 = vsmask.f32 7938
        %vm3321 = vmand %vm3319, %vm3320
        %v3322 = vld [vmem:[%s3318] sm:$0xf]
        %v3323 = vsel %vm3321, %v3004, %v3322
        %3324 = vst [vmem:[%s3318] sm:$0xf] %v3323
        %3325 = vst [vmem:[%s3318 + $0x4] sm:$0xf] %v3013
        %vm3326 = vcmask 1040384
        %vm3327 = vmand %vm3326, %vm2995
        %v3328 = vld [vmem:[%s3318 + $0x8] sm:$0x1]
        %v3329 = vsel %vm3327, %v3014, %v3328
        %3330 = vst [vmem:[%s3318 + $0x8] sm:$0x1] %v3329
        %v3331 = vld [vmem:[%s3318 + $0xc] sm:$0xf]
        %v3332 = vsel %vm3321, %v3021, %v3331
        %3333 = vst [vmem:[%s3318 + $0xc] sm:$0xf] %v3332
        %3334 = vst [vmem:[%s3318 + $0x10] sm:$0xf] %v3030
        %v3335 = vld [vmem:[%s3318 + $0x14] sm:$0x1]
        %v3336 = vsel %vm3327, %v3031, %v3335
        %3337 = vst [vmem:[%s3318 + $0x14] sm:$0x1] %v3336
        %v3338 = vld [vmem:[%s3318 + $0x18] sm:$0xf]
        %v3339 = vsel %vm3321, %v3038, %v3338
        %3340 = vst [vmem:[%s3318 + $0x18] sm:$0xf] %v3339
        %3341 = vst [vmem:[%s3318 + $0x1c] sm:$0xf] %v3047
        %v3342 = vld [vmem:[%s3318 + $0x20] sm:$0x1]
        %v3343 = vsel %vm3327, %v3048, %v3342
        %3344 = vst [vmem:[%s3318 + $0x20] sm:$0x1] %v3343
        %v3345 = vld [vmem:[%s3318 + $0x24] sm:$0xf]
        %v3346 = vsel %vm3321, %v3055, %v3345
        %3347 = vst [vmem:[%s3318 + $0x24] sm:$0xf] %v3346
        %3348 = vst [vmem:[%s3318 + $0x28] sm:$0xf] %v3064
        %v3349 = vld [vmem:[%s3318 + $0x2c] sm:$0x1]
        %v3350 = vsel %vm3327, %v3065, %v3349
        %3351 = vst [vmem:[%s3318 + $0x2c] sm:$0x1] %v3350
        %v3352 = vld [vmem:[%s3318 + $0x30] sm:$0xf]
        %v3353 = vsel %vm3321, %v3072, %v3352
        %3354 = vst [vmem:[%s3318 + $0x30] sm:$0xf] %v3353
        %3355 = vst [vmem:[%s3318 + $0x34] sm:$0xf] %v3081
        %v3356 = vld [vmem:[%s3318 + $0x38] sm:$0x1]
        %v3357 = vsel %vm3327, %v3082, %v3356
        %3358 = vst [vmem:[%s3318 + $0x38] sm:$0x1] %v3357
        %v3359 = vld [vmem:[%s3318 + $0x3c] sm:$0xf]
        %v3360 = vsel %vm3321, %v3089, %v3359
        %3361 = vst [vmem:[%s3318 + $0x3c] sm:$0xf] %v3360
        %3362 = vst [vmem:[%s3318 + $0x40] sm:$0xf] %v3098
        %v3363 = vld [vmem:[%s3318 + $0x44] sm:$0x1]
        %v3364 = vsel %vm3327, %v3099, %v3363
        %3365 = vst [vmem:[%s3318 + $0x44] sm:$0x1] %v3364
        %v3366 = vld [vmem:[%s3318 + $0x48] sm:$0xf]
        %v3367 = vsel %vm3321, %v3106, %v3366
        %3368 = vst [vmem:[%s3318 + $0x48] sm:$0xf] %v3367
        %3369 = vst [vmem:[%s3318 + $0x4c] sm:$0xf] %v3115
        %v3370 = vld [vmem:[%s3318 + $0x50] sm:$0x1]
        %v3371 = vsel %vm3327, %v3116, %v3370
        %3372 = vst [vmem:[%s3318 + $0x50] sm:$0x1] %v3371
        %v3373 = vld [vmem:[%s3318 + $0x54] sm:$0xf]
        %v3374 = vsel %vm3321, %v3123, %v3373
        %3375 = vst [vmem:[%s3318 + $0x54] sm:$0xf] %v3374
        %3376 = vst [vmem:[%s3318 + $0x58] sm:$0xf] %v3132
        %v3377 = vld [vmem:[%s3318 + $0x5c] sm:$0x1]
        %v3378 = vsel %vm3327, %v3133, %v3377
        %3379 = vst [vmem:[%s3318 + $0x5c] sm:$0x1] %v3378
        %v3380 = vld [vmem:[%s3318 + $0x60] sm:$0xf]
        %v3381 = vsel %vm3321, %v3140, %v3380
        %3382 = vst [vmem:[%s3318 + $0x60] sm:$0xf] %v3381
        %3383 = vst [vmem:[%s3318 + $0x64] sm:$0xf] %v3149
        %v3384 = vld [vmem:[%s3318 + $0x68] sm:$0x1]
        %v3385 = vsel %vm3327, %v3150, %v3384
        %3386 = vst [vmem:[%s3318 + $0x68] sm:$0x1] %v3385
        %v3387 = vld [vmem:[%s3318 + $0x6c] sm:$0xf]
        %v3388 = vsel %vm3321, %v3157, %v3387
        %3389 = vst [vmem:[%s3318 + $0x6c] sm:$0xf] %v3388
        %3390 = vst [vmem:[%s3318 + $0x70] sm:$0xf] %v3166
        %v3391 = vld [vmem:[%s3318 + $0x74] sm:$0x1]
        %v3392 = vsel %vm3327, %v3167, %v3391
        %3393 = vst [vmem:[%s3318 + $0x74] sm:$0x1] %v3392
        %v3394 = vld [vmem:[%s3318 + $0x78] sm:$0xf]
        %v3395 = vsel %vm3321, %v3174, %v3394
        %3396 = vst [vmem:[%s3318 + $0x78] sm:$0xf] %v3395
        %3397 = vst [vmem:[%s3318 + $0x7c] sm:$0xf] %v3183
        %v3398 = vld [vmem:[%s3318 + $0x80] sm:$0x1]
        %v3399 = vsel %vm3327, %v3184, %v3398
        %3400 = vst [vmem:[%s3318 + $0x80] sm:$0x1] %v3399
        %v3401 = vld [vmem:[%s3318 + $0x84] sm:$0xf]
        %v3402 = vsel %vm3321, %v3191, %v3401
        %3403 = vst [vmem:[%s3318 + $0x84] sm:$0xf] %v3402
        %3404 = vst [vmem:[%s3318 + $0x88] sm:$0xf] %v3200
        %v3405 = vld [vmem:[%s3318 + $0x8c] sm:$0x1]
        %v3406 = vsel %vm3327, %v3201, %v3405
        %3407 = vst [vmem:[%s3318 + $0x8c] sm:$0x1] %v3406
        %v3408 = vld [vmem:[%s3318 + $0x90] sm:$0xf]
        %v3409 = vsel %vm3321, %v3208, %v3408
        %3410 = vst [vmem:[%s3318 + $0x90] sm:$0xf] %v3409
        %3411 = vst [vmem:[%s3318 + $0x94] sm:$0xf] %v3217
        %v3412 = vld [vmem:[%s3318 + $0x98] sm:$0x1]
        %v3413 = vsel %vm3327, %v3218, %v3412
        %3414 = vst [vmem:[%s3318 + $0x98] sm:$0x1] %v3413
        %v3415 = vld [vmem:[%s3318 + $0x9c] sm:$0xf]
        %v3416 = vsel %vm3321, %v3225, %v3415
        %3417 = vst [vmem:[%s3318 + $0x9c] sm:$0xf] %v3416
        %3418 = vst [vmem:[%s3318 + $0xa0] sm:$0xf] %v3234
        %v3419 = vld [vmem:[%s3318 + $0xa4] sm:$0x1]
        %v3420 = vsel %vm3327, %v3235, %v3419
        %3421 = vst [vmem:[%s3318 + $0xa4] sm:$0x1] %v3420
        %v3422 = vld [vmem:[%s3318 + $0xa8] sm:$0xf]
        %v3423 = vsel %vm3321, %v3242, %v3422
        %3424 = vst [vmem:[%s3318 + $0xa8] sm:$0xf] %v3423
        %3425 = vst [vmem:[%s3318 + $0xac] sm:$0xf] %v3251
        %v3426 = vld [vmem:[%s3318 + $0xb0] sm:$0x1]
        %v3427 = vsel %vm3327, %v3252, %v3426
        %3428 = vst [vmem:[%s3318 + $0xb0] sm:$0x1] %v3427
        %v3429 = vld [vmem:[%s3318 + $0xb4] sm:$0xf]
        %v3430 = vsel %vm3321, %v3259, %v3429
        %3431 = vst [vmem:[%s3318 + $0xb4] sm:$0xf] %v3430
        %3432 = vst [vmem:[%s3318 + $0xb8] sm:$0xf] %v3268
        %v3433 = vld [vmem:[%s3318 + $0xbc] sm:$0x1]
        %v3434 = vsel %vm3327, %v3269, %v3433
        %3435 = vst [vmem:[%s3318 + $0xbc] sm:$0x1] %v3434
        %v3436 = vld [vmem:[#allocation2] sm:$0xf]
        %v3437 = vld [vmem:[#allocation2 + $0x4] sm:$0xf]
        %v3438 = vld [vmem:[#allocation2 + $0x8] sm:$0xf]
        %v3439 = vld [vmem:[#allocation2 + $0xc] sm:$0xf]
        %v3440 = vld [vmem:[#allocation2 + $0x10] sm:$0xf]
        %v3441 = vld [vmem:[#allocation2 + $0x14] sm:$0xf]
        %v3442 = vld [vmem:[#allocation2 + $0x18] sm:$0xf]
        %v3443 = vld [vmem:[#allocation2 + $0x1c] sm:$0xf]
        %v3444 = vld [vmem:[#allocation2 + $0x20] sm:$0xf]
        %v3445 = vld [vmem:[#allocation2 + $0x24] sm:$0xf]
        %v3446 = vld [vmem:[#allocation2 + $0x28] sm:$0xf]
        %v3447 = vld [vmem:[#allocation2 + $0x2c] sm:$0xf]
        %v3448 = vld [vmem:[#allocation2 + $0x30] sm:$0xf]
        %v3449 = vld [vmem:[#allocation2 + $0x34] sm:$0xf]
        %v3450 = vld [vmem:[#allocation2 + $0x38] sm:$0xf]
        %v3451 = vld [vmem:[#allocation2 + $0x3c] sm:$0xf]
        %v3452 = vld [vmem:[#allocation2 + $0x40] sm:$0xf]
        %v3453 = vld [vmem:[#allocation2 + $0x44] sm:$0xf]
        %v3454 = vld [vmem:[#allocation2 + $0x48] sm:$0xf]
        %v3455 = vld [vmem:[#allocation2 + $0x4c] sm:$0xf]
        %v3456 = vld [vmem:[#allocation2 + $0x50] sm:$0xf]
        %v3457 = vld [vmem:[#allocation2 + $0x54] sm:$0xf]
        %v3458 = vld [vmem:[#allocation2 + $0x58] sm:$0xf]
        %v3459 = vld [vmem:[#allocation2 + $0x5c] sm:$0xf]
        %v3460 = vld [vmem:[#allocation2 + $0x60] sm:$0xf]
        %v3461 = vld [vmem:[#allocation2 + $0x64] sm:$0xf]
        %v3462 = vld [vmem:[#allocation2 + $0x68] sm:$0xf]
        %v3463 = vld [vmem:[#allocation2 + $0x6c] sm:$0xf]
        %v3464 = vld [vmem:[#allocation2 + $0x70] sm:$0xf]
        %v3465 = vld [vmem:[#allocation2 + $0x74] sm:$0xf]
        %v3466 = vld [vmem:[#allocation2 + $0x78] sm:$0xf]
        %v3467 = vld [vmem:[#allocation2 + $0x7c] sm:$0xf]
        %v3468 = vld [vmem:[#allocation2 + $0x80] sm:$0xf]
        %v3469 = vld [vmem:[#allocation2 + $0x84] sm:$0xf]
        %v3470 = vld [vmem:[#allocation2 + $0x88] sm:$0xf]
        %v3471 = vld [vmem:[#allocation2 + $0x8c] sm:$0xf]
        %v3472 = vld [vmem:[#allocation2 + $0x90] sm:$0xf]
        %v3473 = vld [vmem:[#allocation2 + $0x94] sm:$0xf]
        %v3474 = vld [vmem:[#allocation2 + $0x98] sm:$0xf]
        %v3475 = vld [vmem:[#allocation2 + $0x9c] sm:$0xf]
        %v3476 = vld [vmem:[#allocation2 + $0xa0] sm:$0xf]
        %v3477 = vld [vmem:[#allocation2 + $0xa4] sm:$0xf]
        %v3478 = vld [vmem:[#allocation2 + $0xa8] sm:$0xf]
        %v3479 = vld [vmem:[#allocation2 + $0xac] sm:$0xf]
        %v3480 = vld [vmem:[#allocation2 + $0xb0] sm:$0xf]
        %v3481 = vld [vmem:[#allocation2 + $0xb4] sm:$0xf]
        %v3482 = vld [vmem:[#allocation2 + $0xb8] sm:$0xf]
        %v3483 = vld [vmem:[#allocation2 + $0xbc] sm:$0xf]
        %v3484 = vld [vmem:[%s3318] sm:$0xf]
        %v3485 = vld [vmem:[%s3318 + $0x4] sm:$0xf]
        %v3486 = vld [vmem:[%s3318 + $0x8] sm:$0xf]
        %v3487 = vld [vmem:[%s3318 + $0xc] sm:$0xf]
        %v3488 = vld [vmem:[%s3318 + $0x10] sm:$0xf]
        %v3489 = vld [vmem:[%s3318 + $0x14] sm:$0xf]
        %v3490 = vld [vmem:[%s3318 + $0x18] sm:$0xf]
        %v3491 = vld [vmem:[%s3318 + $0x1c] sm:$0xf]
        %v3492 = vld [vmem:[%s3318 + $0x20] sm:$0xf]
        %v3493 = vld [vmem:[%s3318 + $0x24] sm:$0xf]
        %v3494 = vld [vmem:[%s3318 + $0x28] sm:$0xf]
        %v3495 = vld [vmem:[%s3318 + $0x2c] sm:$0xf]
        %v3496 = vld [vmem:[%s3318 + $0x30] sm:$0xf]
        %v3497 = vld [vmem:[%s3318 + $0x34] sm:$0xf]
        %v3498 = vld [vmem:[%s3318 + $0x38] sm:$0xf]
        %v3499 = vld [vmem:[%s3318 + $0x3c] sm:$0xf]
        %v3500 = vld [vmem:[%s3318 + $0x40] sm:$0xf]
        %v3501 = vld [vmem:[%s3318 + $0x44] sm:$0xf]
        %v3502 = vld [vmem:[%s3318 + $0x48] sm:$0xf]
        %v3503 = vld [vmem:[%s3318 + $0x4c] sm:$0xf]
        %v3504 = vld [vmem:[%s3318 + $0x50] sm:$0xf]
        %v3505 = vld [vmem:[%s3318 + $0x54] sm:$0xf]
        %v3506 = vld [vmem:[%s3318 + $0x58] sm:$0xf]
        %v3507 = vld [vmem:[%s3318 + $0x5c] sm:$0xf]
        %v3508 = vld [vmem:[%s3318 + $0x60] sm:$0xf]
        %v3509 = vld [vmem:[%s3318 + $0x64] sm:$0xf]
        %v3510 = vld [vmem:[%s3318 + $0x68] sm:$0xf]
        %v3511 = vld [vmem:[%s3318 + $0x6c] sm:$0xf]
        %v3512 = vld [vmem:[%s3318 + $0x70] sm:$0xf]
        %v3513 = vld [vmem:[%s3318 + $0x74] sm:$0xf]
        %v3514 = vld [vmem:[%s3318 + $0x78] sm:$0xf]
        %v3515 = vld [vmem:[%s3318 + $0x7c] sm:$0xf]
        %v3516 = vld [vmem:[%s3318 + $0x80] sm:$0xf]
        %v3517 = vld [vmem:[%s3318 + $0x84] sm:$0xf]
        %v3518 = vld [vmem:[%s3318 + $0x88] sm:$0xf]
        %v3519 = vld [vmem:[%s3318 + $0x8c] sm:$0xf]
        %v3520 = vld [vmem:[%s3318 + $0x90] sm:$0xf]
        %v3521 = vld [vmem:[%s3318 + $0x94] sm:$0xf]
        %v3522 = vld [vmem:[%s3318 + $0x98] sm:$0xf]
        %v3523 = vld [vmem:[%s3318 + $0x9c] sm:$0xf]
        %v3524 = vld [vmem:[%s3318 + $0xa0] sm:$0xf]
        %v3525 = vld [vmem:[%s3318 + $0xa4] sm:$0xf]
        %v3526 = vld [vmem:[%s3318 + $0xa8] sm:$0xf]
        %v3527 = vld [vmem:[%s3318 + $0xac] sm:$0xf]
        %v3528 = vld [vmem:[%s3318 + $0xb0] sm:$0xf]
        %v3529 = vld [vmem:[%s3318 + $0xb4] sm:$0xf]
        %v3530 = vld [vmem:[%s3318 + $0xb8] sm:$0xf]
        %v3531 = vld [vmem:[%s3318 + $0xbc] sm:$0xf]
        %s3532 = scalar_lea.vmem [#allocation2], 24
        %v3533 = vld [vmem:[%s3532] sm:$0xf]
        %v3534 = vld [vmem:[%s3532 + $0x4] sm:$0xf]
        %v3535 = vld [vmem:[%s3532 + $0x8] sm:$0xf]
        %v3536 = vld [vmem:[%s3532 + $0xc] sm:$0xf]
        %v3537 = vld [vmem:[%s3532 + $0x10] sm:$0xf]
        %v3538 = vld [vmem:[%s3532 + $0x14] sm:$0xf]
        %v3539 = vld [vmem:[%s3532 + $0x18] sm:$0xf]
        %v3540 = vld [vmem:[%s3532 + $0x1c] sm:$0xf]
        %v3541 = vld [vmem:[%s3532 + $0x20] sm:$0xf]
        %v3542 = vld [vmem:[%s3532 + $0x24] sm:$0xf]
        %v3543 = vld [vmem:[%s3532 + $0x28] sm:$0xf]
        %v3544 = vld [vmem:[%s3532 + $0x2c] sm:$0xf]
        %v3545 = vld [vmem:[%s3532 + $0x30] sm:$0xf]
        %v3546 = vld [vmem:[%s3532 + $0x34] sm:$0xf]
        %v3547 = vld [vmem:[%s3532 + $0x38] sm:$0xf]
        %v3548 = vld [vmem:[%s3532 + $0x3c] sm:$0xf]
        %v3549 = vld [vmem:[%s3532 + $0x40] sm:$0xf]
        %v3550 = vld [vmem:[%s3532 + $0x44] sm:$0xf]
        %v3551 = vld [vmem:[%s3532 + $0x48] sm:$0xf]
        %v3552 = vld [vmem:[%s3532 + $0x4c] sm:$0xf]
        %v3553 = vld [vmem:[%s3532 + $0x50] sm:$0xf]
        %v3554 = vld [vmem:[%s3532 + $0x54] sm:$0xf]
        %v3555 = vld [vmem:[%s3532 + $0x58] sm:$0xf]
        %v3556 = vld [vmem:[%s3532 + $0x5c] sm:$0xf]
        %v3557 = vld [vmem:[%s3532 + $0x60] sm:$0xf]
        %v3558 = vld [vmem:[%s3532 + $0x64] sm:$0xf]
        %v3559 = vld [vmem:[%s3532 + $0x68] sm:$0xf]
        %v3560 = vld [vmem:[%s3532 + $0x6c] sm:$0xf]
        %v3561 = vld [vmem:[%s3532 + $0x70] sm:$0xf]
        %v3562 = vld [vmem:[%s3532 + $0x74] sm:$0xf]
        %v3563 = vld [vmem:[%s3532 + $0x78] sm:$0xf]
        %v3564 = vld [vmem:[%s3532 + $0x7c] sm:$0xf]
        %v3565 = vld [vmem:[%s3532 + $0x80] sm:$0xf]
        %v3566 = vld [vmem:[%s3532 + $0x84] sm:$0xf]
        %v3567 = vld [vmem:[%s3532 + $0x88] sm:$0xf]
        %v3568 = vld [vmem:[%s3532 + $0x8c] sm:$0xf]
        %v3569 = vld [vmem:[%s3532 + $0x90] sm:$0xf]
        %v3570 = vld [vmem:[%s3532 + $0x94] sm:$0xf]
        %v3571 = vld [vmem:[%s3532 + $0x98] sm:$0xf]
        %v3572 = vld [vmem:[%s3532 + $0x9c] sm:$0xf]
        %v3573 = vld [vmem:[%s3532 + $0xa0] sm:$0xf]
        %v3574 = vld [vmem:[%s3532 + $0xa4] sm:$0xf]
        %v3575 = vld [vmem:[%s3532 + $0xa8] sm:$0xf]
        %v3576 = vld [vmem:[%s3532 + $0xac] sm:$0xf]
        %v3577 = vld [vmem:[%s3532 + $0xb0] sm:$0xf]
        %v3578 = vld [vmem:[%s3532 + $0xb4] sm:$0xf]
        %v3579 = vld [vmem:[%s3532 + $0xb8] sm:$0xf]
        %v3580 = vld [vmem:[%s3532 + $0xbc] sm:$0xf]
        %v3629 = vunpack.c.l.b16 %v3436
        %v3630 = vunpack.c.l.b16 %v3437
        %v3631 = vunpack.c.l.b16 %v3438
        %v3632 = vunpack.c.l.b16 %v3439
        %v3633 = vunpack.c.l.b16 %v3440
        %v3634 = vunpack.c.l.b16 %v3441
        %v3635 = vunpack.c.l.b16 %v3442
        %v3636 = vunpack.c.l.b16 %v3443
        %v3637 = vunpack.c.l.b16 %v3444
        %v3638 = vunpack.c.l.b16 %v3445
        %v3639 = vunpack.c.l.b16 %v3446
        %v3640 = vunpack.c.l.b16 %v3447
        %v3641 = vunpack.c.l.b16 %v3448
        %v3642 = vunpack.c.l.b16 %v3449
        %v3643 = vunpack.c.l.b16 %v3450
        %v3644 = vunpack.c.l.b16 %v3451
        %v3645 = vunpack.c.l.b16 %v3452
        %v3646 = vunpack.c.l.b16 %v3453
        %v3647 = vunpack.c.l.b16 %v3454
        %v3648 = vunpack.c.l.b16 %v3455
        %v3649 = vunpack.c.l.b16 %v3456
        %v3650 = vunpack.c.l.b16 %v3457
        %v3651 = vunpack.c.l.b16 %v3458
        %v3652 = vunpack.c.l.b16 %v3459
        %v3653 = vunpack.c.l.b16 %v3460
        %v3654 = vunpack.c.l.b16 %v3461
        %v3655 = vunpack.c.l.b16 %v3462
        %v3656 = vunpack.c.l.b16 %v3463
        %v3657 = vunpack.c.l.b16 %v3464
        %v3658 = vunpack.c.l.b16 %v3465
        %v3659 = vunpack.c.l.b16 %v3466
        %v3660 = vunpack.c.l.b16 %v3467
        %v3661 = vunpack.c.l.b16 %v3468
        %v3662 = vunpack.c.l.b16 %v3469
        %v3663 = vunpack.c.l.b16 %v3470
        %v3664 = vunpack.c.l.b16 %v3471
        %v3665 = vunpack.c.l.b16 %v3472
        %v3666 = vunpack.c.l.b16 %v3473
        %v3667 = vunpack.c.l.b16 %v3474
        %v3668 = vunpack.c.l.b16 %v3475
        %v3669 = vunpack.c.l.b16 %v3476
        %v3670 = vunpack.c.l.b16 %v3477
        %v3671 = vunpack.c.l.b16 %v3478
        %v3672 = vunpack.c.l.b16 %v3479
        %v3673 = vunpack.c.l.b16 %v3480
        %v3674 = vunpack.c.l.b16 %v3481
        %v3675 = vunpack.c.l.b16 %v3482
        %v3676 = vunpack.c.l.b16 %v3483
        %v3677 = vpack.c.b16 %v3630, %v3629
        %v3678 = vpack.c.b16 %v3632, %v3631
        %v3679 = vpack.c.b16 %v3634, %v3633
        %v3680 = vpack.c.b16 %v3636, %v3635
        %v3681 = vpack.c.b16 %v3638, %v3637
        %v3682 = vpack.c.b16 %v3640, %v3639
        %v3683 = vpack.c.b16 %v3642, %v3641
        %v3684 = vpack.c.b16 %v3644, %v3643
        %v3685 = vpack.c.b16 %v3646, %v3645
        %v3686 = vpack.c.b16 %v3648, %v3647
        %v3687 = vpack.c.b16 %v3650, %v3649
        %v3688 = vpack.c.b16 %v3652, %v3651
        %v3689 = vpack.c.b16 %v3654, %v3653
        %v3690 = vpack.c.b16 %v3656, %v3655
        %v3691 = vpack.c.b16 %v3658, %v3657
        %v3692 = vpack.c.b16 %v3660, %v3659
        %v3693 = vpack.c.b16 %v3662, %v3661
        %v3694 = vpack.c.b16 %v3664, %v3663
        %v3695 = vpack.c.b16 %v3666, %v3665
        %v3696 = vpack.c.b16 %v3668, %v3667
        %v3697 = vpack.c.b16 %v3670, %v3669
        %v3698 = vpack.c.b16 %v3672, %v3671
        %v3699 = vpack.c.b16 %v3674, %v3673
        %v3700 = vpack.c.b16 %v3676, %v3675
        %v3773 = vunpack.c.l.b16 %v3484
        %v3774 = vunpack.c.l.b16 %v3485
        %v3775 = vunpack.c.l.b16 %v3486
        %v3776 = vunpack.c.l.b16 %v3487
        %v3777 = vunpack.c.l.b16 %v3488
        %v3778 = vunpack.c.l.b16 %v3489
        %v3779 = vunpack.c.l.b16 %v3490
        %v3780 = vunpack.c.l.b16 %v3491
        %v3781 = vunpack.c.l.b16 %v3492
        %v3782 = vunpack.c.l.b16 %v3493
        %v3783 = vunpack.c.l.b16 %v3494
        %v3784 = vunpack.c.l.b16 %v3495
        %v3785 = vunpack.c.l.b16 %v3496
        %v3786 = vunpack.c.l.b16 %v3497
        %v3787 = vunpack.c.l.b16 %v3498
        %v3788 = vunpack.c.l.b16 %v3499
        %v3789 = vunpack.c.l.b16 %v3500
        %v3790 = vunpack.c.l.b16 %v3501
        %v3791 = vunpack.c.l.b16 %v3502
        %v3792 = vunpack.c.l.b16 %v3503
        %v3793 = vunpack.c.l.b16 %v3504
        %v3794 = vunpack.c.l.b16 %v3505
        %v3795 = vunpack.c.l.b16 %v3506
        %v3796 = vunpack.c.l.b16 %v3507
        %v3797 = vunpack.c.l.b16 %v3508
        %v3798 = vunpack.c.l.b16 %v3509
        %v3799 = vunpack.c.l.b16 %v3510
        %v3800 = vunpack.c.l.b16 %v3511
        %v3801 = vunpack.c.l.b16 %v3512
        %v3802 = vunpack.c.l.b16 %v3513
        %v3803 = vunpack.c.l.b16 %v3514
        %v3804 = vunpack.c.l.b16 %v3515
        %v3805 = vunpack.c.l.b16 %v3516
        %v3806 = vunpack.c.l.b16 %v3517
        %v3807 = vunpack.c.l.b16 %v3518
        %v3808 = vunpack.c.l.b16 %v3519
        %v3809 = vunpack.c.l.b16 %v3520
        %v3810 = vunpack.c.l.b16 %v3521
        %v3811 = vunpack.c.l.b16 %v3522
        %v3812 = vunpack.c.l.b16 %v3523
        %v3813 = vunpack.c.l.b16 %v3524
        %v3814 = vunpack.c.l.b16 %v3525
        %v3815 = vunpack.c.l.b16 %v3526
        %v3816 = vunpack.c.l.b16 %v3527
        %v3817 = vunpack.c.l.b16 %v3528
        %v3818 = vunpack.c.l.b16 %v3529
        %v3819 = vunpack.c.l.b16 %v3530
        %v3820 = vunpack.c.l.b16 %v3531
        %v3821 = vpack.c.b16 %v3774, %v3773
        %v3822 = vpack.c.b16 %v3776, %v3775
        %v3823 = vpack.c.b16 %v3778, %v3777
        %v3824 = vpack.c.b16 %v3780, %v3779
        %v3825 = vpack.c.b16 %v3782, %v3781
        %v3826 = vpack.c.b16 %v3784, %v3783
        %v3827 = vpack.c.b16 %v3786, %v3785
        %v3828 = vpack.c.b16 %v3788, %v3787
        %v3829 = vpack.c.b16 %v3790, %v3789
        %v3830 = vpack.c.b16 %v3792, %v3791
        %v3831 = vpack.c.b16 %v3794, %v3793
        %v3832 = vpack.c.b16 %v3796, %v3795
        %v3833 = vpack.c.b16 %v3798, %v3797
        %v3834 = vpack.c.b16 %v3800, %v3799
        %v3835 = vpack.c.b16 %v3802, %v3801
        %v3836 = vpack.c.b16 %v3804, %v3803
        %v3837 = vpack.c.b16 %v3806, %v3805
        %v3838 = vpack.c.b16 %v3808, %v3807
        %v3839 = vpack.c.b16 %v3810, %v3809
        %v3840 = vpack.c.b16 %v3812, %v3811
        %v3841 = vpack.c.b16 %v3814, %v3813
        %v3842 = vpack.c.b16 %v3816, %v3815
        %v3843 = vpack.c.b16 %v3818, %v3817
        %v3844 = vpack.c.b16 %v3820, %v3819
        %v3917 = vunpack.c.l.b16 %v3533
        %v3918 = vunpack.c.l.b16 %v3534
        %v3919 = vunpack.c.l.b16 %v3535
        %v3920 = vunpack.c.l.b16 %v3536
        %v3921 = vunpack.c.l.b16 %v3537
        %v3922 = vunpack.c.l.b16 %v3538
        %v3923 = vunpack.c.l.b16 %v3539
        %v3924 = vunpack.c.l.b16 %v3540
        %v3925 = vunpack.c.l.b16 %v3541
        %v3926 = vunpack.c.l.b16 %v3542
        %v3927 = vunpack.c.l.b16 %v3543
        %v3928 = vunpack.c.l.b16 %v3544
        %v3929 = vunpack.c.l.b16 %v3545
        %v3930 = vunpack.c.l.b16 %v3546
        %v3931 = vunpack.c.l.b16 %v3547
        %v3932 = vunpack.c.l.b16 %v3548
        %v3933 = vunpack.c.l.b16 %v3549
        %v3934 = vunpack.c.l.b16 %v3550
        %v3935 = vunpack.c.l.b16 %v3551
        %v3936 = vunpack.c.l.b16 %v3552
        %v3937 = vunpack.c.l.b16 %v3553
        %v3938 = vunpack.c.l.b16 %v3554
        %v3939 = vunpack.c.l.b16 %v3555
        %v3940 = vunpack.c.l.b16 %v3556
        %v3941 = vunpack.c.l.b16 %v3557
        %v3942 = vunpack.c.l.b16 %v3558
        %v3943 = vunpack.c.l.b16 %v3559
        %v3944 = vunpack.c.l.b16 %v3560
        %v3945 = vunpack.c.l.b16 %v3561
        %v3946 = vunpack.c.l.b16 %v3562
        %v3947 = vunpack.c.l.b16 %v3563
        %v3948 = vunpack.c.l.b16 %v3564
        %v3949 = vunpack.c.l.b16 %v3565
        %v3950 = vunpack.c.l.b16 %v3566
        %v3951 = vunpack.c.l.b16 %v3567
        %v3952 = vunpack.c.l.b16 %v3568
        %v3953 = vunpack.c.l.b16 %v3569
        %v3954 = vunpack.c.l.b16 %v3570
        %v3955 = vunpack.c.l.b16 %v3571
        %v3956 = vunpack.c.l.b16 %v3572
        %v3957 = vunpack.c.l.b16 %v3573
        %v3958 = vunpack.c.l.b16 %v3574
        %v3959 = vunpack.c.l.b16 %v3575
        %v3960 = vunpack.c.l.b16 %v3576
        %v3961 = vunpack.c.l.b16 %v3577
        %v3962 = vunpack.c.l.b16 %v3578
        %v3963 = vunpack.c.l.b16 %v3579
        %v3964 = vunpack.c.l.b16 %v3580
        %v3965 = vpack.c.b16 %v3918, %v3917
        %v3966 = vpack.c.b16 %v3920, %v3919
        %v3967 = vpack.c.b16 %v3922, %v3921
        %v3968 = vpack.c.b16 %v3924, %v3923
        %v3969 = vpack.c.b16 %v3926, %v3925
        %v3970 = vpack.c.b16 %v3928, %v3927
        %v3971 = vpack.c.b16 %v3930, %v3929
        %v3972 = vpack.c.b16 %v3932, %v3931
        %v3973 = vpack.c.b16 %v3934, %v3933
        %v3974 = vpack.c.b16 %v3936, %v3935
        %v3975 = vpack.c.b16 %v3938, %v3937
        %v3976 = vpack.c.b16 %v3940, %v3939
        %v3977 = vpack.c.b16 %v3942, %v3941
        %v3978 = vpack.c.b16 %v3944, %v3943
        %v3979 = vpack.c.b16 %v3946, %v3945
        %v3980 = vpack.c.b16 %v3948, %v3947
        %v3981 = vpack.c.b16 %v3950, %v3949
        %v3982 = vpack.c.b16 %v3952, %v3951
        %v3983 = vpack.c.b16 %v3954, %v3953
        %v3984 = vpack.c.b16 %v3956, %v3955
        %v3985 = vpack.c.b16 %v3958, %v3957
        %v3986 = vpack.c.b16 %v3960, %v3959
        %v3987 = vpack.c.b16 %v3962, %v3961
        %v3988 = vpack.c.b16 %v3964, %v3963
        %v4013 = vld [vmem:[#allocation8] sm:$0xff]
        %v4014 = vld [vmem:[#allocation8 + $0x8] sm:$0xf]
        %v4015 = vld [vmem:[#allocation8 + $0xc] sm:$0xff]
        %v4016 = vld [vmem:[#allocation8 + $0x14] sm:$0xf]
        %v4017 = vld [vmem:[#allocation8 + $0x18] sm:$0xff]
        %v4018 = vld [vmem:[#allocation8 + $0x20] sm:$0xf]
        %v4019 = vld [vmem:[#allocation8 + $0x24] sm:$0xff]
        %v4020 = vld [vmem:[#allocation8 + $0x2c] sm:$0xf]
        %v4021 = vld [vmem:[#allocation8 + $0x30] sm:$0xff]
        %v4022 = vld [vmem:[#allocation8 + $0x38] sm:$0xf]
        %v4023 = vld [vmem:[#allocation8 + $0x3c] sm:$0xff]
        %v4024 = vld [vmem:[#allocation8 + $0x44] sm:$0xf]
        %v4025 = vld [vmem:[#allocation8 + $0x48] sm:$0xff]
        %v4026 = vld [vmem:[#allocation8 + $0x50] sm:$0xf]
        %v4027 = vld [vmem:[#allocation8 + $0x54] sm:$0xff]
        %v4028 = vld [vmem:[#allocation8 + $0x5c] sm:$0xf]
        %v4029 = vld [vmem:[#allocation8 + $0x60] sm:$0xff]
        %v4030 = vld [vmem:[#allocation8 + $0x68] sm:$0xf]
        %v4031 = vld [vmem:[#allocation8 + $0x6c] sm:$0xff]
        %v4032 = vld [vmem:[#allocation8 + $0x74] sm:$0xf]
        %v4033 = vld [vmem:[#allocation8 + $0x78] sm:$0xff]
        %v4034 = vld [vmem:[#allocation8 + $0x80] sm:$0xf]
        %v4035 = vld [vmem:[#allocation8 + $0x84] sm:$0xff]
        %v4036 = vld [vmem:[#allocation8 + $0x8c] sm:$0xf]
        %v4037 = vld [vmem:[#allocation8 + $0x90] sm:$0xff]
        %v4038 = vld [vmem:[#allocation8 + $0x98] sm:$0xf]
        %v4039 = vld [vmem:[#allocation8 + $0x9c] sm:$0xff]
        %v4040 = vld [vmem:[#allocation8 + $0xa4] sm:$0xf]
        %v4041 = vld [vmem:[#allocation8 + $0xa8] sm:$0xff]
        %v4042 = vld [vmem:[#allocation8 + $0xb0] sm:$0xf]
        %v4043 = vld [vmem:[#allocation8 + $0xb4] sm:$0xff]
        %v4044 = vld [vmem:[#allocation8 + $0xbc] sm:$0xf]
        %v4045 = vld [vmem:[#allocation8 + $0xc0] sm:$0xff]
        %v4046 = vld [vmem:[#allocation8 + $0xc8] sm:$0xf]
        %v4047 = vld [vmem:[#allocation8 + $0xcc] sm:$0xff]
        %v4048 = vld [vmem:[#allocation8 + $0xd4] sm:$0xf]
        %v4049 = vld [vmem:[#allocation8 + $0xd8] sm:$0xff]
        %v4050 = vld [vmem:[#allocation8 + $0xe0] sm:$0xf]
        %v4051 = vld [vmem:[#allocation8 + $0xe4] sm:$0xff]
        %v4052 = vld [vmem:[#allocation8 + $0xec] sm:$0xf]
        %v4053 = vld [vmem:[#allocation8 + $0xf0] sm:$0xff]
        %v4054 = vld [vmem:[#allocation8 + $0xf8] sm:$0xf]
        %v4055 = vld [vmem:[#allocation8 + $0xfc] sm:$0xff]
        %v4056 = vld [vmem:[#allocation8 + $0x104] sm:$0xf]
        %v4057 = vld [vmem:[#allocation8 + $0x108] sm:$0xff]
        %v4058 = vld [vmem:[#allocation8 + $0x110] sm:$0xf]
        %v4059 = vld [vmem:[#allocation8 + $0x114] sm:$0xff]
        %v4060 = vld [vmem:[#allocation8 + $0x11c] sm:$0xf]
        %v4061 = vld [vmem:[#allocation8 + $0x120] sm:$0xff]
        %v4062 = vld [vmem:[#allocation8 + $0x128] sm:$0xf]
        %v4063 = vld [vmem:[#allocation8 + $0x12c] sm:$0xff]
        %v4064 = vld [vmem:[#allocation8 + $0x134] sm:$0xf]
        %v4065 = vld [vmem:[#allocation8 + $0x138] sm:$0xff]
        %v4066 = vld [vmem:[#allocation8 + $0x140] sm:$0xf]
        %v4067 = vld [vmem:[#allocation8 + $0x144] sm:$0xff]
        %v4068 = vld [vmem:[#allocation8 + $0x14c] sm:$0xf]
        %v4069 = vld [vmem:[#allocation8 + $0x150] sm:$0xff]
        %v4070 = vld [vmem:[#allocation8 + $0x158] sm:$0xf]
        %v4071 = vld [vmem:[#allocation8 + $0x15c] sm:$0xff]
        %v4072 = vld [vmem:[#allocation8 + $0x164] sm:$0xf]
        %v4073 = vld [vmem:[#allocation8 + $0x168] sm:$0xff]
        %v4074 = vld [vmem:[#allocation8 + $0x170] sm:$0xf]
        %v4075 = vld [vmem:[#allocation8 + $0x174] sm:$0xff]
        %v4076 = vld [vmem:[#allocation8 + $0x17c] sm:$0xf]
        %v4077 = vld [vmem:[#allocation8 + $0x180] sm:$0xff]
        %v4078 = vld [vmem:[#allocation8 + $0x188] sm:$0xf]
        %v4079 = vld [vmem:[#allocation8 + $0x18c] sm:$0xff]
        %v4080 = vld [vmem:[#allocation8 + $0x194] sm:$0xf]
        %v4081 = vld [vmem:[#allocation8 + $0x198] sm:$0xff]
        %v4082 = vld [vmem:[#allocation8 + $0x1a0] sm:$0xf]
        %v4083 = vld [vmem:[#allocation8 + $0x1a4] sm:$0xff]
        %v4084 = vld [vmem:[#allocation8 + $0x1ac] sm:$0xf]
        %v4085 = vld [vmem:[#allocation8 + $0x1b0] sm:$0xff]
        %v4086 = vld [vmem:[#allocation8 + $0x1b8] sm:$0xf]
        %v4087 = vld [vmem:[#allocation8 + $0x1bc] sm:$0xff]
        %v4088 = vld [vmem:[#allocation8 + $0x1c4] sm:$0xf]
        %v4089 = vld [vmem:[#allocation8 + $0x1c8] sm:$0xff]
        %v4090 = vld [vmem:[#allocation8 + $0x1d0] sm:$0xf]
        %v4091 = vld [vmem:[#allocation8 + $0x1d4] sm:$0xff]
        %v4092 = vld [vmem:[#allocation8 + $0x1dc] sm:$0xf]
        %v4093 = vld [vmem:[#allocation8 + $0x1e0] sm:$0xff]
        %v4094 = vld [vmem:[#allocation8 + $0x1e8] sm:$0xf]
        %v4095 = vld [vmem:[#allocation8 + $0x1ec] sm:$0xff]
        %v4096 = vld [vmem:[#allocation8 + $0x1f4] sm:$0xf]
        %v4097 = vld [vmem:[#allocation8 + $0x1f8] sm:$0xff]
        %v4098 = vld [vmem:[#allocation8 + $0x200] sm:$0xf]
        %v4099 = vld [vmem:[#allocation8 + $0x204] sm:$0xff]
        %v4100 = vld [vmem:[#allocation8 + $0x20c] sm:$0xf]
        %v4101 = vld [vmem:[#allocation8 + $0x210] sm:$0xff]
        %v4102 = vld [vmem:[#allocation8 + $0x218] sm:$0xf]
        %v4103 = vld [vmem:[#allocation8 + $0x21c] sm:$0xff]
        %v4104 = vld [vmem:[#allocation8 + $0x224] sm:$0xf]
        %v4105 = vld [vmem:[#allocation8 + $0x228] sm:$0xff]
        %v4106 = vld [vmem:[#allocation8 + $0x230] sm:$0xf]
        %v4107 = vld [vmem:[#allocation8 + $0x234] sm:$0xff]
        %v4108 = vld [vmem:[#allocation8 + $0x23c] sm:$0xf]
        %v4205 = vunpack.c.l.b16 %v4013
        %v4206 = vunpack.c.h.b16 %v4013
        %v4207 = vunpack.c.l.b16 %v4014
        %v4208 = vunpack.c.l.b16 %v4015
        %v4209 = vunpack.c.h.b16 %v4015
        %v4210 = vunpack.c.l.b16 %v4016
        %v4211 = vunpack.c.l.b16 %v4017
        %v4212 = vunpack.c.h.b16 %v4017
        %v4213 = vunpack.c.l.b16 %v4018
        %v4214 = vunpack.c.l.b16 %v4019
        %v4215 = vunpack.c.h.b16 %v4019
        %v4216 = vunpack.c.l.b16 %v4020
        %v4217 = vunpack.c.l.b16 %v4021
        %v4218 = vunpack.c.h.b16 %v4021
        %v4219 = vunpack.c.l.b16 %v4022
        %v4220 = vunpack.c.l.b16 %v4023
        %v4221 = vunpack.c.h.b16 %v4023
        %v4222 = vunpack.c.l.b16 %v4024
        %v4223 = vunpack.c.l.b16 %v4025
        %v4224 = vunpack.c.h.b16 %v4025
        %v4225 = vunpack.c.l.b16 %v4026
        %v4226 = vunpack.c.l.b16 %v4027
        %v4227 = vunpack.c.h.b16 %v4027
        %v4228 = vunpack.c.l.b16 %v4028
        %v4229 = vunpack.c.l.b16 %v4029
        %v4230 = vunpack.c.h.b16 %v4029
        %v4231 = vunpack.c.l.b16 %v4030
        %v4232 = vunpack.c.l.b16 %v4031
        %v4233 = vunpack.c.h.b16 %v4031
        %v4234 = vunpack.c.l.b16 %v4032
        %v4235 = vunpack.c.l.b16 %v4033
        %v4236 = vunpack.c.h.b16 %v4033
        %v4237 = vunpack.c.l.b16 %v4034
        %v4238 = vunpack.c.l.b16 %v4035
        %v4239 = vunpack.c.h.b16 %v4035
        %v4240 = vunpack.c.l.b16 %v4036
        %v4241 = vunpack.c.l.b16 %v4037
        %v4242 = vunpack.c.h.b16 %v4037
        %v4243 = vunpack.c.l.b16 %v4038
        %v4244 = vunpack.c.l.b16 %v4039
        %v4245 = vunpack.c.h.b16 %v4039
        %v4246 = vunpack.c.l.b16 %v4040
        %v4247 = vunpack.c.l.b16 %v4041
        %v4248 = vunpack.c.h.b16 %v4041
        %v4249 = vunpack.c.l.b16 %v4042
        %v4250 = vunpack.c.l.b16 %v4043
        %v4251 = vunpack.c.h.b16 %v4043
        %v4252 = vunpack.c.l.b16 %v4044
        %v4253 = vunpack.c.l.b16 %v4045
        %v4254 = vunpack.c.h.b16 %v4045
        %v4255 = vunpack.c.l.b16 %v4046
        %v4256 = vunpack.c.l.b16 %v4047
        %v4257 = vunpack.c.h.b16 %v4047
        %v4258 = vunpack.c.l.b16 %v4048
        %v4259 = vunpack.c.l.b16 %v4049
        %v4260 = vunpack.c.h.b16 %v4049
        %v4261 = vunpack.c.l.b16 %v4050
        %v4262 = vunpack.c.l.b16 %v4051
        %v4263 = vunpack.c.h.b16 %v4051
        %v4264 = vunpack.c.l.b16 %v4052
        %v4265 = vunpack.c.l.b16 %v4053
        %v4266 = vunpack.c.h.b16 %v4053
        %v4267 = vunpack.c.l.b16 %v4054
        %v4268 = vunpack.c.l.b16 %v4055
        %v4269 = vunpack.c.h.b16 %v4055
        %v4270 = vunpack.c.l.b16 %v4056
        %v4271 = vunpack.c.l.b16 %v4057
        %v4272 = vunpack.c.h.b16 %v4057
        %v4273 = vunpack.c.l.b16 %v4058
        %v4274 = vunpack.c.l.b16 %v4059
        %v4275 = vunpack.c.h.b16 %v4059
        %v4276 = vunpack.c.l.b16 %v4060
        %v4277 = vunpack.c.l.b16 %v4061
        %v4278 = vunpack.c.h.b16 %v4061
        %v4279 = vunpack.c.l.b16 %v4062
        %v4280 = vunpack.c.l.b16 %v4063
        %v4281 = vunpack.c.h.b16 %v4063
        %v4282 = vunpack.c.l.b16 %v4064
        %v4283 = vunpack.c.l.b16 %v4065
        %v4284 = vunpack.c.h.b16 %v4065
        %v4285 = vunpack.c.l.b16 %v4066
        %v4286 = vunpack.c.l.b16 %v4067
        %v4287 = vunpack.c.h.b16 %v4067
        %v4288 = vunpack.c.l.b16 %v4068
        %v4289 = vunpack.c.l.b16 %v4069
        %v4290 = vunpack.c.h.b16 %v4069
        %v4291 = vunpack.c.l.b16 %v4070
        %v4292 = vunpack.c.l.b16 %v4071
        %v4293 = vunpack.c.h.b16 %v4071
        %v4294 = vunpack.c.l.b16 %v4072
        %v4295 = vunpack.c.l.b16 %v4073
        %v4296 = vunpack.c.h.b16 %v4073
        %v4297 = vunpack.c.l.b16 %v4074
        %v4298 = vunpack.c.l.b16 %v4075
        %v4299 = vunpack.c.h.b16 %v4075
        %v4300 = vunpack.c.l.b16 %v4076
        %v4301 = vunpack.c.l.b16 %v4077
        %v4302 = vunpack.c.h.b16 %v4077
        %v4303 = vunpack.c.l.b16 %v4078
        %v4304 = vunpack.c.l.b16 %v4079
        %v4305 = vunpack.c.h.b16 %v4079
        %v4306 = vunpack.c.l.b16 %v4080
        %v4307 = vunpack.c.l.b16 %v4081
        %v4308 = vunpack.c.h.b16 %v4081
        %v4309 = vunpack.c.l.b16 %v4082
        %v4310 = vunpack.c.l.b16 %v4083
        %v4311 = vunpack.c.h.b16 %v4083
        %v4312 = vunpack.c.l.b16 %v4084
        %v4313 = vunpack.c.l.b16 %v4085
        %v4314 = vunpack.c.h.b16 %v4085
        %v4315 = vunpack.c.l.b16 %v4086
        %v4316 = vunpack.c.l.b16 %v4087
        %v4317 = vunpack.c.h.b16 %v4087
        %v4318 = vunpack.c.l.b16 %v4088
        %v4319 = vunpack.c.l.b16 %v4089
        %v4320 = vunpack.c.h.b16 %v4089
        %v4321 = vunpack.c.l.b16 %v4090
        %v4322 = vunpack.c.l.b16 %v4091
        %v4323 = vunpack.c.h.b16 %v4091
        %v4324 = vunpack.c.l.b16 %v4092
        %v4325 = vunpack.c.l.b16 %v4093
        %v4326 = vunpack.c.h.b16 %v4093
        %v4327 = vunpack.c.l.b16 %v4094
        %v4328 = vunpack.c.l.b16 %v4095
        %v4329 = vunpack.c.h.b16 %v4095
        %v4330 = vunpack.c.l.b16 %v4096
        %v4331 = vunpack.c.l.b16 %v4097
        %v4332 = vunpack.c.h.b16 %v4097
        %v4333 = vunpack.c.l.b16 %v4098
        %v4334 = vunpack.c.l.b16 %v4099
        %v4335 = vunpack.c.h.b16 %v4099
        %v4336 = vunpack.c.l.b16 %v4100
        %v4337 = vunpack.c.l.b16 %v4101
        %v4338 = vunpack.c.h.b16 %v4101
        %v4339 = vunpack.c.l.b16 %v4102
        %v4340 = vunpack.c.l.b16 %v4103
        %v4341 = vunpack.c.h.b16 %v4103
        %v4342 = vunpack.c.l.b16 %v4104
        %v4343 = vunpack.c.l.b16 %v4105
        %v4344 = vunpack.c.h.b16 %v4105
        %v4345 = vunpack.c.l.b16 %v4106
        %v4346 = vunpack.c.l.b16 %v4107
        %v4347 = vunpack.c.h.b16 %v4107
        %v4348 = vunpack.c.l.b16 %v4108
        %v4349 = vpack.c.b16 %v4208, %v4205
        %v4350 = vpack.c.b16 %v4209, %v4206
        %v4351 = vpack.c.b16 %v4210, %v4207
        %v4352 = vpack.c.b16 %v4214, %v4211
        %v4353 = vpack.c.b16 %v4215, %v4212
        %v4354 = vpack.c.b16 %v4216, %v4213
        %v4355 = vpack.c.b16 %v4220, %v4217
        %v4356 = vpack.c.b16 %v4221, %v4218
        %v4357 = vpack.c.b16 %v4222, %v4219
        %v4358 = vpack.c.b16 %v4226, %v4223
        %v4359 = vpack.c.b16 %v4227, %v4224
        %v4360 = vpack.c.b16 %v4228, %v4225
        %v4361 = vpack.c.b16 %v4232, %v4229
        %v4362 = vpack.c.b16 %v4233, %v4230
        %v4363 = vpack.c.b16 %v4234, %v4231
        %v4364 = vpack.c.b16 %v4238, %v4235
        %v4365 = vpack.c.b16 %v4239, %v4236
        %v4366 = vpack.c.b16 %v4240, %v4237
        %v4367 = vpack.c.b16 %v4244, %v4241
        %v4368 = vpack.c.b16 %v4245, %v4242
        %v4369 = vpack.c.b16 %v4246, %v4243
        %v4370 = vpack.c.b16 %v4250, %v4247
        %v4371 = vpack.c.b16 %v4251, %v4248
        %v4372 = vpack.c.b16 %v4252, %v4249
        %v4373 = vpack.c.b16 %v4256, %v4253
        %v4374 = vpack.c.b16 %v4257, %v4254
        %v4375 = vpack.c.b16 %v4258, %v4255
        %v4376 = vpack.c.b16 %v4262, %v4259
        %v4377 = vpack.c.b16 %v4263, %v4260
        %v4378 = vpack.c.b16 %v4264, %v4261
        %v4379 = vpack.c.b16 %v4268, %v4265
        %v4380 = vpack.c.b16 %v4269, %v4266
        %v4381 = vpack.c.b16 %v4270, %v4267
        %v4382 = vpack.c.b16 %v4274, %v4271
        %v4383 = vpack.c.b16 %v4275, %v4272
        %v4384 = vpack.c.b16 %v4276, %v4273
        %v4385 = vpack.c.b16 %v4280, %v4277
        %v4386 = vpack.c.b16 %v4281, %v4278
        %v4387 = vpack.c.b16 %v4282, %v4279
        %v4388 = vpack.c.b16 %v4286, %v4283
        %v4389 = vpack.c.b16 %v4287, %v4284
        %v4390 = vpack.c.b16 %v4288, %v4285
        %v4391 = vpack.c.b16 %v4292, %v4289
        %v4392 = vpack.c.b16 %v4293, %v4290
        %v4393 = vpack.c.b16 %v4294, %v4291
        %v4394 = vpack.c.b16 %v4298, %v4295
        %v4395 = vpack.c.b16 %v4299, %v4296
        %v4396 = vpack.c.b16 %v4300, %v4297
        %v4397 = vpack.c.b16 %v4304, %v4301
        %v4398 = vpack.c.b16 %v4305, %v4302
        %v4399 = vpack.c.b16 %v4306, %v4303
        %v4400 = vpack.c.b16 %v4310, %v4307
        %v4401 = vpack.c.b16 %v4311, %v4308
        %v4402 = vpack.c.b16 %v4312, %v4309
        %v4403 = vpack.c.b16 %v4316, %v4313
        %v4404 = vpack.c.b16 %v4317, %v4314
        %v4405 = vpack.c.b16 %v4318, %v4315
        %v4406 = vpack.c.b16 %v4322, %v4319
        %v4407 = vpack.c.b16 %v4323, %v4320
        %v4408 = vpack.c.b16 %v4324, %v4321
        %v4409 = vpack.c.b16 %v4328, %v4325
        %v4410 = vpack.c.b16 %v4329, %v4326
        %v4411 = vpack.c.b16 %v4330, %v4327
        %v4412 = vpack.c.b16 %v4334, %v4331
        %v4413 = vpack.c.b16 %v4335, %v4332
        %v4414 = vpack.c.b16 %v4336, %v4333
        %v4415 = vpack.c.b16 %v4340, %v4337
        %v4416 = vpack.c.b16 %v4341, %v4338
        %v4417 = vpack.c.b16 %v4342, %v4339
        %v4418 = vpack.c.b16 %v4346, %v4343
        %v4419 = vpack.c.b16 %v4347, %v4344
        %v4420 = vpack.c.b16 %v4348, %v4345
        %4493 = vmatprep.subr.bf16.mxu0 %v4350
        %4494 = vmatpush1.bf16.msra.mxu0 %v4349
        %4495 = vmatprep.subr.bf16.mxu0 %v4353
        %4496 = vmatpush1.bf16.msra.mxu0 %v4352
        %4497 = vmatprep.subr.bf16.mxu0 %v4356
        %4498 = vmatpush1.bf16.msra.mxu0 %v4355
        %4499 = vmatprep.subr.bf16.mxu0 %v4359
        %4500 = vmatpush1.bf16.msra.mxu0 %v4358
        %4501 = vmatprep.subr.bf16.mxu0 %v4362
        %4502 = vmatpush1.bf16.msra.mxu0 %v4361
        %4503 = vmatprep.subr.bf16.mxu0 %v4365
        %4504 = vmatpush1.bf16.msra.mxu0 %v4364
        %4505 = vmatprep.subr.bf16.mxu0 %v4368
        %4506 = vmatpush1.bf16.msra.mxu0 %v4367
        %4507 = vmatprep.subr.bf16.mxu0 %v4371
        %4508 = vmatpush1.bf16.msra.mxu0 %v4370
        %4509 = vmatprep.subr.bf16.mxu0 %v4374
        %4510 = vmatpush1.bf16.msra.mxu0 %v4373
        %4511 = vmatprep.subr.bf16.mxu0 %v4377
        %4512 = vmatpush1.bf16.msra.mxu0 %v4376
        %4513 = vmatprep.subr.bf16.mxu0 %v4380
        %4514 = vmatpush1.bf16.msra.mxu0 %v4379
        %4515 = vmatprep.subr.bf16.mxu0 %v4383
        %4516 = vmatpush1.bf16.msra.mxu0 %v4382
        %4517 = vmatprep.subr.bf16.mxu0 %v4386
        %4518 = vmatpush1.bf16.msra.mxu0 %v4385
        %4519 = vmatprep.subr.bf16.mxu0 %v4389
        %4520 = vmatpush1.bf16.msra.mxu0 %v4388
        %4521 = vmatprep.subr.bf16.mxu0 %v4392
        %4522 = vmatpush1.bf16.msra.mxu0 %v4391
        %4523 = vmatprep.subr.bf16.mxu0 %v4395
        %4524 = vmatpush1.bf16.msra.mxu0 %v4394
        %4525 = vmatprep.mubr.bf16.mxu0 %v3821
        %4526 = vmatmul.mubr.bf16.gmra.mrb[0].mxu0 %v3677
        %v4527 = vpop.f32.mrb[0].mxu0
        %v4528 = vadd.f32 0.0, %v4527
        %v4529 = vpop.f32.mrb[0].mxu0
        %v4530 = vadd.f32 0.0, %v4529
        %v4531 = vpop.f32.mrb[0].mxu0
        %v4532 = vadd.f32 0.0, %v4531
        %v4533 = vpop.f32.mrb[0].mxu0
        %v4534 = vadd.f32 0.0, %v4533
        %4535 = vmatprep.mubr.bf16.mxu0 %v3822
        %4536 = vmatmul.mubr.bf16.gmra.mrb[0].mxu0 %v3678
        %v4537 = vpop.f32.mrb[0].mxu0
        %v4538 = vpop.f32.mrb[0].mxu0
        %v4539 = vadd.f32 0.0, %v4538
        %v4540 = vpop.f32.mrb[0].mxu0
        %v4541 = vadd.f32 0.0, %v4540
        %v4542 = vpop.f32.mrb[0].mxu0
        %v4543 = vadd.f32 0.0, %v4542
        %4544 = vmatprep.mubr.bf16.mxu0 %v3823
        %4545 = vmatmul.mubr.bf16.gmra.mrb[0].mxu0 %v3679
        %v4546 = vpop.f32.mrb[0].mxu0
        %v4547 = vadd.f32 0.0, %v4546
        %v4548 = vpop.f32.mrb[0].mxu0
        %v4549 = vadd.f32 0.0, %v4548
        %v4550 = vpop.f32.mrb[0].mxu0
        %v4551 = vpop.f32.mrb[0].mxu0
        %v4552 = vadd.f32 0.0, %v4551
        %4553 = vmatprep.mubr.bf16.mxu0 %v3824
        %4554 = vmatmul.mubr.bf16.gmra.mrb[0].mxu0 %v3680
        %v4555 = vpop.f32.mrb[0].mxu0
        %v4556 = vadd.f32 0.0, %v4555
        %v4557 = vpop.f32.mrb[0].mxu0
        %v4558 = vadd.f32 0.0, %v4557
        %v4559 = vpop.f32.mrb[0].mxu0
        %v4560 = vadd.f32 0.0, %v4559
        %v4561 = vpop.f32.mrb[0].mxu0
        %v4562 = vadd.f32 0.0, %v4561
        %4563 = vmatprep.mubr.bf16.mxu0 %v3825
        %4564 = vmatmul.mubr.bf16.gmra.mrb[0].mxu0 %v3681
        %v4565 = vpop.f32.mrb[0].mxu0
        %v4566 = vpop.f32.mrb[0].mxu0
        %v4567 = vadd.f32 0.0, %v4566
        %v4568 = vpop.f32.mrb[0].mxu0
        %v4569 = vadd.f32 0.0, %v4568
        %v4570 = vpop.f32.mrb[0].mxu0
        %v4571 = vadd.f32 0.0, %v4570
        %4572 = vmatprep.mubr.bf16.mxu0 %v3826
        %4573 = vmatmul.mubr.bf16.gmra.mrb[0].mxu0 %v3682
        %v4574 = vpop.f32.mrb[0].mxu0
        %v4575 = vadd.f32 0.0, %v4574
        %v4576 = vpop.f32.mrb[0].mxu0
        %v4577 = vadd.f32 0.0, %v4576
        %v4578 = vpop.f32.mrb[0].mxu0
        %v4579 = vpop.f32.mrb[0].mxu0
        %v4580 = vadd.f32 0.0, %v4579
        %4581 = vmatprep.mubr.bf16.mxu0 %v3827
        %4582 = vmatmul.mubr.bf16.gmra.mrb[0].mxu0 %v3683
        %v4583 = vpop.f32.mrb[0].mxu0
        %v4584 = vadd.f32 0.0, %v4583
        %v4585 = vpop.f32.mrb[0].mxu0
        %v4586 = vadd.f32 0.0, %v4585
        %v4587 = vpop.f32.mrb[0].mxu0
        %v4588 = vadd.f32 0.0, %v4587
        %v4589 = vpop.f32.mrb[0].mxu0
        %v4590 = vadd.f32 0.0, %v4589
        %4591 = vmatprep.mubr.bf16.mxu0 %v3828
        %4592 = vmatmul.mubr.bf16.gmra.mrb[0].mxu0 %v3684
        %v4593 = vpop.f32.mrb[0].mxu0
        %v4594 = vpop.f32.mrb[0].mxu0
        %v4595 = vadd.f32 0.0, %v4594
        %v4596 = vpop.f32.mrb[0].mxu0
        %v4597 = vadd.f32 0.0, %v4596
        %v4598 = vpop.f32.mrb[0].mxu0
        %v4599 = vadd.f32 0.0, %v4598
        %4600 = vmatprep.mubr.bf16.mxu0 %v3829
        %4601 = vmatmul.mubr.bf16.gmra.mrb[0].mxu0 %v3685
        %v4602 = vpop.f32.mrb[0].mxu0
        %v4603 = vadd.f32 0.0, %v4602
        %v4604 = vpop.f32.mrb[0].mxu0
        %v4605 = vadd.f32 0.0, %v4604
        %v4606 = vpop.f32.mrb[0].mxu0
        %v4607 = vpop.f32.mrb[0].mxu0
        %v4608 = vadd.f32 0.0, %v4607
        %4609 = vmatprep.mubr.bf16.mxu0 %v3830
        %4610 = vmatmul.mubr.bf16.gmra.mrb[0].mxu0 %v3686
        %v4611 = vpop.f32.mrb[0].mxu0
        %v4612 = vadd.f32 0.0, %v4611
        %v4613 = vpop.f32.mrb[0].mxu0
        %v4614 = vadd.f32 0.0, %v4613
        %v4615 = vpop.f32.mrb[0].mxu0
        %v4616 = vadd.f32 0.0, %v4615
        %v4617 = vpop.f32.mrb[0].mxu0
        %v4618 = vadd.f32 0.0, %v4617
        %4619 = vmatprep.mubr.bf16.mxu0 %v3831
        %4620 = vmatmul.mubr.bf16.gmra.mrb[0].mxu0 %v3687
        %v4621 = vpop.f32.mrb[0].mxu0
        %v4622 = vpop.f32.mrb[0].mxu0
        %v4623 = vadd.f32 0.0, %v4622
        %v4624 = vpop.f32.mrb[0].mxu0
        %v4625 = vadd.f32 0.0, %v4624
        %v4626 = vpop.f32.mrb[0].mxu0
        %v4627 = vadd.f32 0.0, %v4626
        %4628 = vmatprep.mubr.bf16.mxu0 %v3832
        %4629 = vmatmul.mubr.bf16.gmra.mrb[0].mxu0 %v3688
        %v4630 = vpop.f32.mrb[0].mxu0
        %v4631 = vadd.f32 0.0, %v4630
        %v4632 = vpop.f32.mrb[0].mxu0
        %v4633 = vadd.f32 0.0, %v4632
        %v4634 = vpop.f32.mrb[0].mxu0
        %v4635 = vpop.f32.mrb[0].mxu0
        %v4636 = vadd.f32 0.0, %v4635
        %4637 = vmatprep.mubr.bf16.mxu0 %v3833
        %4638 = vmatmul.mubr.bf16.gmra.mrb[0].mxu0 %v3689
        %v4639 = vpop.f32.mrb[0].mxu0
        %v4640 = vadd.f32 0.0, %v4639
        %v4641 = vpop.f32.mrb[0].mxu0
        %v4642 = vadd.f32 0.0, %v4641
        %v4643 = vpop.f32.mrb[0].mxu0
        %v4644 = vadd.f32 0.0, %v4643
        %v4645 = vpop.f32.mrb[0].mxu0
        %v4646 = vadd.f32 0.0, %v4645
        %4647 = vmatprep.mubr.bf16.mxu0 %v3834
        %4648 = vmatmul.mubr.bf16.gmra.mrb[0].mxu0 %v3690
        %v4649 = vpop.f32.mrb[0].mxu0
        %v4650 = vpop.f32.mrb[0].mxu0
        %v4651 = vadd.f32 0.0, %v4650
        %v4652 = vpop.f32.mrb[0].mxu0
        %v4653 = vadd.f32 0.0, %v4652
        %v4654 = vpop.f32.mrb[0].mxu0
        %v4655 = vadd.f32 0.0, %v4654
        %4656 = vmatprep.mubr.bf16.mxu0 %v3835
        %4657 = vmatmul.mubr.bf16.gmra.mrb[0].mxu0 %v3691
        %v4658 = vpop.f32.mrb[0].mxu0
        %v4659 = vadd.f32 0.0, %v4658
        %v4660 = vpop.f32.mrb[0].mxu0
        %v4661 = vadd.f32 0.0, %v4660
        %v4662 = vpop.f32.mrb[0].mxu0
        %v4663 = vpop.f32.mrb[0].mxu0
        %v4664 = vadd.f32 0.0, %v4663
        %4665 = vmatprep.mubr.bf16.mxu0 %v3836
        %4666 = vmatmul.mubr.bf16.gmra.mrb[0].mxu0 %v3692
        %v4667 = vpop.f32.mrb[0].mxu0
        %v4668 = vadd.f32 0.0, %v4667
        %v4669 = vpop.f32.mrb[0].mxu0
        %v4670 = vadd.f32 0.0, %v4669
        %v4671 = vpop.f32.mrb[0].mxu0
        %v4672 = vadd.f32 0.0, %v4671
        %v4673 = vpop.f32.mrb[0].mxu0
        %v4674 = vadd.f32 0.0, %v4673
        %4675 = vmatprep.mubr.bf16.mxu0 %v3837
        %4676 = vmatmul.mubr.bf16.gmra.mrb[0].mxu0 %v3693
        %v4677 = vpop.f32.mrb[0].mxu0
        %v4678 = vpop.f32.mrb[0].mxu0
        %v4679 = vadd.f32 0.0, %v4678
        %v4680 = vpop.f32.mrb[0].mxu0
        %v4681 = vadd.f32 0.0, %v4680
        %v4682 = vpop.f32.mrb[0].mxu0
        %v4683 = vadd.f32 0.0, %v4682
        %4684 = vmatprep.mubr.bf16.mxu0 %v3838
        %4685 = vmatmul.mubr.bf16.gmra.mrb[0].mxu0 %v3694
        %v4686 = vpop.f32.mrb[0].mxu0
        %v4687 = vadd.f32 0.0, %v4686
        %v4688 = vpop.f32.mrb[0].mxu0
        %v4689 = vadd.f32 0.0, %v4688
        %v4690 = vpop.f32.mrb[0].mxu0
        %v4691 = vpop.f32.mrb[0].mxu0
        %v4692 = vadd.f32 0.0, %v4691
        %4693 = vmatprep.mubr.bf16.mxu0 %v3839
        %4694 = vmatmul.mubr.bf16.gmra.mrb[0].mxu0 %v3695
        %v4695 = vpop.f32.mrb[0].mxu0
        %v4696 = vadd.f32 0.0, %v4695
        %v4697 = vpop.f32.mrb[0].mxu0
        %v4698 = vadd.f32 0.0, %v4697
        %v4699 = vpop.f32.mrb[0].mxu0
        %v4700 = vadd.f32 0.0, %v4699
        %v4701 = vpop.f32.mrb[0].mxu0
        %v4702 = vadd.f32 0.0, %v4701
        %4703 = vmatprep.mubr.bf16.mxu0 %v3840
        %4704 = vmatmul.mubr.bf16.gmra.mrb[0].mxu0 %v3696
        %v4705 = vpop.f32.mrb[0].mxu0
        %v4706 = vpop.f32.mrb[0].mxu0
        %v4707 = vadd.f32 0.0, %v4706
        %v4708 = vpop.f32.mrb[0].mxu0
        %v4709 = vadd.f32 0.0, %v4708
        %v4710 = vpop.f32.mrb[0].mxu0
        %v4711 = vadd.f32 0.0, %v4710
        %4712 = vmatprep.mubr.bf16.mxu0 %v3841
        %4713 = vmatmul.mubr.bf16.gmra.mrb[0].mxu0 %v3697
        %v4714 = vpop.f32.mrb[0].mxu0
        %v4715 = vadd.f32 0.0, %v4714
        %v4716 = vpop.f32.mrb[0].mxu0
        %v4717 = vadd.f32 0.0, %v4716
        %v4718 = vpop.f32.mrb[0].mxu0
        %v4719 = vpop.f32.mrb[0].mxu0
        %v4720 = vadd.f32 0.0, %v4719
        %4721 = vmatprep.mubr.bf16.mxu0 %v3842
        %4722 = vmatmul.mubr.bf16.gmra.mrb[0].mxu0 %v3698
        %v4723 = vpop.f32.mrb[0].mxu0
        %v4724 = vadd.f32 0.0, %v4723
        %v4725 = vpop.f32.mrb[0].mxu0
        %v4726 = vadd.f32 0.0, %v4725
        %v4727 = vpop.f32.mrb[0].mxu0
        %v4728 = vadd.f32 0.0, %v4727
        %v4729 = vpop.f32.mrb[0].mxu0
        %v4730 = vadd.f32 0.0, %v4729
        %4731 = vmatprep.mubr.bf16.mxu0 %v3843
        %4732 = vmatmul.mubr.bf16.gmra.mrb[0].mxu0 %v3699
        %v4733 = vpop.f32.mrb[0].mxu0
        %v4734 = vpop.f32.mrb[0].mxu0
        %v4735 = vadd.f32 0.0, %v4734
        %v4736 = vpop.f32.mrb[0].mxu0
        %v4737 = vadd.f32 0.0, %v4736
        %v4738 = vpop.f32.mrb[0].mxu0
        %v4739 = vadd.f32 0.0, %v4738
        %4740 = vmatprep.mubr.bf16.mxu0 %v3844
        %4741 = vmatmul.mubr.bf16.gmra.mrb[0].mxu0 %v3700
        %v4742 = vpop.f32.mrb[0].mxu0
        %v4743 = vadd.f32 0.0, %v4742
        %v4744 = vpop.f32.mrb[0].mxu0
        %v4745 = vadd.f32 0.0, %v4744
        %v4746 = vpop.f32.mrb[0].mxu0
        %v4747 = vpop.f32.mrb[0].mxu0
        %v4748 = vadd.f32 0.0, %v4747
        %4749 = vdwg.mxu0
        %4750 = vmatprep.subr.bf16.mxu0 %v4398
        %4751 = vmatpush1.bf16.msra.mxu0 %v4397
        %4752 = vmatprep.subr.bf16.mxu0 %v4401
        %4753 = vmatpush1.bf16.msra.mxu0 %v4400
        %4754 = vmatprep.subr.bf16.mxu0 %v4404
        %4755 = vmatpush1.bf16.msra.mxu0 %v4403
        %4756 = vmatprep.subr.bf16.mxu0 %v4407
        %4757 = vmatpush1.bf16.msra.mxu0 %v4406
        %4758 = vmatprep.subr.bf16.mxu0 %v4410
        %4759 = vmatpush1.bf16.msra.mxu0 %v4409
        %4760 = vmatprep.subr.bf16.mxu0 %v4413
        %4761 = vmatpush1.bf16.msra.mxu0 %v4412
        %4762 = vmatprep.subr.bf16.mxu0 %v4416
        %4763 = vmatpush1.bf16.msra.mxu0 %v4415
        %4764 = vmatprep.subr.bf16.mxu0 %v4419
        %4765 = vmatpush1.bf16.msra.mxu0 %v4418
        %4766 = vmatprep.subr.bf16.mxu0 0
        %4767 = vmatpush1.bf16.msra.mxu0 0
        %4768 = vmatprep.subr.bf16.mxu0 0
        %4769 = vmatpush1.bf16.msra.mxu0 0
        %4770 = vmatprep.subr.bf16.mxu0 0
        %4771 = vmatpush1.bf16.msra.mxu0 0
        %4772 = vmatprep.subr.bf16.mxu0 0
        %4773 = vmatpush1.bf16.msra.mxu0 0
        %4774 = vmatprep.subr.bf16.mxu0 0
        %4775 = vmatpush1.bf16.msra.mxu0 0
        %4776 = vmatprep.subr.bf16.mxu0 0
        %4777 = vmatpush1.bf16.msra.mxu0 0
        %4778 = vmatprep.subr.bf16.mxu0 0
        %4779 = vmatpush1.bf16.msra.mxu0 0
        %4780 = vmatprep.subr.bf16.mxu0 0
        %4781 = vmatpush1.bf16.msra.mxu0 0
        %4782 = vmatprep.mubr.bf16.mxu0 0
        %4783 = vmatmul.mubr.bf16.gmra.mrb[0].mxu0 %v3965
        %v4784 = vpop.f32.mrb[0].mxu0
        %v4785 = vadd.f32 %v4528, %v4784
        %v4786 = vpop.f32.mrb[0].mxu0
        %v4787 = vadd.f32 %v4530, %v4786
        %v4788 = vpop.f32.mrb[0].mxu0
        %v4789 = vadd.f32 %v4532, %v4788
        %v4790 = vpop.f32.mrb[0].mxu0
        %v4791 = vadd.f32 %v4534, %v4790
        %4792 = vmatprep.mubr.bf16.mxu0 0
        %4793 = vmatmul.mubr.bf16.gmra.mrb[0].mxu0 %v3966
        %v4794 = vpop.f32.mrb[0].mxu0
        %v4795 = vpop.f32.mrb[0].mxu0
        %v4796 = vadd.f32 %v4539, %v4795
        %v4797 = vpop.f32.mrb[0].mxu0
        %v4798 = vadd.f32 %v4541, %v4797
        %v4799 = vpop.f32.mrb[0].mxu0
        %v4800 = vadd.f32 %v4543, %v4799
        %4801 = vmatprep.mubr.bf16.mxu0 0
        %4802 = vmatmul.mubr.bf16.gmra.mrb[0].mxu0 %v3967
        %v4803 = vpop.f32.mrb[0].mxu0
        %v4804 = vadd.f32 %v4547, %v4803
        %v4805 = vpop.f32.mrb[0].mxu0
        %v4806 = vadd.f32 %v4549, %v4805
        %v4807 = vpop.f32.mrb[0].mxu0
        %v4808 = vpop.f32.mrb[0].mxu0
        %v4809 = vadd.f32 %v4552, %v4808
        %4810 = vmatprep.mubr.bf16.mxu0 0
        %4811 = vmatmul.mubr.bf16.gmra.mrb[0].mxu0 %v3968
        %v4812 = vpop.f32.mrb[0].mxu0
        %v4813 = vadd.f32 %v4556, %v4812
        %v4814 = vpop.f32.mrb[0].mxu0
        %v4815 = vadd.f32 %v4558, %v4814
        %v4816 = vpop.f32.mrb[0].mxu0
        %v4817 = vadd.f32 %v4560, %v4816
        %v4818 = vpop.f32.mrb[0].mxu0
        %v4819 = vadd.f32 %v4562, %v4818
        %4820 = vmatprep.mubr.bf16.mxu0 0
        %4821 = vmatmul.mubr.bf16.gmra.mrb[0].mxu0 %v3969
        %v4822 = vpop.f32.mrb[0].mxu0
        %v4823 = vpop.f32.mrb[0].mxu0
        %v4824 = vadd.f32 %v4567, %v4823
        %v4825 = vpop.f32.mrb[0].mxu0
        %v4826 = vadd.f32 %v4569, %v4825
        %v4827 = vpop.f32.mrb[0].mxu0
        %v4828 = vadd.f32 %v4571, %v4827
        %4829 = vmatprep.mubr.bf16.mxu0 0
        %4830 = vmatmul.mubr.bf16.gmra.mrb[0].mxu0 %v3970
        %v4831 = vpop.f32.mrb[0].mxu0
        %v4832 = vadd.f32 %v4575, %v4831
        %v4833 = vpop.f32.mrb[0].mxu0
        %v4834 = vadd.f32 %v4577, %v4833
        %v4835 = vpop.f32.mrb[0].mxu0
        %v4836 = vpop.f32.mrb[0].mxu0
        %v4837 = vadd.f32 %v4580, %v4836
        %4838 = vmatprep.mubr.bf16.mxu0 0
        %4839 = vmatmul.mubr.bf16.gmra.mrb[0].mxu0 %v3971
        %v4840 = vpop.f32.mrb[0].mxu0
        %v4841 = vadd.f32 %v4584, %v4840
        %v4842 = vpop.f32.mrb[0].mxu0
        %v4843 = vadd.f32 %v4586, %v4842
        %v4844 = vpop.f32.mrb[0].mxu0
        %v4845 = vadd.f32 %v4588, %v4844
        %v4846 = vpop.f32.mrb[0].mxu0
        %v4847 = vadd.f32 %v4590, %v4846
        %4848 = vmatprep.mubr.bf16.mxu0 0
        %4849 = vmatmul.mubr.bf16.gmra.mrb[0].mxu0 %v3972
        %v4850 = vpop.f32.mrb[0].mxu0
        %v4851 = vpop.f32.mrb[0].mxu0
        %v4852 = vadd.f32 %v4595, %v4851
        %v4853 = vpop.f32.mrb[0].mxu0
        %v4854 = vadd.f32 %v4597, %v4853
        %v4855 = vpop.f32.mrb[0].mxu0
        %v4856 = vadd.f32 %v4599, %v4855
        %4857 = vmatprep.mubr.bf16.mxu0 0
        %4858 = vmatmul.mubr.bf16.gmra.mrb[0].mxu0 %v3973
        %v4859 = vpop.f32.mrb[0].mxu0
        %v4860 = vadd.f32 %v4603, %v4859
        %v4861 = vpop.f32.mrb[0].mxu0
        %v4862 = vadd.f32 %v4605, %v4861
        %v4863 = vpop.f32.mrb[0].mxu0
        %v4864 = vpop.f32.mrb[0].mxu0
        %v4865 = vadd.f32 %v4608, %v4864
        %4866 = vmatprep.mubr.bf16.mxu0 0
        %4867 = vmatmul.mubr.bf16.gmra.mrb[0].mxu0 %v3974
        %v4868 = vpop.f32.mrb[0].mxu0
        %v4869 = vadd.f32 %v4612, %v4868
        %v4870 = vpop.f32.mrb[0].mxu0
        %v4871 = vadd.f32 %v4614, %v4870
        %v4872 = vpop.f32.mrb[0].mxu0
        %v4873 = vadd.f32 %v4616, %v4872
        %v4874 = vpop.f32.mrb[0].mxu0
        %v4875 = vadd.f32 %v4618, %v4874
        %4876 = vmatprep.mubr.bf16.mxu0 0
        %4877 = vmatmul.mubr.bf16.gmra.mrb[0].mxu0 %v3975
        %v4878 = vpop.f32.mrb[0].mxu0
        %v4879 = vpop.f32.mrb[0].mxu0
        %v4880 = vadd.f32 %v4623, %v4879
        %v4881 = vpop.f32.mrb[0].mxu0
        %v4882 = vadd.f32 %v4625, %v4881
        %v4883 = vpop.f32.mrb[0].mxu0
        %v4884 = vadd.f32 %v4627, %v4883
        %4885 = vmatprep.mubr.bf16.mxu0 0
        %4886 = vmatmul.mubr.bf16.gmra.mrb[0].mxu0 %v3976
        %v4887 = vpop.f32.mrb[0].mxu0
        %v4888 = vadd.f32 %v4631, %v4887
        %v4889 = vpop.f32.mrb[0].mxu0
        %v4890 = vadd.f32 %v4633, %v4889
        %v4891 = vpop.f32.mrb[0].mxu0
        %v4892 = vpop.f32.mrb[0].mxu0
        %v4893 = vadd.f32 %v4636, %v4892
        %4894 = vmatprep.mubr.bf16.mxu0 0
        %4895 = vmatmul.mubr.bf16.gmra.mrb[0].mxu0 %v3977
        %v4896 = vpop.f32.mrb[0].mxu0
        %v4897 = vadd.f32 %v4640, %v4896
        %v4898 = vpop.f32.mrb[0].mxu0
        %v4899 = vadd.f32 %v4642, %v4898
        %v4900 = vpop.f32.mrb[0].mxu0
        %v4901 = vadd.f32 %v4644, %v4900
        %v4902 = vpop.f32.mrb[0].mxu0
        %v4903 = vadd.f32 %v4646, %v4902
        %4904 = vmatprep.mubr.bf16.mxu0 0
        %4905 = vmatmul.mubr.bf16.gmra.mrb[0].mxu0 %v3978
        %v4906 = vpop.f32.mrb[0].mxu0
        %v4907 = vpop.f32.mrb[0].mxu0
        %v4908 = vadd.f32 %v4651, %v4907
        %v4909 = vpop.f32.mrb[0].mxu0
        %v4910 = vadd.f32 %v4653, %v4909
        %v4911 = vpop.f32.mrb[0].mxu0
        %v4912 = vadd.f32 %v4655, %v4911
        %4913 = vmatprep.mubr.bf16.mxu0 0
        %4914 = vmatmul.mubr.bf16.gmra.mrb[0].mxu0 %v3979
        %v4915 = vpop.f32.mrb[0].mxu0
        %v4916 = vadd.f32 %v4659, %v4915
        %v4917 = vpop.f32.mrb[0].mxu0
        %v4918 = vadd.f32 %v4661, %v4917
        %v4919 = vpop.f32.mrb[0].mxu0
        %v4920 = vpop.f32.mrb[0].mxu0
        %v4921 = vadd.f32 %v4664, %v4920
        %4922 = vmatprep.mubr.bf16.mxu0 0
        %4923 = vmatmul.mubr.bf16.gmra.mrb[0].mxu0 %v3980
        %v4924 = vpop.f32.mrb[0].mxu0
        %v4925 = vadd.f32 %v4668, %v4924
        %v4926 = vpop.f32.mrb[0].mxu0
        %v4927 = vadd.f32 %v4670, %v4926
        %v4928 = vpop.f32.mrb[0].mxu0
        %v4929 = vadd.f32 %v4672, %v4928
        %v4930 = vpop.f32.mrb[0].mxu0
        %v4931 = vadd.f32 %v4674, %v4930
        %4932 = vmatprep.mubr.bf16.mxu0 0
        %4933 = vmatmul.mubr.bf16.gmra.mrb[0].mxu0 %v3981
        %v4934 = vpop.f32.mrb[0].mxu0
        %v4935 = vpop.f32.mrb[0].mxu0
        %v4936 = vadd.f32 %v4679, %v4935
        %v4937 = vpop.f32.mrb[0].mxu0
        %v4938 = vadd.f32 %v4681, %v4937
        %v4939 = vpop.f32.mrb[0].mxu0
        %v4940 = vadd.f32 %v4683, %v4939
        %4941 = vmatprep.mubr.bf16.mxu0 0
        %4942 = vmatmul.mubr.bf16.gmra.mrb[0].mxu0 %v3982
        %v4943 = vpop.f32.mrb[0].mxu0
        %v4944 = vadd.f32 %v4687, %v4943
        %v4945 = vpop.f32.mrb[0].mxu0
        %v4946 = vadd.f32 %v4689, %v4945
        %v4947 = vpop.f32.mrb[0].mxu0
        %v4948 = vpop.f32.mrb[0].mxu0
        %v4949 = vadd.f32 %v4692, %v4948
        %4950 = vmatprep.mubr.bf16.mxu0 0
        %4951 = vmatmul.mubr.bf16.gmra.mrb[0].mxu0 %v3983
        %v4952 = vpop.f32.mrb[0].mxu0
        %v4953 = vadd.f32 %v4696, %v4952
        %v4954 = vpop.f32.mrb[0].mxu0
        %v4955 = vadd.f32 %v4698, %v4954
        %v4956 = vpop.f32.mrb[0].mxu0
        %v4957 = vadd.f32 %v4700, %v4956
        %v4958 = vpop.f32.mrb[0].mxu0
        %v4959 = vadd.f32 %v4702, %v4958
        %4960 = vmatprep.mubr.bf16.mxu0 0
        %4961 = vmatmul.mubr.bf16.gmra.mrb[0].mxu0 %v3984
        %v4962 = vpop.f32.mrb[0].mxu0
        %v4963 = vpop.f32.mrb[0].mxu0
        %v4964 = vadd.f32 %v4707, %v4963
        %v4965 = vpop.f32.mrb[0].mxu0
        %v4966 = vadd.f32 %v4709, %v4965
        %v4967 = vpop.f32.mrb[0].mxu0
        %v4968 = vadd.f32 %v4711, %v4967
        %4969 = vmatprep.mubr.bf16.mxu0 0
        %4970 = vmatmul.mubr.bf16.gmra.mrb[0].mxu0 %v3985
        %v4971 = vpop.f32.mrb[0].mxu0
        %v4972 = vadd.f32 %v4715, %v4971
        %v4973 = vpop.f32.mrb[0].mxu0
        %v4974 = vadd.f32 %v4717, %v4973
        %v4975 = vpop.f32.mrb[0].mxu0
        %v4976 = vpop.f32.mrb[0].mxu0
        %v4977 = vadd.f32 %v4720, %v4976
        %4978 = vmatprep.mubr.bf16.mxu0 0
        %4979 = vmatmul.mubr.bf16.gmra.mrb[0].mxu0 %v3986
        %v4980 = vpop.f32.mrb[0].mxu0
        %v4981 = vadd.f32 %v4724, %v4980
        %v4982 = vpop.f32.mrb[0].mxu0
        %v4983 = vadd.f32 %v4726, %v4982
        %v4984 = vpop.f32.mrb[0].mxu0
        %v4985 = vadd.f32 %v4728, %v4984
        %v4986 = vpop.f32.mrb[0].mxu0
        %v4987 = vadd.f32 %v4730, %v4986
        %4988 = vmatprep.mubr.bf16.mxu0 0
        %4989 = vmatmul.mubr.bf16.gmra.mrb[0].mxu0 %v3987
        %v4990 = vpop.f32.mrb[0].mxu0
        %v4991 = vpop.f32.mrb[0].mxu0
        %v4992 = vadd.f32 %v4735, %v4991
        %v4993 = vpop.f32.mrb[0].mxu0
        %v4994 = vadd.f32 %v4737, %v4993
        %v4995 = vpop.f32.mrb[0].mxu0
        %v4996 = vadd.f32 %v4739, %v4995
        %4997 = vmatprep.mubr.bf16.mxu0 0
        %4998 = vmatmul.mubr.bf16.gmra.mrb[0].mxu0 %v3988
        %v4999 = vpop.f32.mrb[0].mxu0
        %v5000 = vadd.f32 %v4743, %v4999
        %v5001 = vpop.f32.mrb[0].mxu0
        %v5002 = vadd.f32 %v4745, %v5001
        %v5003 = vpop.f32.mrb[0].mxu0
        %v5004 = vpop.f32.mrb[0].mxu0
        %v5005 = vadd.f32 %v4748, %v5004
        %5006 = vdwg.mxu0
        %5007 = vmatprep.subr.bf16.mxu0 0
        %5008 = vmatpush1.bf16.msra.mxu0 %v4351
        %5009 = vmatprep.subr.bf16.mxu0 0
        %5010 = vmatpush1.bf16.msra.mxu0 %v4354
        %5011 = vmatprep.subr.bf16.mxu0 0
        %5012 = vmatpush1.bf16.msra.mxu0 %v4357
        %5013 = vmatprep.subr.bf16.mxu0 0
        %5014 = vmatpush1.bf16.msra.mxu0 %v4360
        %5015 = vmatprep.subr.bf16.mxu0 0
        %5016 = vmatpush1.bf16.msra.mxu0 %v4363
        %5017 = vmatprep.subr.bf16.mxu0 0
        %5018 = vmatpush1.bf16.msra.mxu0 %v4366
        %5019 = vmatprep.subr.bf16.mxu0 0
        %5020 = vmatpush1.bf16.msra.mxu0 %v4369
        %5021 = vmatprep.subr.bf16.mxu0 0
        %5022 = vmatpush1.bf16.msra.mxu0 %v4372
        %5023 = vmatprep.subr.bf16.mxu0 0
        %5024 = vmatpush1.bf16.msra.mxu0 %v4375
        %5025 = vmatprep.subr.bf16.mxu0 0
        %5026 = vmatpush1.bf16.msra.mxu0 %v4378
        %5027 = vmatprep.subr.bf16.mxu0 0
        %5028 = vmatpush1.bf16.msra.mxu0 %v4381
        %5029 = vmatprep.subr.bf16.mxu0 0
        %5030 = vmatpush1.bf16.msra.mxu0 %v4384
        %5031 = vmatprep.subr.bf16.mxu0 0
        %5032 = vmatpush1.bf16.msra.mxu0 %v4387
        %5033 = vmatprep.subr.bf16.mxu0 0
        %5034 = vmatpush1.bf16.msra.mxu0 %v4390
        %5035 = vmatprep.subr.bf16.mxu0 0
        %5036 = vmatpush1.bf16.msra.mxu0 %v4393
        %5037 = vmatprep.subr.bf16.mxu0 0
        %5038 = vmatpush1.bf16.msra.mxu0 %v4396
        %5039 = vmatprep.mubr.bf16.mxu0 %v3821
        %5040 = vmatmul.mubr.bf16.gmra.mrb[0].mxu0 %v3677
        %v5041 = vpop.f32.mrb[0].mxu0
        %v5042 = vadd.f32 0.0, %v5041
        %v5043 = vpop.f32.mrb[0].mxu0
        %v5044 = vpop.f32.mrb[0].mxu0
        %v5045 = vadd.f32 0.0, %v5044
        %v5046 = vpop.f32.mrb[0].mxu0
        %5047 = vmatprep.mubr.bf16.mxu0 %v3822
        %5048 = vmatmul.mubr.bf16.gmra.mrb[0].mxu0 %v3678
        %v5049 = vpop.f32.mrb[0].mxu0
        %v5050 = vadd.f32 0.0, %v5049
        %v5051 = vpop.f32.mrb[0].mxu0
        %v5052 = vpop.f32.mrb[0].mxu0
        %v5053 = vadd.f32 0.0, %v5052
        %v5054 = vpop.f32.mrb[0].mxu0
        %5055 = vmatprep.mubr.bf16.mxu0 %v3823
        %5056 = vmatmul.mubr.bf16.gmra.mrb[0].mxu0 %v3679
        %v5057 = vpop.f32.mrb[0].mxu0
        %v5058 = vadd.f32 0.0, %v5057
        %v5059 = vpop.f32.mrb[0].mxu0
        %v5060 = vpop.f32.mrb[0].mxu0
        %v5061 = vadd.f32 0.0, %v5060
        %v5062 = vpop.f32.mrb[0].mxu0
        %5063 = vmatprep.mubr.bf16.mxu0 %v3824
        %5064 = vmatmul.mubr.bf16.gmra.mrb[0].mxu0 %v3680
        %v5065 = vpop.f32.mrb[0].mxu0
        %v5066 = vadd.f32 0.0, %v5065
        %v5067 = vpop.f32.mrb[0].mxu0
        %v5068 = vpop.f32.mrb[0].mxu0
        %v5069 = vadd.f32 0.0, %v5068
        %v5070 = vpop.f32.mrb[0].mxu0
        %5071 = vmatprep.mubr.bf16.mxu0 %v3825
        %5072 = vmatmul.mubr.bf16.gmra.mrb[0].mxu0 %v3681
        %v5073 = vpop.f32.mrb[0].mxu0
        %v5074 = vadd.f32 0.0, %v5073
        %v5075 = vpop.f32.mrb[0].mxu0
        %v5076 = vpop.f32.mrb[0].mxu0
        %v5077 = vadd.f32 0.0, %v5076
        %v5078 = vpop.f32.mrb[0].mxu0
        %5079 = vmatprep.mubr.bf16.mxu0 %v3826
        %5080 = vmatmul.mubr.bf16.gmra.mrb[0].mxu0 %v3682
        %v5081 = vpop.f32.mrb[0].mxu0
        %v5082 = vadd.f32 0.0, %v5081
        %v5083 = vpop.f32.mrb[0].mxu0
        %v5084 = vpop.f32.mrb[0].mxu0
        %v5085 = vadd.f32 0.0, %v5084
        %v5086 = vpop.f32.mrb[0].mxu0
        %5087 = vmatprep.mubr.bf16.mxu0 %v3827
        %5088 = vmatmul.mubr.bf16.gmra.mrb[0].mxu0 %v3683
        %v5089 = vpop.f32.mrb[0].mxu0
        %v5090 = vadd.f32 0.0, %v5089
        %v5091 = vpop.f32.mrb[0].mxu0
        %v5092 = vpop.f32.mrb[0].mxu0
        %v5093 = vadd.f32 0.0, %v5092
        %v5094 = vpop.f32.mrb[0].mxu0
        %5095 = vmatprep.mubr.bf16.mxu0 %v3828
        %5096 = vmatmul.mubr.bf16.gmra.mrb[0].mxu0 %v3684
        %v5097 = vpop.f32.mrb[0].mxu0
        %v5098 = vadd.f32 0.0, %v5097
        %v5099 = vpop.f32.mrb[0].mxu0
        %v5100 = vpop.f32.mrb[0].mxu0
        %v5101 = vadd.f32 0.0, %v5100
        %v5102 = vpop.f32.mrb[0].mxu0
        %5103 = vmatprep.mubr.bf16.mxu0 %v3829
        %5104 = vmatmul.mubr.bf16.gmra.mrb[0].mxu0 %v3685
        %v5105 = vpop.f32.mrb[0].mxu0
        %v5106 = vadd.f32 0.0, %v5105
        %v5107 = vpop.f32.mrb[0].mxu0
        %v5108 = vpop.f32.mrb[0].mxu0
        %v5109 = vadd.f32 0.0, %v5108
        %v5110 = vpop.f32.mrb[0].mxu0
        %5111 = vmatprep.mubr.bf16.mxu0 %v3830
        %5112 = vmatmul.mubr.bf16.gmra.mrb[0].mxu0 %v3686
        %v5113 = vpop.f32.mrb[0].mxu0
        %v5114 = vadd.f32 0.0, %v5113
        %v5115 = vpop.f32.mrb[0].mxu0
        %v5116 = vpop.f32.mrb[0].mxu0
        %v5117 = vadd.f32 0.0, %v5116
        %v5118 = vpop.f32.mrb[0].mxu0
        %5119 = vmatprep.mubr.bf16.mxu0 %v3831
        %5120 = vmatmul.mubr.bf16.gmra.mrb[0].mxu0 %v3687
        %v5121 = vpop.f32.mrb[0].mxu0
        %v5122 = vadd.f32 0.0, %v5121
        %v5123 = vpop.f32.mrb[0].mxu0
        %v5124 = vpop.f32.mrb[0].mxu0
        %v5125 = vadd.f32 0.0, %v5124
        %v5126 = vpop.f32.mrb[0].mxu0
        %5127 = vmatprep.mubr.bf16.mxu0 %v3832
        %5128 = vmatmul.mubr.bf16.gmra.mrb[0].mxu0 %v3688
        %v5129 = vpop.f32.mrb[0].mxu0
        %v5130 = vadd.f32 0.0, %v5129
        %v5131 = vpop.f32.mrb[0].mxu0
        %v5132 = vpop.f32.mrb[0].mxu0
        %v5133 = vadd.f32 0.0, %v5132
        %v5134 = vpop.f32.mrb[0].mxu0
        %5135 = vmatprep.mubr.bf16.mxu0 %v3833
        %5136 = vmatmul.mubr.bf16.gmra.mrb[0].mxu0 %v3689
        %v5137 = vpop.f32.mrb[0].mxu0
        %v5138 = vadd.f32 0.0, %v5137
        %v5139 = vpop.f32.mrb[0].mxu0
        %v5140 = vpop.f32.mrb[0].mxu0
        %v5141 = vadd.f32 0.0, %v5140
        %v5142 = vpop.f32.mrb[0].mxu0
        %5143 = vmatprep.mubr.bf16.mxu0 %v3834
        %5144 = vmatmul.mubr.bf16.gmra.mrb[0].mxu0 %v3690
        %v5145 = vpop.f32.mrb[0].mxu0
        %v5146 = vadd.f32 0.0, %v5145
        %v5147 = vpop.f32.mrb[0].mxu0
        %v5148 = vpop.f32.mrb[0].mxu0
        %v5149 = vadd.f32 0.0, %v5148
        %v5150 = vpop.f32.mrb[0].mxu0
        %5151 = vmatprep.mubr.bf16.mxu0 %v3835
        %5152 = vmatmul.mubr.bf16.gmra.mrb[0].mxu0 %v3691
        %v5153 = vpop.f32.mrb[0].mxu0
        %v5154 = vadd.f32 0.0, %v5153
        %v5155 = vpop.f32.mrb[0].mxu0
        %v5156 = vpop.f32.mrb[0].mxu0
        %v5157 = vadd.f32 0.0, %v5156
        %v5158 = vpop.f32.mrb[0].mxu0
        %5159 = vmatprep.mubr.bf16.mxu0 %v3836
        %5160 = vmatmul.mubr.bf16.gmra.mrb[0].mxu0 %v3692
        %v5161 = vpop.f32.mrb[0].mxu0
        %v5162 = vadd.f32 0.0, %v5161
        %v5163 = vpop.f32.mrb[0].mxu0
        %v5164 = vpop.f32.mrb[0].mxu0
        %v5165 = vadd.f32 0.0, %v5164
        %v5166 = vpop.f32.mrb[0].mxu0
        %5167 = vmatprep.mubr.bf16.mxu0 %v3837
        %5168 = vmatmul.mubr.bf16.gmra.mrb[0].mxu0 %v3693
        %v5169 = vpop.f32.mrb[0].mxu0
        %v5170 = vadd.f32 0.0, %v5169
        %v5171 = vpop.f32.mrb[0].mxu0
        %v5172 = vpop.f32.mrb[0].mxu0
        %v5173 = vadd.f32 0.0, %v5172
        %v5174 = vpop.f32.mrb[0].mxu0
        %5175 = vmatprep.mubr.bf16.mxu0 %v3838
        %5176 = vmatmul.mubr.bf16.gmra.mrb[0].mxu0 %v3694
        %v5177 = vpop.f32.mrb[0].mxu0
        %v5178 = vadd.f32 0.0, %v5177
        %v5179 = vpop.f32.mrb[0].mxu0
        %v5180 = vpop.f32.mrb[0].mxu0
        %v5181 = vadd.f32 0.0, %v5180
        %v5182 = vpop.f32.mrb[0].mxu0
        %5183 = vmatprep.mubr.bf16.mxu0 %v3839
        %5184 = vmatmul.mubr.bf16.gmra.mrb[0].mxu0 %v3695
        %v5185 = vpop.f32.mrb[0].mxu0
        %v5186 = vadd.f32 0.0, %v5185
        %v5187 = vpop.f32.mrb[0].mxu0
        %v5188 = vpop.f32.mrb[0].mxu0
        %v5189 = vadd.f32 0.0, %v5188
        %v5190 = vpop.f32.mrb[0].mxu0
        %5191 = vmatprep.mubr.bf16.mxu0 %v3840
        %5192 = vmatmul.mubr.bf16.gmra.mrb[0].mxu0 %v3696
        %v5193 = vpop.f32.mrb[0].mxu0
        %v5194 = vadd.f32 0.0, %v5193
        %v5195 = vpop.f32.mrb[0].mxu0
        %v5196 = vpop.f32.mrb[0].mxu0
        %v5197 = vadd.f32 0.0, %v5196
        %v5198 = vpop.f32.mrb[0].mxu0
        %5199 = vmatprep.mubr.bf16.mxu0 %v3841
        %5200 = vmatmul.mubr.bf16.gmra.mrb[0].mxu0 %v3697
        %v5201 = vpop.f32.mrb[0].mxu0
        %v5202 = vadd.f32 0.0, %v5201
        %v5203 = vpop.f32.mrb[0].mxu0
        %v5204 = vpop.f32.mrb[0].mxu0
        %v5205 = vadd.f32 0.0, %v5204
        %v5206 = vpop.f32.mrb[0].mxu0
        %5207 = vmatprep.mubr.bf16.mxu0 %v3842
        %5208 = vmatmul.mubr.bf16.gmra.mrb[0].mxu0 %v3698
        %v5209 = vpop.f32.mrb[0].mxu0
        %v5210 = vadd.f32 0.0, %v5209
        %v5211 = vpop.f32.mrb[0].mxu0
        %v5212 = vpop.f32.mrb[0].mxu0
        %v5213 = vadd.f32 0.0, %v5212
        %v5214 = vpop.f32.mrb[0].mxu0
        %5215 = vmatprep.mubr.bf16.mxu0 %v3843
        %5216 = vmatmul.mubr.bf16.gmra.mrb[0].mxu0 %v3699
        %v5217 = vpop.f32.mrb[0].mxu0
        %v5218 = vadd.f32 0.0, %v5217
        %v5219 = vpop.f32.mrb[0].mxu0
        %v5220 = vpop.f32.mrb[0].mxu0
        %v5221 = vadd.f32 0.0, %v5220
        %v5222 = vpop.f32.mrb[0].mxu0
        %5223 = vmatprep.mubr.bf16.mxu0 %v3844
        %5224 = vmatmul.mubr.bf16.gmra.mrb[0].mxu0 %v3700
        %v5225 = vpop.f32.mrb[0].mxu0
        %v5226 = vadd.f32 0.0, %v5225
        %v5227 = vpop.f32.mrb[0].mxu0
        %v5228 = vpop.f32.mrb[0].mxu0
        %v5229 = vadd.f32 0.0, %v5228
        %v5230 = vpop.f32.mrb[0].mxu0
        %5231 = vdwg.mxu0
        %5232 = vmatprep.subr.bf16.mxu0 0
        %5233 = vmatpush1.bf16.msra.mxu0 %v4399
        %5234 = vmatprep.subr.bf16.mxu0 0
        %5235 = vmatpush1.bf16.msra.mxu0 %v4402
        %5236 = vmatprep.subr.bf16.mxu0 0
        %5237 = vmatpush1.bf16.msra.mxu0 %v4405
        %5238 = vmatprep.subr.bf16.mxu0 0
        %5239 = vmatpush1.bf16.msra.mxu0 %v4408
        %5240 = vmatprep.subr.bf16.mxu0 0
        %5241 = vmatpush1.bf16.msra.mxu0 %v4411
        %5242 = vmatprep.subr.bf16.mxu0 0
        %5243 = vmatpush1.bf16.msra.mxu0 %v4414
        %5244 = vmatprep.subr.bf16.mxu0 0
        %5245 = vmatpush1.bf16.msra.mxu0 %v4417
        %5246 = vmatprep.subr.bf16.mxu0 0
        %5247 = vmatpush1.bf16.msra.mxu0 %v4420
        %5248 = vmatprep.subr.bf16.mxu0 0
        %5249 = vmatpush1.bf16.msra.mxu0 0
        %5250 = vmatprep.subr.bf16.mxu0 0
        %5251 = vmatpush1.bf16.msra.mxu0 0
        %5252 = vmatprep.subr.bf16.mxu0 0
        %5253 = vmatpush1.bf16.msra.mxu0 0
        %5254 = vmatprep.subr.bf16.mxu0 0
        %5255 = vmatpush1.bf16.msra.mxu0 0
        %5256 = vmatprep.subr.bf16.mxu0 0
        %5257 = vmatpush1.bf16.msra.mxu0 0
        %5258 = vmatprep.subr.bf16.mxu0 0
        %5259 = vmatpush1.bf16.msra.mxu0 0
        %5260 = vmatprep.subr.bf16.mxu0 0
        %5261 = vmatpush1.bf16.msra.mxu0 0
        %5262 = vmatprep.subr.bf16.mxu0 0
        %5263 = vmatpush1.bf16.msra.mxu0 0
        %5264 = vmatprep.mubr.bf16.mxu0 0
        %5265 = vmatmul.mubr.bf16.gmra.mrb[0].mxu0 %v3965
        %v5266 = vpop.f32.mrb[0].mxu0
        %v5267 = vadd.f32 %v5042, %v5266
        %v5268 = vpop.f32.mrb[0].mxu0
        %v5269 = vpop.f32.mrb[0].mxu0
        %v5270 = vadd.f32 %v5045, %v5269
        %v5271 = vpop.f32.mrb[0].mxu0
        %5272 = vmatprep.mubr.bf16.mxu0 0
        %5273 = vmatmul.mubr.bf16.gmra.mrb[0].mxu0 %v3966
        %v5274 = vpop.f32.mrb[0].mxu0
        %v5275 = vadd.f32 %v5050, %v5274
        %v5276 = vpop.f32.mrb[0].mxu0
        %v5277 = vpop.f32.mrb[0].mxu0
        %v5278 = vadd.f32 %v5053, %v5277
        %v5279 = vpop.f32.mrb[0].mxu0
        %5280 = vmatprep.mubr.bf16.mxu0 0
        %5281 = vmatmul.mubr.bf16.gmra.mrb[0].mxu0 %v3967
        %v5282 = vpop.f32.mrb[0].mxu0
        %v5283 = vadd.f32 %v5058, %v5282
        %v5284 = vpop.f32.mrb[0].mxu0
        %v5285 = vpop.f32.mrb[0].mxu0
        %v5286 = vadd.f32 %v5061, %v5285
        %v5287 = vpop.f32.mrb[0].mxu0
        %5288 = vmatprep.mubr.bf16.mxu0 0
        %5289 = vmatmul.mubr.bf16.gmra.mrb[0].mxu0 %v3968
        %v5290 = vpop.f32.mrb[0].mxu0
        %v5291 = vadd.f32 %v5066, %v5290
        %v5292 = vpop.f32.mrb[0].mxu0
        %v5293 = vpop.f32.mrb[0].mxu0
        %v5294 = vadd.f32 %v5069, %v5293
        %v5295 = vpop.f32.mrb[0].mxu0
        %5296 = vmatprep.mubr.bf16.mxu0 0
        %5297 = vmatmul.mubr.bf16.gmra.mrb[0].mxu0 %v3969
        %v5298 = vpop.f32.mrb[0].mxu0
        %v5299 = vadd.f32 %v5074, %v5298
        %v5300 = vpop.f32.mrb[0].mxu0
        %v5301 = vpop.f32.mrb[0].mxu0
        %v5302 = vadd.f32 %v5077, %v5301
        %v5303 = vpop.f32.mrb[0].mxu0
        %5304 = vmatprep.mubr.bf16.mxu0 0
        %5305 = vmatmul.mubr.bf16.gmra.mrb[0].mxu0 %v3970
        %v5306 = vpop.f32.mrb[0].mxu0
        %v5307 = vadd.f32 %v5082, %v5306
        %v5308 = vpop.f32.mrb[0].mxu0
        %v5309 = vpop.f32.mrb[0].mxu0
        %v5310 = vadd.f32 %v5085, %v5309
        %v5311 = vpop.f32.mrb[0].mxu0
        %5312 = vmatprep.mubr.bf16.mxu0 0
        %5313 = vmatmul.mubr.bf16.gmra.mrb[0].mxu0 %v3971
        %v5314 = vpop.f32.mrb[0].mxu0
        %v5315 = vadd.f32 %v5090, %v5314
        %v5316 = vpop.f32.mrb[0].mxu0
        %v5317 = vpop.f32.mrb[0].mxu0
        %v5318 = vadd.f32 %v5093, %v5317
        %v5319 = vpop.f32.mrb[0].mxu0
        %5320 = vmatprep.mubr.bf16.mxu0 0
        %5321 = vmatmul.mubr.bf16.gmra.mrb[0].mxu0 %v3972
        %v5322 = vpop.f32.mrb[0].mxu0
        %v5323 = vadd.f32 %v5098, %v5322
        %v5324 = vpop.f32.mrb[0].mxu0
        %v5325 = vpop.f32.mrb[0].mxu0
        %v5326 = vadd.f32 %v5101, %v5325
        %v5327 = vpop.f32.mrb[0].mxu0
        %5328 = vmatprep.mubr.bf16.mxu0 0
        %5329 = vmatmul.mubr.bf16.gmra.mrb[0].mxu0 %v3973
        %v5330 = vpop.f32.mrb[0].mxu0
        %v5331 = vadd.f32 %v5106, %v5330
        %v5332 = vpop.f32.mrb[0].mxu0
        %v5333 = vpop.f32.mrb[0].mxu0
        %v5334 = vadd.f32 %v5109, %v5333
        %v5335 = vpop.f32.mrb[0].mxu0
        %5336 = vmatprep.mubr.bf16.mxu0 0
        %5337 = vmatmul.mubr.bf16.gmra.mrb[0].mxu0 %v3974
        %v5338 = vpop.f32.mrb[0].mxu0
        %v5339 = vadd.f32 %v5114, %v5338
        %v5340 = vpop.f32.mrb[0].mxu0
        %v5341 = vpop.f32.mrb[0].mxu0
        %v5342 = vadd.f32 %v5117, %v5341
        %v5343 = vpop.f32.mrb[0].mxu0
        %5344 = vmatprep.mubr.bf16.mxu0 0
        %5345 = vmatmul.mubr.bf16.gmra.mrb[0].mxu0 %v3975
        %v5346 = vpop.f32.mrb[0].mxu0
        %v5347 = vadd.f32 %v5122, %v5346
        %v5348 = vpop.f32.mrb[0].mxu0
        %v5349 = vpop.f32.mrb[0].mxu0
        %v5350 = vadd.f32 %v5125, %v5349
        %v5351 = vpop.f32.mrb[0].mxu0
        %5352 = vmatprep.mubr.bf16.mxu0 0
        %5353 = vmatmul.mubr.bf16.gmra.mrb[0].mxu0 %v3976
        %v5354 = vpop.f32.mrb[0].mxu0
        %v5355 = vadd.f32 %v5130, %v5354
        %v5356 = vpop.f32.mrb[0].mxu0
        %v5357 = vpop.f32.mrb[0].mxu0
        %v5358 = vadd.f32 %v5133, %v5357
        %v5359 = vpop.f32.mrb[0].mxu0
        %5360 = vmatprep.mubr.bf16.mxu0 0
        %5361 = vmatmul.mubr.bf16.gmra.mrb[0].mxu0 %v3977
        %v5362 = vpop.f32.mrb[0].mxu0
        %v5363 = vadd.f32 %v5138, %v5362
        %v5364 = vpop.f32.mrb[0].mxu0
        %v5365 = vpop.f32.mrb[0].mxu0
        %v5366 = vadd.f32 %v5141, %v5365
        %v5367 = vpop.f32.mrb[0].mxu0
        %5368 = vmatprep.mubr.bf16.mxu0 0
        %5369 = vmatmul.mubr.bf16.gmra.mrb[0].mxu0 %v3978
        %v5370 = vpop.f32.mrb[0].mxu0
        %v5371 = vadd.f32 %v5146, %v5370
        %v5372 = vpop.f32.mrb[0].mxu0
        %v5373 = vpop.f32.mrb[0].mxu0
        %v5374 = vadd.f32 %v5149, %v5373
        %v5375 = vpop.f32.mrb[0].mxu0
        %5376 = vmatprep.mubr.bf16.mxu0 0
        %5377 = vmatmul.mubr.bf16.gmra.mrb[0].mxu0 %v3979
        %v5378 = vpop.f32.mrb[0].mxu0
        %v5379 = vadd.f32 %v5154, %v5378
        %v5380 = vpop.f32.mrb[0].mxu0
        %v5381 = vpop.f32.mrb[0].mxu0
        %v5382 = vadd.f32 %v5157, %v5381
        %v5383 = vpop.f32.mrb[0].mxu0
        %5384 = vmatprep.mubr.bf16.mxu0 0
        %5385 = vmatmul.mubr.bf16.gmra.mrb[0].mxu0 %v3980
        %v5386 = vpop.f32.mrb[0].mxu0
        %v5387 = vadd.f32 %v5162, %v5386
        %v5388 = vpop.f32.mrb[0].mxu0
        %v5389 = vpop.f32.mrb[0].mxu0
        %v5390 = vadd.f32 %v5165, %v5389
        %v5391 = vpop.f32.mrb[0].mxu0
        %5392 = vmatprep.mubr.bf16.mxu0 0
        %5393 = vmatmul.mubr.bf16.gmra.mrb[0].mxu0 %v3981
        %v5394 = vpop.f32.mrb[0].mxu0
        %v5395 = vadd.f32 %v5170, %v5394
        %v5396 = vpop.f32.mrb[0].mxu0
        %v5397 = vpop.f32.mrb[0].mxu0
        %v5398 = vadd.f32 %v5173, %v5397
        %v5399 = vpop.f32.mrb[0].mxu0
        %5400 = vmatprep.mubr.bf16.mxu0 0
        %5401 = vmatmul.mubr.bf16.gmra.mrb[0].mxu0 %v3982
        %v5402 = vpop.f32.mrb[0].mxu0
        %v5403 = vadd.f32 %v5178, %v5402
        %v5404 = vpop.f32.mrb[0].mxu0
        %v5405 = vpop.f32.mrb[0].mxu0
        %v5406 = vadd.f32 %v5181, %v5405
        %v5407 = vpop.f32.mrb[0].mxu0
        %5408 = vmatprep.mubr.bf16.mxu0 0
        %5409 = vmatmul.mubr.bf16.gmra.mrb[0].mxu0 %v3983
        %v5410 = vpop.f32.mrb[0].mxu0
        %v5411 = vadd.f32 %v5186, %v5410
        %v5412 = vpop.f32.mrb[0].mxu0
        %v5413 = vpop.f32.mrb[0].mxu0
        %v5414 = vadd.f32 %v5189, %v5413
        %v5415 = vpop.f32.mrb[0].mxu0
        %5416 = vmatprep.mubr.bf16.mxu0 0
        %5417 = vmatmul.mubr.bf16.gmra.mrb[0].mxu0 %v3984
        %v5418 = vpop.f32.mrb[0].mxu0
        %v5419 = vadd.f32 %v5194, %v5418
        %v5420 = vpop.f32.mrb[0].mxu0
        %v5421 = vpop.f32.mrb[0].mxu0
        %v5422 = vadd.f32 %v5197, %v5421
        %v5423 = vpop.f32.mrb[0].mxu0
        %5424 = vmatprep.mubr.bf16.mxu0 0
        %5425 = vmatmul.mubr.bf16.gmra.mrb[0].mxu0 %v3985
        %v5426 = vpop.f32.mrb[0].mxu0
        %v5427 = vadd.f32 %v5202, %v5426
        %v5428 = vpop.f32.mrb[0].mxu0
        %v5429 = vpop.f32.mrb[0].mxu0
        %v5430 = vadd.f32 %v5205, %v5429
        %v5431 = vpop.f32.mrb[0].mxu0
        %5432 = vmatprep.mubr.bf16.mxu0 0
        %5433 = vmatmul.mubr.bf16.gmra.mrb[0].mxu0 %v3986
        %v5434 = vpop.f32.mrb[0].mxu0
        %v5435 = vadd.f32 %v5210, %v5434
        %v5436 = vpop.f32.mrb[0].mxu0
        %v5437 = vpop.f32.mrb[0].mxu0
        %v5438 = vadd.f32 %v5213, %v5437
        %v5439 = vpop.f32.mrb[0].mxu0
        %5440 = vmatprep.mubr.bf16.mxu0 0
        %5441 = vmatmul.mubr.bf16.gmra.mrb[0].mxu0 %v3987
        %v5442 = vpop.f32.mrb[0].mxu0
        %v5443 = vadd.f32 %v5218, %v5442
        %v5444 = vpop.f32.mrb[0].mxu0
        %v5445 = vpop.f32.mrb[0].mxu0
        %v5446 = vadd.f32 %v5221, %v5445
        %v5447 = vpop.f32.mrb[0].mxu0
        %5448 = vmatprep.mubr.bf16.mxu0 0
        %5449 = vmatmul.mubr.bf16.gmra.mrb[0].mxu0 %v3988
        %v5450 = vpop.f32.mrb[0].mxu0
        %v5451 = vadd.f32 %v5226, %v5450
        %v5452 = vpop.f32.mrb[0].mxu0
        %v5453 = vpop.f32.mrb[0].mxu0
        %v5454 = vadd.f32 %v5229, %v5453
        %v5455 = vpop.f32.mrb[0].mxu0
        %5456 = vdwg.mxu0
        %v5505 = vrot.slane %v4787, 1
        %v5506 = vrot.slane %v4791, 1
        %v5507 = vsel %vm2397, %v5505, %v5506
        %v5508 = vrot.slane %v4796, 1
        %v5509 = vsel %vm2397, %v5506, %v5508
        %v5510 = vrot.slane %v4800, 1
        %v5511 = vrot.slane %v4806, 1
        %v5512 = vsel %vm2397, %v5510, %v5511
        %v5513 = vrot.slane %v4809, 1
        %v5514 = vsel %vm2397, %v5511, %v5513
        %v5515 = vrot.slane %v4815, 1
        %v5516 = vrot.slane %v4819, 1
        %v5517 = vsel %vm2397, %v5515, %v5516
        %v5518 = vrot.slane %v4824, 1
        %v5519 = vsel %vm2397, %v5516, %v5518
        %v5520 = vrot.slane %v4828, 1
        %v5521 = vrot.slane %v4834, 1
        %v5522 = vsel %vm2397, %v5520, %v5521
        %v5523 = vrot.slane %v4837, 1
        %v5524 = vsel %vm2397, %v5521, %v5523
        %v5525 = vrot.slane %v4843, 1
        %v5526 = vrot.slane %v4847, 1
        %v5527 = vsel %vm2397, %v5525, %v5526
        %v5528 = vrot.slane %v4852, 1
        %v5529 = vsel %vm2397, %v5526, %v5528
        %v5530 = vrot.slane %v4856, 1
        %v5531 = vrot.slane %v4862, 1
        %v5532 = vsel %vm2397, %v5530, %v5531
        %v5533 = vrot.slane %v4865, 1
        %v5534 = vsel %vm2397, %v5531, %v5533
        %v5535 = vrot.slane %v4871, 1
        %v5536 = vrot.slane %v4875, 1
        %v5537 = vsel %vm2397, %v5535, %v5536
        %v5538 = vrot.slane %v4880, 1
        %v5539 = vsel %vm2397, %v5536, %v5538
        %v5540 = vrot.slane %v4884, 1
        %v5541 = vrot.slane %v4890, 1
        %v5542 = vsel %vm2397, %v5540, %v5541
        %v5543 = vrot.slane %v4893, 1
        %v5544 = vsel %vm2397, %v5541, %v5543
        %v5545 = vrot.slane %v4899, 1
        %v5546 = vrot.slane %v4903, 1
        %v5547 = vsel %vm2397, %v5545, %v5546
        %v5548 = vrot.slane %v4908, 1
        %v5549 = vsel %vm2397, %v5546, %v5548
        %v5550 = vrot.slane %v4912, 1
        %v5551 = vrot.slane %v4918, 1
        %v5552 = vsel %vm2397, %v5550, %v5551
        %v5553 = vrot.slane %v4921, 1
        %v5554 = vsel %vm2397, %v5551, %v5553
        %v5555 = vrot.slane %v4927, 1
        %v5556 = vrot.slane %v4931, 1
        %v5557 = vsel %vm2397, %v5555, %v5556
        %v5558 = vrot.slane %v4936, 1
        %v5559 = vsel %vm2397, %v5556, %v5558
        %v5560 = vrot.slane %v4940, 1
        %v5561 = vrot.slane %v4946, 1
        %v5562 = vsel %vm2397, %v5560, %v5561
        %v5563 = vrot.slane %v4949, 1
        %v5564 = vsel %vm2397, %v5561, %v5563
        %v5565 = vrot.slane %v4955, 1
        %v5566 = vrot.slane %v4959, 1
        %v5567 = vsel %vm2397, %v5565, %v5566
        %v5568 = vrot.slane %v4964, 1
        %v5569 = vsel %vm2397, %v5566, %v5568
        %v5570 = vrot.slane %v4968, 1
        %v5571 = vrot.slane %v4974, 1
        %v5572 = vsel %vm2397, %v5570, %v5571
        %v5573 = vrot.slane %v4977, 1
        %v5574 = vsel %vm2397, %v5571, %v5573
        %v5575 = vrot.slane %v4983, 1
        %v5576 = vrot.slane %v4987, 1
        %v5577 = vsel %vm2397, %v5575, %v5576
        %v5578 = vrot.slane %v4992, 1
        %v5579 = vsel %vm2397, %v5576, %v5578
        %v5580 = vrot.slane %v4996, 1
        %v5581 = vrot.slane %v5002, 1
        %v5582 = vsel %vm2397, %v5580, %v5581
        %v5583 = vrot.slane %v5005, 1
        %v5584 = vsel %vm2397, %v5581, %v5583
        %v5617 = vadd.f32 %v4785, %v5507
        %v5618 = vadd.f32 %v4789, %v5509
        %v5619 = vadd.f32 %v4798, %v5512
        %v5620 = vadd.f32 %v4804, %v5514
        %v5621 = vadd.f32 %v4813, %v5517
        %v5622 = vadd.f32 %v4817, %v5519
        %v5623 = vadd.f32 %v4826, %v5522
        %v5624 = vadd.f32 %v4832, %v5524
        %v5625 = vadd.f32 %v4841, %v5527
        %v5626 = vadd.f32 %v4845, %v5529
        %v5627 = vadd.f32 %v4854, %v5532
        %v5628 = vadd.f32 %v4860, %v5534
        %v5629 = vadd.f32 %v4869, %v5537
        %v5630 = vadd.f32 %v4873, %v5539
        %v5631 = vadd.f32 %v4882, %v5542
        %v5632 = vadd.f32 %v4888, %v5544
        %v5633 = vadd.f32 %v4897, %v5547
        %v5634 = vadd.f32 %v4901, %v5549
        %v5635 = vadd.f32 %v4910, %v5552
        %v5636 = vadd.f32 %v4916, %v5554
        %v5637 = vadd.f32 %v4925, %v5557
        %v5638 = vadd.f32 %v4929, %v5559
        %v5639 = vadd.f32 %v4938, %v5562
        %v5640 = vadd.f32 %v4944, %v5564
        %v5641 = vadd.f32 %v4953, %v5567
        %v5642 = vadd.f32 %v4957, %v5569
        %v5643 = vadd.f32 %v4966, %v5572
        %v5644 = vadd.f32 %v4972, %v5574
        %v5645 = vadd.f32 %v4981, %v5577
        %v5646 = vadd.f32 %v4985, %v5579
        %v5647 = vadd.f32 %v4994, %v5582
        %v5648 = vadd.f32 %v5000, %v5584
        %v5697 = vrot.slane %v5267, 2
        %v5698 = vrot.slane %v5270, 2
        %v5699 = vsel %vm2590, %v5697, %v5698
        %v5700 = vrot.slane %v5275, 2
        %v5701 = vsel %vm2590, %v5698, %v5700
        %v5702 = vrot.slane %v5278, 2
        %v5703 = vrot.slane %v5283, 2
        %v5704 = vsel %vm2590, %v5702, %v5703
        %v5705 = vrot.slane %v5286, 2
        %v5706 = vsel %vm2590, %v5703, %v5705
        %v5707 = vrot.slane %v5291, 2
        %v5708 = vrot.slane %v5294, 2
        %v5709 = vsel %vm2590, %v5707, %v5708
        %v5710 = vrot.slane %v5299, 2
        %v5711 = vsel %vm2590, %v5708, %v5710
        %v5712 = vrot.slane %v5302, 2
        %v5713 = vrot.slane %v5307, 2
        %v5714 = vsel %vm2590, %v5712, %v5713
        %v5715 = vrot.slane %v5310, 2
        %v5716 = vsel %vm2590, %v5713, %v5715
        %v5717 = vrot.slane %v5315, 2
        %v5718 = vrot.slane %v5318, 2
        %v5719 = vsel %vm2590, %v5717, %v5718
        %v5720 = vrot.slane %v5323, 2
        %v5721 = vsel %vm2590, %v5718, %v5720
        %v5722 = vrot.slane %v5326, 2
        %v5723 = vrot.slane %v5331, 2
        %v5724 = vsel %vm2590, %v5722, %v5723
        %v5725 = vrot.slane %v5334, 2
        %v5726 = vsel %vm2590, %v5723, %v5725
        %v5727 = vrot.slane %v5339, 2
        %v5728 = vrot.slane %v5342, 2
        %v5729 = vsel %vm2590, %v5727, %v5728
        %v5730 = vrot.slane %v5347, 2
        %v5731 = vsel %vm2590, %v5728, %v5730
        %v5732 = vrot.slane %v5350, 2
        %v5733 = vrot.slane %v5355, 2
        %v5734 = vsel %vm2590, %v5732, %v5733
        %v5735 = vrot.slane %v5358, 2
        %v5736 = vsel %vm2590, %v5733, %v5735
        %v5737 = vrot.slane %v5363, 2
        %v5738 = vrot.slane %v5366, 2
        %v5739 = vsel %vm2590, %v5737, %v5738
        %v5740 = vrot.slane %v5371, 2
        %v5741 = vsel %vm2590, %v5738, %v5740
        %v5742 = vrot.slane %v5374, 2
        %v5743 = vrot.slane %v5379, 2
        %v5744 = vsel %vm2590, %v5742, %v5743
        %v5745 = vrot.slane %v5382, 2
        %v5746 = vsel %vm2590, %v5743, %v5745
        %v5747 = vrot.slane %v5387, 2
        %v5748 = vrot.slane %v5390, 2
        %v5749 = vsel %vm2590, %v5747, %v5748
        %v5750 = vrot.slane %v5395, 2
        %v5751 = vsel %vm2590, %v5748, %v5750
        %v5752 = vrot.slane %v5398, 2
        %v5753 = vrot.slane %v5403, 2
        %v5754 = vsel %vm2590, %v5752, %v5753
        %v5755 = vrot.slane %v5406, 2
        %v5756 = vsel %vm2590, %v5753, %v5755
        %v5757 = vrot.slane %v5411, 2
        %v5758 = vrot.slane %v5414, 2
        %v5759 = vsel %vm2590, %v5757, %v5758
        %v5760 = vrot.slane %v5419, 2
        %v5761 = vsel %vm2590, %v5758, %v5760
        %v5762 = vrot.slane %v5422, 2
        %v5763 = vrot.slane %v5427, 2
        %v5764 = vsel %vm2590, %v5762, %v5763
        %v5765 = vrot.slane %v5430, 2
        %v5766 = vsel %vm2590, %v5763, %v5765
        %v5767 = vrot.slane %v5435, 2
        %v5768 = vrot.slane %v5438, 2
        %v5769 = vsel %vm2590, %v5767, %v5768
        %v5770 = vrot.slane %v5443, 2
        %v5771 = vsel %vm2590, %v5768, %v5770
        %v5772 = vrot.slane %v5446, 2
        %v5773 = vrot.slane %v5451, 2
        %v5774 = vsel %vm2590, %v5772, %v5773
        %v5775 = vrot.slane %v5454, 2
        %v5776 = vsel %vm2590, %v5773, %v5775
        %v5809 = vadd.f32 %v5617, %v5699
        %v5810 = vadd.f32 %v5618, %v5701
        %v5811 = vadd.f32 %v5619, %v5704
        %v5812 = vadd.f32 %v5620, %v5706
        %v5813 = vadd.f32 %v5621, %v5709
        %v5814 = vadd.f32 %v5622, %v5711
        %v5815 = vadd.f32 %v5623, %v5714
        %v5816 = vadd.f32 %v5624, %v5716
        %v5817 = vadd.f32 %v5625, %v5719
        %v5818 = vadd.f32 %v5626, %v5721
        %v5819 = vadd.f32 %v5627, %v5724
        %v5820 = vadd.f32 %v5628, %v5726
        %v5821 = vadd.f32 %v5629, %v5729
        %v5822 = vadd.f32 %v5630, %v5731
        %v5823 = vadd.f32 %v5631, %v5734
        %v5824 = vadd.f32 %v5632, %v5736
        %v5825 = vadd.f32 %v5633, %v5739
        %v5826 = vadd.f32 %v5634, %v5741
        %v5827 = vadd.f32 %v5635, %v5744
        %v5828 = vadd.f32 %v5636, %v5746
        %v5829 = vadd.f32 %v5637, %v5749
        %v5830 = vadd.f32 %v5638, %v5751
        %v5831 = vadd.f32 %v5639, %v5754
        %v5832 = vadd.f32 %v5640, %v5756
        %v5833 = vadd.f32 %v5641, %v5759
        %v5834 = vadd.f32 %v5642, %v5761
        %v5835 = vadd.f32 %v5643, %v5764
        %v5836 = vadd.f32 %v5644, %v5766
        %v5837 = vadd.f32 %v5645, %v5769
        %v5838 = vadd.f32 %v5646, %v5771
        %v5839 = vadd.f32 %v5647, %v5774
        %v5840 = vadd.f32 %v5648, %v5776
        %v5841 = vld [vmem:[%s5] sm:$0x1]
        %v5843 = vlaneseq
        %v5844 = vshrl.u32 %v5843, 7
        %v5845 = vsub.s32 0, %v5844
        %v5846 = vrot.slane %v5841, %v5845
        %v5848 = vmul.f32 %v5809, %v5846
        %v5849 = vmul.f32 %v5810, %v5846
        %v5850 = vmul.f32 %v5811, %v5846
        %v5851 = vmul.f32 %v5812, %v5846
        %v5852 = vmul.f32 %v5813, %v5846
        %v5853 = vmul.f32 %v5814, %v5846
        %v5854 = vmul.f32 %v5815, %v5846
        %v5855 = vmul.f32 %v5816, %v5846
        %v5856 = vmul.f32 %v5817, %v5846
        %v5857 = vmul.f32 %v5818, %v5846
        %v5858 = vmul.f32 %v5819, %v5846
        %v5859 = vmul.f32 %v5820, %v5846
        %v5860 = vmul.f32 %v5821, %v5846
        %v5861 = vmul.f32 %v5822, %v5846
        %v5862 = vmul.f32 %v5823, %v5846
        %v5863 = vmul.f32 %v5824, %v5846
        %v5864 = vmul.f32 %v5825, %v5846
        %v5865 = vmul.f32 %v5826, %v5846
        %v5866 = vmul.f32 %v5827, %v5846
        %v5867 = vmul.f32 %v5828, %v5846
        %v5868 = vmul.f32 %v5829, %v5846
        %v5869 = vmul.f32 %v5830, %v5846
        %v5870 = vmul.f32 %v5831, %v5846
        %v5871 = vmul.f32 %v5832, %v5846
        %v5872 = vmul.f32 %v5833, %v5846
        %v5873 = vmul.f32 %v5834, %v5846
        %v5874 = vmul.f32 %v5835, %v5846
        %v5875 = vmul.f32 %v5836, %v5846
        %v5876 = vmul.f32 %v5837, %v5846
        %v5877 = vmul.f32 %v5838, %v5846
        %v5878 = vmul.f32 %v5839, %v5846
        %v5879 = vmul.f32 %v5840, %v5846
        %v5880 = vld [vmem:[%s6] sm:$0x1]
        %v5882 = vlaneseq
        %v5883 = vshrl.u32 %v5882, 7
        %v5884 = vsub.s32 0, %v5883
        %v5885 = vrot.slane %v5880, %v5884
        %v5887 = vadd.f32 %v5848, %v5885
        %v5888 = vadd.f32 %v5849, %v5885
        %v5889 = vadd.f32 %v5850, %v5885
        %v5890 = vadd.f32 %v5851, %v5885
        %v5891 = vadd.f32 %v5852, %v5885
        %v5892 = vadd.f32 %v5853, %v5885
        %v5893 = vadd.f32 %v5854, %v5885
        %v5894 = vadd.f32 %v5855, %v5885
        %v5895 = vadd.f32 %v5856, %v5885
        %v5896 = vadd.f32 %v5857, %v5885
        %v5897 = vadd.f32 %v5858, %v5885
        %v5898 = vadd.f32 %v5859, %v5885
        %v5899 = vadd.f32 %v5860, %v5885
        %v5900 = vadd.f32 %v5861, %v5885
        %v5901 = vadd.f32 %v5862, %v5885
        %v5902 = vadd.f32 %v5863, %v5885
        %v5903 = vadd.f32 %v5864, %v5885
        %v5904 = vadd.f32 %v5865, %v5885
        %v5905 = vadd.f32 %v5866, %v5885
        %v5906 = vadd.f32 %v5867, %v5885
        %v5907 = vadd.f32 %v5868, %v5885
        %v5908 = vadd.f32 %v5869, %v5885
        %v5909 = vadd.f32 %v5870, %v5885
        %v5910 = vadd.f32 %v5871, %v5885
        %v5911 = vadd.f32 %v5872, %v5885
        %v5912 = vadd.f32 %v5873, %v5885
        %v5913 = vadd.f32 %v5874, %v5885
        %v5914 = vadd.f32 %v5875, %v5885
        %v5915 = vadd.f32 %v5876, %v5885
        %v5916 = vadd.f32 %v5877, %v5885
        %v5917 = vadd.f32 %v5878, %v5885
        %v5918 = vadd.f32 %v5879, %v5885
        %v5919 = vld [vmem:[%s375] sm:$0xf]
        %v5920 = vld [vmem:[%s375 + $0x4] sm:$0xf]
        %v5921 = vld [vmem:[%s375 + $0x8] sm:$0x1]
        %v5922 = vld [vmem:[%s375 + $0xc] sm:$0xf]
        %v5923 = vld [vmem:[%s375 + $0x10] sm:$0xf]
        %v5924 = vld [vmem:[%s375 + $0x14] sm:$0x1]
        %v5925 = vld [vmem:[%s375 + $0x18] sm:$0xf]
        %v5926 = vld [vmem:[%s375 + $0x1c] sm:$0xf]
        %v5927 = vld [vmem:[%s375 + $0x20] sm:$0x1]
        %v5928 = vld [vmem:[%s375 + $0x24] sm:$0xf]
        %v5929 = vld [vmem:[%s375 + $0x28] sm:$0xf]
        %v5930 = vld [vmem:[%s375 + $0x2c] sm:$0x1]
        %v5931 = vld [vmem:[%s375 + $0x30] sm:$0xf]
        %v5932 = vld [vmem:[%s375 + $0x34] sm:$0xf]
        %v5933 = vld [vmem:[%s375 + $0x38] sm:$0x1]
        %v5934 = vld [vmem:[%s375 + $0x3c] sm:$0xf]
        %v5935 = vld [vmem:[%s375 + $0x40] sm:$0xf]
        %v5936 = vld [vmem:[%s375 + $0x44] sm:$0x1]
        %v5937 = vld [vmem:[%s375 + $0x48] sm:$0xf]
        %v5938 = vld [vmem:[%s375 + $0x4c] sm:$0xf]
        %v5939 = vld [vmem:[%s375 + $0x50] sm:$0x1]
        %v5940 = vld [vmem:[%s375 + $0x54] sm:$0xf]
        %v5941 = vld [vmem:[%s375 + $0x58] sm:$0xf]
        %v5942 = vld [vmem:[%s375 + $0x5c] sm:$0x1]
        %v5943 = vld [vmem:[%s375 + $0x60] sm:$0xf]
        %v5944 = vld [vmem:[%s375 + $0x64] sm:$0xf]
        %v5945 = vld [vmem:[%s375 + $0x68] sm:$0x1]
        %v5946 = vld [vmem:[%s375 + $0x6c] sm:$0xf]
        %v5947 = vld [vmem:[%s375 + $0x70] sm:$0xf]
        %v5948 = vld [vmem:[%s375 + $0x74] sm:$0x1]
        %v5949 = vld [vmem:[%s375 + $0x78] sm:$0xf]
        %v5950 = vld [vmem:[%s375 + $0x7c] sm:$0xf]
        %v5951 = vld [vmem:[%s375 + $0x80] sm:$0x1]
        %v5952 = vld [vmem:[%s375 + $0x84] sm:$0xf]
        %v5953 = vld [vmem:[%s375 + $0x88] sm:$0xf]
        %v5954 = vld [vmem:[%s375 + $0x8c] sm:$0x1]
        %v5955 = vld [vmem:[%s375 + $0x90] sm:$0xf]
        %v5956 = vld [vmem:[%s375 + $0x94] sm:$0xf]
        %v5957 = vld [vmem:[%s375 + $0x98] sm:$0x1]
        %v5958 = vld [vmem:[%s375 + $0x9c] sm:$0xf]
        %v5959 = vld [vmem:[%s375 + $0xa0] sm:$0xf]
        %v5960 = vld [vmem:[%s375 + $0xa4] sm:$0x1]
        %v5961 = vld [vmem:[%s375 + $0xa8] sm:$0xf]
        %v5962 = vld [vmem:[%s375 + $0xac] sm:$0xf]
        %v5963 = vld [vmem:[%s375 + $0xb0] sm:$0x1]
        %v5964 = vld [vmem:[%s375 + $0xb4] sm:$0xf]
        %v5965 = vld [vmem:[%s375 + $0xb8] sm:$0xf]
        %v5966 = vld [vmem:[%s375 + $0xbc] sm:$0x1]
        %vm5967 = vsmask.f32 3328
        %vm5968 = vsmask.f32 7440
        %vm5969 = vmor %vm5967, %vm5968
        %v5971 = vshrl.u32 %v5919, 16
        %v5973 = vrot.slane %v5971, 4
        %v5974 = vshll.u32 %v5919, 16
        %v5976 = vrot.slane %v5974, 5
        %v5977 = vor.u32 %v5973, %v5976
        %v5978 = vrot.slane %v5977, 4
        %v5980 = vshll.u32 %v5920, 16
        %v5982 = vrot.slane %v5980, 5
        %v5983 = vsel %vm5969, %v5978, %v5982
        %v5984 = vshrl.u32 %v5920, 16
        %v5986 = vrot.slane %v5984, 4
        %v5987 = vor.u32 %v5986, %v5982
        %v5988 = vrot.slane %v5987, 4
        %v5990 = vshll.u32 %v5921, 16
        %v5992 = vrot.slane %v5990, 5
        %v5993 = vsel %vm5969, %v5988, %v5992
        %v5995 = vshrl.u32 %v5922, 16
        %v5997 = vrot.slane %v5995, 4
        %v5998 = vshll.u32 %v5922, 16
        %v6000 = vrot.slane %v5998, 5
        %v6001 = vor.u32 %v5997, %v6000
        %v6002 = vrot.slane %v6001, 4
        %v6004 = vshll.u32 %v5923, 16
        %v6006 = vrot.slane %v6004, 5
        %v6007 = vsel %vm5969, %v6002, %v6006
        %v6008 = vshrl.u32 %v5923, 16
        %v6010 = vrot.slane %v6008, 4
        %v6011 = vor.u32 %v6010, %v6006
        %v6012 = vrot.slane %v6011, 4
        %v6014 = vshll.u32 %v5924, 16
        %v6016 = vrot.slane %v6014, 5
        %v6017 = vsel %vm5969, %v6012, %v6016
        %v6019 = vshrl.u32 %v5925, 16
        %v6021 = vrot.slane %v6019, 4
        %v6022 = vshll.u32 %v5925, 16
        %v6024 = vrot.slane %v6022, 5
        %v6025 = vor.u32 %v6021, %v6024
        %v6026 = vrot.slane %v6025, 4
        %v6028 = vshll.u32 %v5926, 16
        %v6030 = vrot.slane %v6028, 5
        %v6031 = vsel %vm5969, %v6026, %v6030
        %v6032 = vshrl.u32 %v5926, 16
        %v6034 = vrot.slane %v6032, 4
        %v6035 = vor.u32 %v6034, %v6030
        %v6036 = vrot.slane %v6035, 4
        %v6038 = vshll.u32 %v5927, 16
        %v6040 = vrot.slane %v6038, 5
        %v6041 = vsel %vm5969, %v6036, %v6040
        %v6043 = vshrl.u32 %v5928, 16
        %v6045 = vrot.slane %v6043, 4
        %v6046 = vshll.u32 %v5928, 16
        %v6048 = vrot.slane %v6046, 5
        %v6049 = vor.u32 %v6045, %v6048
        %v6050 = vrot.slane %v6049, 4
        %v6052 = vshll.u32 %v5929, 16
        %v6054 = vrot.slane %v6052, 5
        %v6055 = vsel %vm5969, %v6050, %v6054
        %v6056 = vshrl.u32 %v5929, 16
        %v6058 = vrot.slane %v6056, 4
        %v6059 = vor.u32 %v6058, %v6054
        %v6060 = vrot.slane %v6059, 4
        %v6062 = vshll.u32 %v5930, 16
        %v6064 = vrot.slane %v6062, 5
        %v6065 = vsel %vm5969, %v6060, %v6064
        %v6067 = vshrl.u32 %v5931, 16
        %v6069 = vrot.slane %v6067, 4
        %v6070 = vshll.u32 %v5931, 16
        %v6072 = vrot.slane %v6070, 5
        %v6073 = vor.u32 %v6069, %v6072
        %v6074 = vrot.slane %v6073, 4
        %v6076 = vshll.u32 %v5932, 16
        %v6078 = vrot.slane %v6076, 5
        %v6079 = vsel %vm5969, %v6074, %v6078
        %v6080 = vshrl.u32 %v5932, 16
        %v6082 = vrot.slane %v6080, 4
        %v6083 = vor.u32 %v6082, %v6078
        %v6084 = vrot.slane %v6083, 4
        %v6086 = vshll.u32 %v5933, 16
        %v6088 = vrot.slane %v6086, 5
        %v6089 = vsel %vm5969, %v6084, %v6088
        %v6091 = vshrl.u32 %v5934, 16
        %v6093 = vrot.slane %v6091, 4
        %v6094 = vshll.u32 %v5934, 16
        %v6096 = vrot.slane %v6094, 5
        %v6097 = vor.u32 %v6093, %v6096
        %v6098 = vrot.slane %v6097, 4
        %v6100 = vshll.u32 %v5935, 16
        %v6102 = vrot.slane %v6100, 5
        %v6103 = vsel %vm5969, %v6098, %v6102
        %v6104 = vshrl.u32 %v5935, 16
        %v6106 = vrot.slane %v6104, 4
        %v6107 = vor.u32 %v6106, %v6102
        %v6108 = vrot.slane %v6107, 4
        %v6110 = vshll.u32 %v5936, 16
        %v6112 = vrot.slane %v6110, 5
        %v6113 = vsel %vm5969, %v6108, %v6112
        %v6115 = vshrl.u32 %v5937, 16
        %v6117 = vrot.slane %v6115, 4
        %v6118 = vshll.u32 %v5937, 16
        %v6120 = vrot.slane %v6118, 5
        %v6121 = vor.u32 %v6117, %v6120
        %v6122 = vrot.slane %v6121, 4
        %v6124 = vshll.u32 %v5938, 16
        %v6126 = vrot.slane %v6124, 5
        %v6127 = vsel %vm5969, %v6122, %v6126
        %v6128 = vshrl.u32 %v5938, 16
        %v6130 = vrot.slane %v6128, 4
        %v6131 = vor.u32 %v6130, %v6126
        %v6132 = vrot.slane %v6131, 4
        %v6134 = vshll.u32 %v5939, 16
        %v6136 = vrot.slane %v6134, 5
        %v6137 = vsel %vm5969, %v6132, %v6136
        %v6139 = vshrl.u32 %v5940, 16
        %v6141 = vrot.slane %v6139, 4
        %v6142 = vshll.u32 %v5940, 16
        %v6144 = vrot.slane %v6142, 5
        %v6145 = vor.u32 %v6141, %v6144
        %v6146 = vrot.slane %v6145, 4
        %v6148 = vshll.u32 %v5941, 16
        %v6150 = vrot.slane %v6148, 5
        %v6151 = vsel %vm5969, %v6146, %v6150
        %v6152 = vshrl.u32 %v5941, 16
        %v6154 = vrot.slane %v6152, 4
        %v6155 = vor.u32 %v6154, %v6150
        %v6156 = vrot.slane %v6155, 4
        %v6158 = vshll.u32 %v5942, 16
        %v6160 = vrot.slane %v6158, 5
        %v6161 = vsel %vm5969, %v6156, %v6160
        %v6163 = vshrl.u32 %v5943, 16
        %v6165 = vrot.slane %v6163, 4
        %v6166 = vshll.u32 %v5943, 16
        %v6168 = vrot.slane %v6166, 5
        %v6169 = vor.u32 %v6165, %v6168
        %v6170 = vrot.slane %v6169, 4
        %v6172 = vshll.u32 %v5944, 16
        %v6174 = vrot.slane %v6172, 5
        %v6175 = vsel %vm5969, %v6170, %v6174
        %v6176 = vshrl.u32 %v5944, 16
        %v6178 = vrot.slane %v6176, 4
        %v6179 = vor.u32 %v6178, %v6174
        %v6180 = vrot.slane %v6179, 4
        %v6182 = vshll.u32 %v5945, 16
        %v6184 = vrot.slane %v6182, 5
        %v6185 = vsel %vm5969, %v6180, %v6184
        %v6187 = vshrl.u32 %v5946, 16
        %v6189 = vrot.slane %v6187, 4
        %v6190 = vshll.u32 %v5946, 16
        %v6192 = vrot.slane %v6190, 5
        %v6193 = vor.u32 %v6189, %v6192
        %v6194 = vrot.slane %v6193, 4
        %v6196 = vshll.u32 %v5947, 16
        %v6198 = vrot.slane %v6196, 5
        %v6199 = vsel %vm5969, %v6194, %v6198
        %v6200 = vshrl.u32 %v5947, 16
        %v6202 = vrot.slane %v6200, 4
        %v6203 = vor.u32 %v6202, %v6198
        %v6204 = vrot.slane %v6203, 4
        %v6206 = vshll.u32 %v5948, 16
        %v6208 = vrot.slane %v6206, 5
        %v6209 = vsel %vm5969, %v6204, %v6208
        %v6211 = vshrl.u32 %v5949, 16
        %v6213 = vrot.slane %v6211, 4
        %v6214 = vshll.u32 %v5949, 16
        %v6216 = vrot.slane %v6214, 5
        %v6217 = vor.u32 %v6213, %v6216
        %v6218 = vrot.slane %v6217, 4
        %v6220 = vshll.u32 %v5950, 16
        %v6222 = vrot.slane %v6220, 5
        %v6223 = vsel %vm5969, %v6218, %v6222
        %v6224 = vshrl.u32 %v5950, 16
        %v6226 = vrot.slane %v6224, 4
        %v6227 = vor.u32 %v6226, %v6222
        %v6228 = vrot.slane %v6227, 4
        %v6230 = vshll.u32 %v5951, 16
        %v6232 = vrot.slane %v6230, 5
        %v6233 = vsel %vm5969, %v6228, %v6232
        %v6235 = vshrl.u32 %v5952, 16
        %v6237 = vrot.slane %v6235, 4
        %v6238 = vshll.u32 %v5952, 16
        %v6240 = vrot.slane %v6238, 5
        %v6241 = vor.u32 %v6237, %v6240
        %v6242 = vrot.slane %v6241, 4
        %v6244 = vshll.u32 %v5953, 16
        %v6246 = vrot.slane %v6244, 5
        %v6247 = vsel %vm5969, %v6242, %v6246
        %v6248 = vshrl.u32 %v5953, 16
        %v6250 = vrot.slane %v6248, 4
        %v6251 = vor.u32 %v6250, %v6246
        %v6252 = vrot.slane %v6251, 4
        %v6254 = vshll.u32 %v5954, 16
        %v6256 = vrot.slane %v6254, 5
        %v6257 = vsel %vm5969, %v6252, %v6256
        %v6259 = vshrl.u32 %v5955, 16
        %v6261 = vrot.slane %v6259, 4
        %v6262 = vshll.u32 %v5955, 16
        %v6264 = vrot.slane %v6262, 5
        %v6265 = vor.u32 %v6261, %v6264
        %v6266 = vrot.slane %v6265, 4
        %v6268 = vshll.u32 %v5956, 16
        %v6270 = vrot.slane %v6268, 5
        %v6271 = vsel %vm5969, %v6266, %v6270
        %v6272 = vshrl.u32 %v5956, 16
        %v6274 = vrot.slane %v6272, 4
        %v6275 = vor.u32 %v6274, %v6270
        %v6276 = vrot.slane %v6275, 4
        %v6278 = vshll.u32 %v5957, 16
        %v6280 = vrot.slane %v6278, 5
        %v6281 = vsel %vm5969, %v6276, %v6280
        %v6283 = vshrl.u32 %v5958, 16
        %v6285 = vrot.slane %v6283, 4
        %v6286 = vshll.u32 %v5958, 16
        %v6288 = vrot.slane %v6286, 5
        %v6289 = vor.u32 %v6285, %v6288
        %v6290 = vrot.slane %v6289, 4
        %v6292 = vshll.u32 %v5959, 16
        %v6294 = vrot.slane %v6292, 5
        %v6295 = vsel %vm5969, %v6290, %v6294
        %v6296 = vshrl.u32 %v5959, 16
        %v6298 = vrot.slane %v6296, 4
        %v6299 = vor.u32 %v6298, %v6294
        %v6300 = vrot.slane %v6299, 4
        %v6302 = vshll.u32 %v5960, 16
        %v6304 = vrot.slane %v6302, 5
        %v6305 = vsel %vm5969, %v6300, %v6304
        %v6307 = vshrl.u32 %v5961, 16
        %v6309 = vrot.slane %v6307, 4
        %v6310 = vshll.u32 %v5961, 16
        %v6312 = vrot.slane %v6310, 5
        %v6313 = vor.u32 %v6309, %v6312
        %v6314 = vrot.slane %v6313, 4
        %v6316 = vshll.u32 %v5962, 16
        %v6318 = vrot.slane %v6316, 5
        %v6319 = vsel %vm5969, %v6314, %v6318
        %v6320 = vshrl.u32 %v5962, 16
        %v6322 = vrot.slane %v6320, 4
        %v6323 = vor.u32 %v6322, %v6318
        %v6324 = vrot.slane %v6323, 4
        %v6326 = vshll.u32 %v5963, 16
        %v6328 = vrot.slane %v6326, 5
        %v6329 = vsel %vm5969, %v6324, %v6328
        %v6331 = vshrl.u32 %v5964, 16
        %v6333 = vrot.slane %v6331, 4
        %v6334 = vshll.u32 %v5964, 16
        %v6336 = vrot.slane %v6334, 5
        %v6337 = vor.u32 %v6333, %v6336
        %v6338 = vrot.slane %v6337, 4
        %v6340 = vshll.u32 %v5965, 16
        %v6342 = vrot.slane %v6340, 5
        %v6343 = vsel %vm5969, %v6338, %v6342
        %v6344 = vshrl.u32 %v5965, 16
        %v6346 = vrot.slane %v6344, 4
        %v6347 = vor.u32 %v6346, %v6342
        %v6348 = vrot.slane %v6347, 4
        %v6350 = vshll.u32 %v5966, 16
        %v6352 = vrot.slane %v6350, 5
        %v6353 = vsel %vm5969, %v6348, %v6352
        %v6386 = vunpack.c.l.bf16 %v5983
        %v6387 = vunpack.c.l.bf16 %v5993
        %v6388 = vunpack.c.l.bf16 %v6007
        %v6389 = vunpack.c.l.bf16 %v6017
        %v6390 = vunpack.c.l.bf16 %v6031
        %v6391 = vunpack.c.l.bf16 %v6041
        %v6392 = vunpack.c.l.bf16 %v6055
        %v6393 = vunpack.c.l.bf16 %v6065
        %v6394 = vunpack.c.l.bf16 %v6079
        %v6395 = vunpack.c.l.bf16 %v6089
        %v6396 = vunpack.c.l.bf16 %v6103
        %v6397 = vunpack.c.l.bf16 %v6113
        %v6398 = vunpack.c.l.bf16 %v6127
        %v6399 = vunpack.c.l.bf16 %v6137
        %v6400 = vunpack.c.l.bf16 %v6151
        %v6401 = vunpack.c.l.bf16 %v6161
        %v6402 = vunpack.c.l.bf16 %v6175
        %v6403 = vunpack.c.l.bf16 %v6185
        %v6404 = vunpack.c.l.bf16 %v6199
        %v6405 = vunpack.c.l.bf16 %v6209
        %v6406 = vunpack.c.l.bf16 %v6223
        %v6407 = vunpack.c.l.bf16 %v6233
        %v6408 = vunpack.c.l.bf16 %v6247
        %v6409 = vunpack.c.l.bf16 %v6257
        %v6410 = vunpack.c.l.bf16 %v6271
        %v6411 = vunpack.c.l.bf16 %v6281
        %v6412 = vunpack.c.l.bf16 %v6295
        %v6413 = vunpack.c.l.bf16 %v6305
        %v6414 = vunpack.c.l.bf16 %v6319
        %v6415 = vunpack.c.l.bf16 %v6329
        %v6416 = vunpack.c.l.bf16 %v6343
        %v6417 = vunpack.c.l.bf16 %v6353
        %v6418 = vadd.f32 %v5887, %v6386
        %v6419 = vadd.f32 %v5888, %v6387
        %v6420 = vadd.f32 %v5889, %v6388
        %v6421 = vadd.f32 %v5890, %v6389
        %v6422 = vadd.f32 %v5891, %v6390
        %v6423 = vadd.f32 %v5892, %v6391
        %v6424 = vadd.f32 %v5893, %v6392
        %v6425 = vadd.f32 %v5894, %v6393
        %v6426 = vadd.f32 %v5895, %v6394
        %v6427 = vadd.f32 %v5896, %v6395
        %v6428 = vadd.f32 %v5897, %v6396
        %v6429 = vadd.f32 %v5898, %v6397
        %v6430 = vadd.f32 %v5899, %v6398
        %v6431 = vadd.f32 %v5900, %v6399
        %v6432 = vadd.f32 %v5901, %v6400
        %v6433 = vadd.f32 %v5902, %v6401
        %v6434 = vadd.f32 %v5903, %v6402
        %v6435 = vadd.f32 %v5904, %v6403
        %v6436 = vadd.f32 %v5905, %v6404
        %v6437 = vadd.f32 %v5906, %v6405
        %v6438 = vadd.f32 %v5907, %v6406
        %v6439 = vadd.f32 %v5908, %v6407
        %v6440 = vadd.f32 %v5909, %v6408
        %v6441 = vadd.f32 %v5910, %v6409
        %v6442 = vadd.f32 %v5911, %v6410
        %v6443 = vadd.f32 %v5912, %v6411
        %v6444 = vadd.f32 %v5913, %v6412
        %v6445 = vadd.f32 %v5914, %v6413
        %v6446 = vadd.f32 %v5915, %v6414
        %v6447 = vadd.f32 %v5916, %v6415
        %v6448 = vadd.f32 %v5917, %v6416
        %v6449 = vadd.f32 %v5918, %v6417
        %v6450 = vmax.f32 %v6418, 0.0
        %v6451 = vmax.f32 %v6419, 0.0
        %v6452 = vmax.f32 %v6420, 0.0
        %v6453 = vmax.f32 %v6421, 0.0
        %v6454 = vmax.f32 %v6422, 0.0
        %v6455 = vmax.f32 %v6423, 0.0
        %v6456 = vmax.f32 %v6424, 0.0
        %v6457 = vmax.f32 %v6425, 0.0
        %v6458 = vmax.f32 %v6426, 0.0
        %v6459 = vmax.f32 %v6427, 0.0
        %v6460 = vmax.f32 %v6428, 0.0
        %v6461 = vmax.f32 %v6429, 0.0
        %v6462 = vmax.f32 %v6430, 0.0
        %v6463 = vmax.f32 %v6431, 0.0
        %v6464 = vmax.f32 %v6432, 0.0
        %v6465 = vmax.f32 %v6433, 0.0
        %v6466 = vmax.f32 %v6434, 0.0
        %v6467 = vmax.f32 %v6435, 0.0
        %v6468 = vmax.f32 %v6436, 0.0
        %v6469 = vmax.f32 %v6437, 0.0
        %v6470 = vmax.f32 %v6438, 0.0
        %v6471 = vmax.f32 %v6439, 0.0
        %v6472 = vmax.f32 %v6440, 0.0
        %v6473 = vmax.f32 %v6441, 0.0
        %v6474 = vmax.f32 %v6442, 0.0
        %v6475 = vmax.f32 %v6443, 0.0
        %v6476 = vmax.f32 %v6444, 0.0
        %v6477 = vmax.f32 %v6445, 0.0
        %v6478 = vmax.f32 %v6446, 0.0
        %v6479 = vmax.f32 %v6447, 0.0
        %v6480 = vmax.f32 %v6448, 0.0
        %v6481 = vmax.f32 %v6449, 0.0
        %v6482 = vpack.c.bf16 %v6451, %v6450
        %v6483 = vpack.c.bf16 %v6453, %v6452
        %v6484 = vpack.c.bf16 %v6455, %v6454
        %v6485 = vpack.c.bf16 %v6457, %v6456
        %v6486 = vpack.c.bf16 %v6459, %v6458
        %v6487 = vpack.c.bf16 %v6461, %v6460
        %v6488 = vpack.c.bf16 %v6463, %v6462
        %v6489 = vpack.c.bf16 %v6465, %v6464
        %v6490 = vpack.c.bf16 %v6467, %v6466
        %v6491 = vpack.c.bf16 %v6469, %v6468
        %v6492 = vpack.c.bf16 %v6471, %v6470
        %v6493 = vpack.c.bf16 %v6473, %v6472
        %v6494 = vpack.c.bf16 %v6475, %v6474
        %v6495 = vpack.c.bf16 %v6477, %v6476
        %v6496 = vpack.c.bf16 %v6479, %v6478
        %v6497 = vpack.c.bf16 %v6481, %v6480
        %v6514 = vunpack.c.l.b16 %v6482
        %v6515 = vunpack.c.h.b16 %v6482
        %v6516 = vunpack.c.l.b16 %v6483
        %v6517 = vunpack.c.h.b16 %v6483
        %v6518 = vunpack.c.l.b16 %v6484
        %v6519 = vunpack.c.h.b16 %v6484
        %v6520 = vunpack.c.l.b16 %v6485
        %v6521 = vunpack.c.h.b16 %v6485
        %v6522 = vunpack.c.l.b16 %v6486
        %v6523 = vunpack.c.h.b16 %v6486
        %v6524 = vunpack.c.l.b16 %v6487
        %v6525 = vunpack.c.h.b16 %v6487
        %v6526 = vunpack.c.l.b16 %v6488
        %v6527 = vunpack.c.h.b16 %v6488
        %v6528 = vunpack.c.l.b16 %v6489
        %v6529 = vunpack.c.h.b16 %v6489
        %v6530 = vunpack.c.l.b16 %v6490
        %v6531 = vunpack.c.h.b16 %v6490
        %v6532 = vunpack.c.l.b16 %v6491
        %v6533 = vunpack.c.h.b16 %v6491
        %v6534 = vunpack.c.l.b16 %v6492
        %v6535 = vunpack.c.h.b16 %v6492
        %v6536 = vunpack.c.l.b16 %v6493
        %v6537 = vunpack.c.h.b16 %v6493
        %v6538 = vunpack.c.l.b16 %v6494
        %v6539 = vunpack.c.h.b16 %v6494
        %v6540 = vunpack.c.l.b16 %v6495
        %v6541 = vunpack.c.h.b16 %v6495
        %v6542 = vunpack.c.l.b16 %v6496
        %v6543 = vunpack.c.h.b16 %v6496
        %v6544 = vunpack.c.l.b16 %v6497
        %v6545 = vunpack.c.h.b16 %v6497
        %v6546 = vpack.c.b16 %v6514, %v6514
        %v6547 = vpack.c.b16 %v6515, %v6515
        %v6548 = vpack.c.b16 %v6516, %v6516
        %v6549 = vpack.c.b16 %v6517, %v6517
        %v6550 = vpack.c.b16 %v6518, %v6518
        %v6551 = vpack.c.b16 %v6519, %v6519
        %v6552 = vpack.c.b16 %v6520, %v6520
        %v6553 = vpack.c.b16 %v6521, %v6521
        %v6554 = vpack.c.b16 %v6522, %v6522
        %v6555 = vpack.c.b16 %v6523, %v6523
        %v6556 = vpack.c.b16 %v6524, %v6524
        %v6557 = vpack.c.b16 %v6525, %v6525
        %v6558 = vpack.c.b16 %v6526, %v6526
        %v6559 = vpack.c.b16 %v6527, %v6527
        %v6560 = vpack.c.b16 %v6528, %v6528
        %v6561 = vpack.c.b16 %v6529, %v6529
        %v6562 = vpack.c.b16 %v6530, %v6530
        %v6563 = vpack.c.b16 %v6531, %v6531
        %v6564 = vpack.c.b16 %v6532, %v6532
        %v6565 = vpack.c.b16 %v6533, %v6533
        %v6566 = vpack.c.b16 %v6534, %v6534
        %v6567 = vpack.c.b16 %v6535, %v6535
        %v6568 = vpack.c.b16 %v6536, %v6536
        %v6569 = vpack.c.b16 %v6537, %v6537
        %v6570 = vpack.c.b16 %v6538, %v6538
        %v6571 = vpack.c.b16 %v6539, %v6539
        %v6572 = vpack.c.b16 %v6540, %v6540
        %v6573 = vpack.c.b16 %v6541, %v6541
        %v6574 = vpack.c.b16 %v6542, %v6542
        %v6575 = vpack.c.b16 %v6543, %v6543
        %v6576 = vpack.c.b16 %v6544, %v6544
        %v6577 = vpack.c.b16 %v6545, %v6545
        %6610 = vst [vmem:[%s325] sm:$0xf] %v6546
        %6611 = vst [vmem:[%s325 + $0x4] sm:$0xf] %v6547
        %6612 = vst [vmem:[%s325 + $0x8] sm:$0xf] %v6548
        %6613 = vst [vmem:[%s325 + $0xc] sm:$0xf] %v6549
        %6614 = vst [vmem:[%s325 + $0x10] sm:$0xf] %v6550
        %6615 = vst [vmem:[%s325 + $0x14] sm:$0xf] %v6551
        %6616 = vst [vmem:[%s325 + $0x18] sm:$0xf] %v6552
        %6617 = vst [vmem:[%s325 + $0x1c] sm:$0xf] %v6553
        %6618 = vst [vmem:[%s325 + $0x20] sm:$0xf] %v6554
        %6619 = vst [vmem:[%s325 + $0x24] sm:$0xf] %v6555
        %6620 = vst [vmem:[%s325 + $0x28] sm:$0xf] %v6556
        %6621 = vst [vmem:[%s325 + $0x2c] sm:$0xf] %v6557
        %6622 = vst [vmem:[%s325 + $0x30] sm:$0xf] %v6558
        %6623 = vst [vmem:[%s325 + $0x34] sm:$0xf] %v6559
        %6624 = vst [vmem:[%s325 + $0x38] sm:$0xf] %v6560
        %6625 = vst [vmem:[%s325 + $0x3c] sm:$0xf] %v6561
        %6626 = vst [vmem:[%s325 + $0x40] sm:$0xf] %v6562
        %6627 = vst [vmem:[%s325 + $0x44] sm:$0xf] %v6563
        %6628 = vst [vmem:[%s325 + $0x48] sm:$0xf] %v6564
        %6629 = vst [vmem:[%s325 + $0x4c] sm:$0xf] %v6565
        %6630 = vst [vmem:[%s325 + $0x50] sm:$0xf] %v6566
        %6631 = vst [vmem:[%s325 + $0x54] sm:$0xf] %v6567
        %6632 = vst [vmem:[%s325 + $0x58] sm:$0xf] %v6568
        %6633 = vst [vmem:[%s325 + $0x5c] sm:$0xf] %v6569
        %6634 = vst [vmem:[%s325 + $0x60] sm:$0xf] %v6570
        %6635 = vst [vmem:[%s325 + $0x64] sm:$0xf] %v6571
        %6636 = vst [vmem:[%s325 + $0x68] sm:$0xf] %v6572
        %6637 = vst [vmem:[%s325 + $0x6c] sm:$0xf] %v6573
        %6638 = vst [vmem:[%s325 + $0x70] sm:$0xf] %v6574
        %6639 = vst [vmem:[%s325 + $0x74] sm:$0xf] %v6575
        %6640 = vst [vmem:[%s325 + $0x78] sm:$0xf] %v6576
        %6641 = vst [vmem:[%s325 + $0x7c] sm:$0xf] %v6577
        %s6642 = sand.u32 %s185, 1
        %s6643 = scalar_lea.sflag [#allocation5], %s6642
        %s6644 = sand.u32 %s185, 1
        %s6645 = smul.addr %s6644, 128
        %s6646 = scalar_lea.vmem [#allocation9], %s6645
        // Predicated region
        $region61: #{tpu_custom_call.1} parent=47 // pred_check
          %p6647 = pneg %p195
        $region62: #{tpu_custom_call.1} parent=47 // pred_check_branch
          %6649 = sbr.rel (%p6647) target = $region64
        $region63: #{tpu_custom_call.1} parent=47 // pred_region
          %s6651 = ssub.s32 2048, 2048
          %6652 = vsyncadd %s6643, %s6651
          %s6653 = smul.addr %s25, 32
          %s6654 = smul.addr %s6653, 64
          %s6655 = scalar_lea.hbm %s7, %s6654
          %s6656 = sshll.u32 %s6646, 4
          %s6657 = int_to_ptr.vmem [resolvable:$true] %s6656
          %6662 = dma.vmem_to_hbm [thread:$0]  %s6657, 2048, %s6655, %s6643, 64, 64, 4
        $region64: #{tpu_custom_call.1} parent=47 // pred_fallthru
          _
      $region48: #{tpu_custom_call.1} parent=5 // pred_fallthru
        _
      %p6663 = scmp.le.s32.totalorder 2, %s20
      // Predicated region
      $region65: #{tpu_custom_call.1} parent=5 // pred_check
        %p6664 = pneg %p6663
      $region66: #{tpu_custom_call.1} parent=5 // pred_check_branch
        %6666 = sbr.rel (%p6664) target = $region68
      $region67: #{tpu_custom_call.1} parent=5 // pred_region
        %s6667 = ssub.s32 %s20, 2
        // Predicated region
        $region69: #{tpu_custom_call.1} parent=67 // pred_check
          %p6668 = pneg %p201
        $region70: #{tpu_custom_call.1} parent=67 // pred_check_branch
          %6670 = sbr.rel (%p6668) target = $region72
        $region71: #{tpu_custom_call.1} parent=67 // pred_region
          %s6671 = sand.u32 %s186, 1
          %s6672 = scalar_lea.sflag [#allocation5], %s6671
          %s6673 = sand.u32 %s186, 1
          %s6674 = smul.addr %s6673, 128
          %s6675 = scalar_lea.vmem [#allocation9], %s6674
          %6676 = dma.done %s6672, 2048
        $region72: #{tpu_custom_call.1} parent=67 // pred_fallthru
          _
      $region68: #{tpu_custom_call.1} parent=5 // pred_fallthru
        _
    $region6: #{tpu_custom_call.1} parent=1 // loop_footer
      %s24 = sadd.s32 1, %s20
    $region7: #{tpu_custom_call.1} parent=1 // loop_footer_branch
      %19 = sbr.rel target = $region3
    $region8: #{tpu_custom_call.1} parent=1 // loop_exit
      _
    %6677 = vsyncpa [#allocation4], 1
    %s6678 = scalar_lea.sflag [#allocation4], 1
    %6679 = vsyncpa %s6678, 1
    %6680 = vsyncpa [#allocation7], 1
    %6681 = vsyncpa [#allocation5], 1
    %s6682 = scalar_lea.sflag [#allocation5], 1
    %6683 = vsyncpa %s6682, 1

</llo_original>
